<compile_context>
chip_gen: v6e
topology: v6e:2x2x1
jax: 0.10.0
libtpu: 0.0.40
codegen_flags: <defaults>
</compile_context>

<pallas_src>
import jax
import jax.numpy as jnp
from jax.experimental import pallas as pl
from jax.experimental.pallas import tpu as pltpu

IN_FEATURES = 378
OUT_FEATURES = 378
HIDDEN = 1000
FINAL = 1

# Lane-padded sizes.
IN_PAD = 384      # 378 -> 384  (3 * 128)
HID_PAD = 1024    # 1000 -> 1024
OUT_PAD = 128     # 1 -> 128 (lane-dense output slab; real column sliced out)


def _round_up(n, m):
    return (n + m - 1) // m * m


def _mlp_kernel(x_ref,
                w1_ref, b1_ref,
                w2_ref, b2_ref,
                w3_ref, b3_ref,
                w4_ref, b4_ref,
                o_ref):
    # fc1 + ReLU (bf16 inputs, f32 accumulate)
    h = jnp.dot(x_ref[...], w1_ref[...], preferred_element_type=jnp.float32)
    h = jnp.maximum(h + b1_ref[...], 0.0)
    # layer1: identity (empty Sequential). Its trailing ReLU is idempotent
    # after the fc1 ReLU, so it is omitted (semantically identical).
    # fc2 + ReLU
    h = jnp.dot(h.astype(jnp.bfloat16), w2_ref[...],
                preferred_element_type=jnp.float32)
    h = jnp.maximum(h + b2_ref[...], 0.0)
    # fc3 + ReLU
    h = jnp.dot(h.astype(jnp.bfloat16), w3_ref[...],
                preferred_element_type=jnp.float32)
    h = jnp.maximum(h + b3_ref[...], 0.0)
    # fc4 (no activation)
    out = jnp.dot(h.astype(jnp.bfloat16), w4_ref[...],
                  preferred_element_type=jnp.float32)
    o_ref[...] = (out + b4_ref[...]).astype(o_ref.dtype)


def _pad_to(a, shape):
    pads = [(0, s - d) for d, s in zip(a.shape, shape)]
    return jnp.pad(a, pads)  # zero padding (numerically exact)


def prepare_params(params):
    """One-time conversion of PyTorch-convention params into kernel layout.

    nn.Linear stores W as [out, in] with y = x @ W.T + b; here we transpose to
    [in, out], zero-pad feature dims to lane multiples, and cast weights to
    bf16 (biases stay f32; they are added to the f32 accumulator).
    Call this ONCE at parameter-load time, not per forward call.
    """
    def w(name, in_pad, out_pad):
        return _pad_to(params[name].T, (in_pad, out_pad)).astype(jnp.bfloat16)

    def b(name, out_pad):
        return _pad_to(params[name].reshape(1, -1), (1, out_pad)).astype(
            jnp.float32)

    return {
        "w1": w("fc1_w", IN_PAD, IN_PAD),   "b1": b("fc1_b", IN_PAD),
        "w2": w("fc2_w", IN_PAD, HID_PAD),  "b2": b("fc2_b", HID_PAD),
        "w3": w("fc3_w", HID_PAD, HID_PAD), "b3": b("fc3_b", HID_PAD),
        "w4": w("fc4_w", HID_PAD, OUT_PAD), "b4": b("fc4_b", OUT_PAD),
    }


def resnet_forward(x, prepared):
    """x: [B, IN_FEATURES] float32. prepared: output of prepare_params()."""
    B = x.shape[0]

    # Batch tiling: 128-row tiles (right cadence for v5e's 128x128 MXU and
    # fine for v6e/v7x); small batches round up to a multiple of 8 sublanes.
    tile_b = min(128, _round_up(B, 8))
    b_pad = _round_up(B, tile_b)

    x_p = _pad_to(x, (b_pad, IN_PAD)).astype(jnp.bfloat16)

    grid = (b_pad // tile_b,)

    def act_spec(cols):
        return pl.BlockSpec((tile_b, cols), lambda i: (i, 0))

    def resident_spec(shape):
        # Weights/biases: same block every grid step -> stay VMEM-resident.
        return pl.BlockSpec(shape, lambda i: (0, 0))

    p = prepared
    operands = (x_p,
                p["w1"], p["b1"],
                p["w2"], p["b2"],
                p["w3"], p["b3"],
                p["w4"], p["b4"])

    in_specs = [
        act_spec(IN_PAD),
        resident_spec((IN_PAD, IN_PAD)), resident_spec((1, IN_PAD)),
        resident_spec((IN_PAD, HID_PAD)), resident_spec((1, HID_PAD)),
        resident_spec((HID_PAD, HID_PAD)), resident_spec((1, HID_PAD)),
        resident_spec((HID_PAD, OUT_PAD)), resident_spec((1, OUT_PAD)),
    ]

    out = pl.pallas_call(
        _mlp_kernel,
        out_shape=jax.ShapeDtypeStruct((b_pad, OUT_PAD), jnp.float32),
        grid=grid,
        in_specs=in_specs,
        out_specs=act_spec(OUT_PAD),
        compiler_params=pltpu.CompilerParams(
            dimension_semantics=("parallel",),
            vmem_limit_bytes=32 * 1024 * 1024),
    )(*operands)

    # Strip batch padding and the padded output lanes.
    return out[:B, :FINAL]


def init_params(key):
    """Deterministic parameter init matching the nn.Linear shapes in __init__."""
    ks = jax.random.split(key, 8)

    def linear(kw, kb, fan_in, fan_out):
        bound = 1.0 / jnp.sqrt(fan_in)
        w = jax.random.uniform(kw, (fan_out, fan_in), jnp.float32, -bound, bound)
        b = jax.random.uniform(kb, (fan_out,), jnp.float32, -bound, bound)
        return w, b

    fc1_w, fc1_b = linear(ks[0], ks[1], IN_FEATURES, OUT_FEATURES)
    fc2_w, fc2_b = linear(ks[2], ks[3], IN_FEATURES, HIDDEN)
    fc3_w, fc3_b = linear(ks[4], ks[5], HIDDEN, HIDDEN)
    fc4_w, fc4_b = linear(ks[6], ks[7], HIDDEN, FINAL)
    return {
        "fc1_w": fc1_w, "fc1_b": fc1_b,
        "fc2_w": fc2_w, "fc2_b": fc2_b,
        "fc3_w": fc3_w, "fc3_b": fc3_b,
        "fc4_w": fc4_w, "fc4_b": fc4_b,
    }


def reference_forward_f32(x, p):
    """Pure f32 reference, exact PyTorch semantics."""
    h = jnp.maximum(x @ p["fc1_w"].T + p["fc1_b"], 0.0)
    h = jnp.maximum(h, 0.0)  # layer1 identity + relu
    h = jnp.maximum(h @ p["fc2_w"].T + p["fc2_b"], 0.0)
    h = jnp.maximum(h @ p["fc3_w"].T + p["fc3_b"], 0.0)
    return h @ p["fc4_w"].T + p["fc4_b"]


def reference_forward_bf16(x, p):
    """Reference mirroring the kernel's bf16-weight / f32-accumulate math."""
    def lin(a, w, b):
        return jnp.dot(a.astype(jnp.bfloat16), w.T.astype(jnp.bfloat16),
                       preferred_element_type=jnp.float32) + b
    h = jnp.maximum(lin(x, p["fc1_w"], p["fc1_b"]), 0.0)
    h = jnp.maximum(lin(h, p["fc2_w"], p["fc2_b"]), 0.0)
    h = jnp.maximum(lin(h, p["fc3_w"], p["fc3_b"]), 0.0)
    return lin(h, p["fc4_w"], p["fc4_b"])


if __name__ == "__main__":
    key = jax.random.PRNGKey(0)
    kx, kp = jax.random.split(key)

    B = 8
    x = jax.random.normal(kx, (B, IN_FEATURES), jnp.float32)
    params = init_params(kp)

    prepared = prepare_params(params)          # one-time layout conversion
    prepared = jax.tree_util.tree_map(jax.block_until_ready, prepared)

    out = resnet_forward(x, prepared)
    out = jax.block_until_ready(out)
    assert out.shape == (B, FINAL), out.shape

    # Primary check: against a reference using the same bf16-weight math.
    ref_bf16 = reference_forward_bf16(x, params)
    assert jnp.allclose(out, ref_bf16, atol=1e-2, rtol=1e-2), \
        f"bf16-ref max abs diff {jnp.max(jnp.abs(out - ref_bf16))}"

    # Sanity check: close to the full-f32 reference (loose, bf16 weights).
    ref_f32 = reference_forward_f32(x, params)
    assert jnp.allclose(out, ref_f32, atol=1e-1, rtol=1e-1), \
        f"f32-ref max abs diff {jnp.max(jnp.abs(out - ref_f32))}"

    print("KERNEL_OK")
</pallas_src>

<mosaic_0001>
module attributes {stable_mosaic.version = 11 : i64} {
  func.func @_mlp_kernel(%arg0: i32, %arg1: memref<8x384xbf16, #tpu.memory_space<vmem>>, %arg2: memref<384x384xbf16, #tpu.memory_space<vmem>>, %arg3: memref<1x384xf32, #tpu.memory_space<vmem>>, %arg4: memref<384x1024xbf16, #tpu.memory_space<vmem>>, %arg5: memref<1x1024xf32, #tpu.memory_space<vmem>>, %arg6: memref<1024x1024xbf16, #tpu.memory_space<vmem>>, %arg7: memref<1x1024xf32, #tpu.memory_space<vmem>>, %arg8: memref<1024x128xbf16, #tpu.memory_space<vmem>>, %arg9: memref<1x128xf32, #tpu.memory_space<vmem>>, %arg10: memref<8x128xf32, #tpu.memory_space<vmem>>) attributes {dimension_semantics = [#tpu.dimension_semantics<parallel>], iteration_bounds = array<i64: 1>, scalar_prefetch = 0 : i64, scratch_operands = 0 : i64, tpu.core_type = #tpu.core_type<tc>, window_params = [{transform_indices = @transform_0, window_bounds = array<i64: 8, 384>}, {pipeline_mode = #tpu.pipeline_mode<synchronous>, transform_indices = @transform_1, window_bounds = array<i64: 384, 384>}, {pipeline_mode = #tpu.pipeline_mode<synchronous>, transform_indices = @transform_2, window_bounds = array<i64: 1, 384>}, {pipeline_mode = #tpu.pipeline_mode<synchronous>, transform_indices = @transform_3, window_bounds = array<i64: 384, 1024>}, {pipeline_mode = #tpu.pipeline_mode<synchronous>, transform_indices = @transform_4, window_bounds = array<i64: 1, 1024>}, {pipeline_mode = #tpu.pipeline_mode<synchronous>, transform_indices = @transform_5, window_bounds = array<i64: 1024, 1024>}, {pipeline_mode = #tpu.pipeline_mode<synchronous>, transform_indices = @transform_6, window_bounds = array<i64: 1, 1024>}, {pipeline_mode = #tpu.pipeline_mode<synchronous>, transform_indices = @transform_7, window_bounds = array<i64: 1024, 128>}, {pipeline_mode = #tpu.pipeline_mode<synchronous>, transform_indices = @transform_8, window_bounds = array<i64: 1, 128>}, {transform_indices = @transform_9, window_bounds = array<i64: 8, 128>}]} {
    %c0 = arith.constant 0 : index
    %c0_0 = arith.constant 0 : index
    %0 = vector.load %arg1[%c0, %c0_0] : memref<8x384xbf16, #tpu.memory_space<vmem>>, vector<8x384xbf16>
    %c0_1 = arith.constant 0 : index
    %c0_2 = arith.constant 0 : index
    %1 = vector.load %arg2[%c0_1, %c0_2] : memref<384x384xbf16, #tpu.memory_space<vmem>>, vector<384x384xbf16>
    %cst = arith.constant dense<0.000000e+00> : vector<8x384xf32>
    %2 = tpu.matmul %0, %1, %cst {dimension_numbers = #tpu.dot_dimension_numbers<[1], [0], [0], [1], [0, 0, 1, 1], [], []>} : vector<8x384xbf16>, vector<384x384xbf16>, vector<8x384xf32> -> vector<8x384xf32>
    %c0_3 = arith.constant 0 : index
    %c0_4 = arith.constant 0 : index
    %3 = vector.load %arg3[%c0_3, %c0_4] : memref<1x384xf32, #tpu.memory_space<vmem>>, vector<1x384xf32>
    %4 = vector.broadcast %3 : vector<1x384xf32> to vector<8x384xf32>
    %5 = arith.addf %2, %4 : vector<8x384xf32>
    %cst_5 = arith.constant 0.000000e+00 : f32
    %6 = vector.broadcast %cst_5 : f32 to vector<8x384xf32>
    %7 = arith.maximumf %5, %6 : vector<8x384xf32>
    %8 = arith.truncf %7 : vector<8x384xf32> to vector<8x384xbf16>
    %c0_6 = arith.constant 0 : index
    %c0_7 = arith.constant 0 : index
    %9 = vector.load %arg4[%c0_6, %c0_7] : memref<384x1024xbf16, #tpu.memory_space<vmem>>, vector<384x1024xbf16>
    %cst_8 = arith.constant dense<0.000000e+00> : vector<8x1024xf32>
    %10 = tpu.matmul %8, %9, %cst_8 {dimension_numbers = #tpu.dot_dimension_numbers<[1], [0], [0], [1], [0, 0, 1, 1], [], []>} : vector<8x384xbf16>, vector<384x1024xbf16>, vector<8x1024xf32> -> vector<8x1024xf32>
    %c0_9 = arith.constant 0 : index
    %c0_10 = arith.constant 0 : index
    %11 = vector.load %arg5[%c0_9, %c0_10] : memref<1x1024xf32, #tpu.memory_space<vmem>>, vector<1x1024xf32>
    %12 = vector.broadcast %11 : vector<1x1024xf32> to vector<8x1024xf32>
    %13 = arith.addf %10, %12 : vector<8x1024xf32>
    %cst_11 = arith.constant 0.000000e+00 : f32
    %14 = vector.broadcast %cst_11 : f32 to vector<8x1024xf32>
    %15 = arith.maximumf %13, %14 : vector<8x1024xf32>
    %16 = arith.truncf %15 : vector<8x1024xf32> to vector<8x1024xbf16>
    %c0_12 = arith.constant 0 : index
    %c0_13 = arith.constant 0 : index
    %17 = vector.load %arg6[%c0_12, %c0_13] : memref<1024x1024xbf16, #tpu.memory_space<vmem>>, vector<1024x1024xbf16>
    %cst_14 = arith.constant dense<0.000000e+00> : vector<8x1024xf32>
    %18 = tpu.matmul %16, %17, %cst_14 {dimension_numbers = #tpu.dot_dimension_numbers<[1], [0], [0], [1], [0, 0, 1, 1], [], []>} : vector<8x1024xbf16>, vector<1024x1024xbf16>, vector<8x1024xf32> -> vector<8x1024xf32>
    %c0_15 = arith.constant 0 : index
    %c0_16 = arith.constant 0 : index
    %19 = vector.load %arg7[%c0_15, %c0_16] : memref<1x1024xf32, #tpu.memory_space<vmem>>, vector<1x1024xf32>
    %20 = vector.broadcast %19 : vector<1x1024xf32> to vector<8x1024xf32>
    %21 = arith.addf %18, %20 : vector<8x1024xf32>
    %cst_17 = arith.constant 0.000000e+00 : f32
    %22 = vector.broadcast %cst_17 : f32 to vector<8x1024xf32>
    %23 = arith.maximumf %21, %22 : vector<8x1024xf32>
    %24 = arith.truncf %23 : vector<8x1024xf32> to vector<8x1024xbf16>
    %c0_18 = arith.constant 0 : index
    %c0_19 = arith.constant 0 : index
    %25 = vector.load %arg8[%c0_18, %c0_19] : memref<1024x128xbf16, #tpu.memory_space<vmem>>, vector<1024x128xbf16>
    %cst_20 = arith.constant dense<0.000000e+00> : vector<8x128xf32>
    %26 = tpu.matmul %24, %25, %cst_20 {dimension_numbers = #tpu.dot_dimension_numbers<[1], [0], [0], [1], [0, 0, 1, 1], [], []>} : vector<8x1024xbf16>, vector<1024x128xbf16>, vector<8x128xf32> -> vector<8x128xf32>
    %c0_21 = arith.constant 0 : index
    %c0_22 = arith.constant 0 : index
    %27 = vector.load %arg9[%c0_21, %c0_22] : memref<1x128xf32, #tpu.memory_space<vmem>>, vector<1x128xf32>
    %28 = vector.broadcast %27 : vector<1x128xf32> to vector<8x128xf32>
    %29 = arith.addf %26, %28 : vector<8x128xf32>
    %c0_23 = arith.constant 0 : index
    %c0_24 = arith.constant 0 : index
    %30 = vector.load %arg10[%c0_23, %c0_24] : memref<8x128xf32, #tpu.memory_space<vmem>>, vector<8x128xf32>
    tpu.vector_store %arg10[%c0_23, %c0_24], %29 {strides = array<i32>} : memref<8x128xf32, #tpu.memory_space<vmem>>, vector<8x128xf32>,
    return
  }
  func.func @transform_0(%arg0: i32) -> (i32, i32) {
    %c0_i32 = arith.constant 0 : i32
    %c0_i32_0 = arith.constant 0 : i32
    return %arg0, %c0_i32 : i32, i32
  }
  func.func @transform_1(%arg0: i32) -> (i32, i32) {
    %c0_i32 = arith.constant 0 : i32
    %c0_i32_0 = arith.constant 0 : i32
    %c0_i32_1 = arith.constant 0 : i32
    return %c0_i32, %c0_i32_0 : i32, i32
  }
  func.func @transform_2(%arg0: i32) -> (i32, i32) {
    %c0_i32 = arith.constant 0 : i32
    %c0_i32_0 = arith.constant 0 : i32
    %c0_i32_1 = arith.constant 0 : i32
    return %c0_i32, %c0_i32_0 : i32, i32
  }
  func.func @transform_3(%arg0: i32) -> (i32, i32) {
    %c0_i32 = arith.constant 0 : i32
    %c0_i32_0 = arith.constant 0 : i32
    %c0_i32_1 = arith.constant 0 : i32
    return %c0_i32, %c0_i32_0 : i32, i32
  }
  func.func @transform_4(%arg0: i32) -> (i32, i32) {
    %c0_i32 = arith.constant 0 : i32
    %c0_i32_0 = arith.constant 0 : i32
    %c0_i32_1 = arith.constant 0 : i32
    return %c0_i32, %c0_i32_0 : i32, i32
  }
  func.func @transform_5(%arg0: i32) -> (i32, i32) {
    %c0_i32 = arith.constant 0 : i32
    %c0_i32_0 = arith.constant 0 : i32
    %c0_i32_1 = arith.constant 0 : i32
    return %c0_i32, %c0_i32_0 : i32, i32
  }
  func.func @transform_6(%arg0: i32) -> (i32, i32) {
    %c0_i32 = arith.constant 0 : i32
    %c0_i32_0 = arith.constant 0 : i32
    %c0_i32_1 = arith.constant 0 : i32
    return %c0_i32, %c0_i32_0 : i32, i32
  }
  func.func @transform_7(%arg0: i32) -> (i32, i32) {
    %c0_i32 = arith.constant 0 : i32
    %c0_i32_0 = arith.constant 0 : i32
    %c0_i32_1 = arith.constant 0 : i32
    return %c0_i32, %c0_i32_0 : i32, i32
  }
  func.func @transform_8(%arg0: i32) -> (i32, i32) {
    %c0_i32 = arith.constant 0 : i32
    %c0_i32_0 = arith.constant 0 : i32
    %c0_i32_1 = arith.constant 0 : i32
    return %c0_i32, %c0_i32_0 : i32, i32
  }
  func.func @transform_9(%arg0: i32) -> (i32, i32) {
    %c0_i32 = arith.constant 0 : i32
    %c0_i32_0 = arith.constant 0 : i32
    return %arg0, %c0_i32 : i32, i32
  }
}

</mosaic_0001>

<llo_original>
// kernel: tpu_custom_call.1
$region0: #{tpu_custom_call.1}
  #allocation0 [shape = 'u32[]', space=smem, size = 0x4, offset = 0x4, fixed_abs, tag = 'smem constant byte address 0x4 - core index']
  #allocation1 [shape = 'u32[144,128]{1,0:T(1,128)}', space=vmem, size = 0x12000, scoped, tag = 'internal scratch']
  %s0 = inlined_call_operand.hbm [shape: bf16[8,384], index: 0, kind: input, shape index: {}]
  %s1 = inlined_call_operand.hbm [shape: bf16[384,384], index: 1, kind: input, shape index: {}]
  %s2 = inlined_call_operand.hbm [shape: f32[1,384], index: 2, kind: input, shape index: {}]
  %s3 = inlined_call_operand.hbm [shape: bf16[384,1024], index: 3, kind: input, shape index: {}]
  %s4 = inlined_call_operand.hbm [shape: f32[1,1024], index: 4, kind: input, shape index: {}]
  %s5 = inlined_call_operand.hbm [shape: bf16[1024,1024], index: 5, kind: input, shape index: {}]
  %s6 = inlined_call_operand.hbm [shape: f32[1,1024], index: 6, kind: input, shape index: {}]
  %s7 = inlined_call_operand.hbm [shape: bf16[1024,128], index: 7, kind: input, shape index: {}]
  %s8 = inlined_call_operand.hbm [shape: f32[1,128], index: 8, kind: input, shape index: {}]
  %s9 = inlined_call_operand.hbm [shape: f32[8,128], index: 9, kind: output, shape index: {}]
  %s10 = sld [smem:[#allocation0]]
  $region82: #{tpu_custom_call.1} parent=0
    _
  %s12 = ssub.s32 1, %s10
  %s13 = scalar_select 0, %s12, %s10
  $region1: #{tpu_custom_call.1} parent=0
    #allocation2 [shape = 'u8[6144]{0}', space=vmem, size = 0x1800, scoped, tag = 'input window, operand 0, single buffered']
    #allocation3 [shape = 's32[1]{0}', space=sflag, size = 0x4, scoped, tag = 'scoped memory for tpu_custom_call.1']
    #allocation4 [shape = 's32[1]{0}', space=sflag, size = 0x4, scoped, tag = 'scoped memory for tpu_custom_call.1']
    #allocation5 [shape = 'u8[294912]{0}', space=vmem, size = 0x48000, scoped, tag = 'input window, operand 1, single buffered']
    #allocation6 [shape = 's32[1]{0}', space=sflag, size = 0x4, scoped, tag = 'scoped memory for tpu_custom_call.1']
    #allocation7 [shape = 'u8[1536]{0}', space=vmem, size = 0x800, scoped, tag = 'input window, operand 2, single buffered']
    #allocation8 [shape = 'u8[786432]{0}', space=vmem, size = 0xc0000, scoped, tag = 'input window, operand 3, single buffered']
    #allocation9 [shape = 's32[1]{0}', space=sflag, size = 0x4, scoped, tag = 'scoped memory for tpu_custom_call.1']
    #allocation10 [shape = 'u8[4096]{0}', space=vmem, size = 0x1000, scoped, tag = 'input window, operand 4, single buffered']
    #allocation11 [shape = 'u8[2097152]{0}', space=vmem, size = 0x200000, scoped, tag = 'input window, operand 5, single buffered']
    #allocation12 [shape = 's32[1]{0}', space=sflag, size = 0x4, scoped, tag = 'scoped memory for tpu_custom_call.1']
    #allocation13 [shape = 'u8[4096]{0}', space=vmem, size = 0x1000, scoped, tag = 'input window, operand 6, single buffered']
    #allocation14 [shape = 'u8[262144]{0}', space=vmem, size = 0x40000, scoped, tag = 'input window, operand 7, single buffered']
    #allocation15 [shape = 's32[1]{0}', space=sflag, size = 0x4, scoped, tag = 'scoped memory for tpu_custom_call.1']
    #allocation16 [shape = 'u8[512]{0}', space=vmem, size = 0x400, scoped, tag = 'input window, operand 8, single buffered']
    #allocation17 [shape = 'u8[4096]{0}', space=vmem, size = 0x1000, scoped, tag = 'output window, operand 0, single buffered']
    %14 = vsyncpa [#allocation3], 0
    %15 = vsyncpa [#allocation6], 0
    %16 = vsyncpa [#allocation9], 0
    %17 = vsyncpa [#allocation12], 0
    %18 = vsyncpa [#allocation15], 0
    %19 = vsyncpa [#allocation4], 0
    // Predicated region
    $region2: #{tpu_custom_call.1} parent=1 // pred_check
      _
    $region3: #{tpu_custom_call.1} parent=1 // pred_check_branch
      %21 = sbr.rel (0) target = $region5
    $region4: #{tpu_custom_call.1} parent=1 // pred_region
      %s23 = ssub.s32 192, 192
      %24 = vsyncadd [#allocation3], %s23
      %s26 = sshll.u32 [#allocation2], 4
      %s27 = int_to_ptr.vmem [resolvable:$true] %s26
      %29 = dma.hbm_to_vmem [thread:$0]  %s0, 192, %s27, [#allocation3]
    $region5: #{tpu_custom_call.1} parent=1 // pred_fallthru
      _
    // Predicated region
    $region6: #{tpu_custom_call.1} parent=1 // pred_check
      _
    $region7: #{tpu_custom_call.1} parent=1 // pred_check_branch
      %31 = sbr.rel (0) target = $region9
    $region8: #{tpu_custom_call.1} parent=1 // pred_region
      %s33 = ssub.s32 9216, 9216
      %34 = vsyncadd [#allocation6], %s33
      %s35 = sshll.u32 [#allocation5], 4
      %s36 = int_to_ptr.vmem [resolvable:$true] %s35
      %41 = dma.hbm_to_vmem [thread:$0]  %s1, 9216, %s36, [#allocation6], 192, 192, 12
    $region9: #{tpu_custom_call.1} parent=1 // pred_fallthru
      _
    // Predicated region
    $region10: #{tpu_custom_call.1} parent=1 // pred_check
      _
    $region11: #{tpu_custom_call.1} parent=1 // pred_check_branch
      %43 = sbr.rel (0) target = $region13
    $region12: #{tpu_custom_call.1} parent=1 // pred_region
      %s45 = ssub.s32 48, 48
      %46 = vsyncadd [#allocation6], %s45
      %s48 = sshll.u32 [#allocation7], 4
      %s49 = int_to_ptr.vmem [resolvable:$true] %s48
      %51 = dma.hbm_to_vmem [thread:$0]  %s2, 48, %s49, [#allocation6]
    $region13: #{tpu_custom_call.1} parent=1 // pred_fallthru
      _
    // Predicated region
    $region14: #{tpu_custom_call.1} parent=1 // pred_check
      _
    $region15: #{tpu_custom_call.1} parent=1 // pred_check_branch
      %53 = sbr.rel (0) target = $region17
    $region16: #{tpu_custom_call.1} parent=1 // pred_region
      %s55 = ssub.s32 24576, 24576
      %56 = vsyncadd [#allocation9], %s55
      %s57 = sshll.u32 [#allocation8], 4
      %s58 = int_to_ptr.vmem [resolvable:$true] %s57
      %63 = dma.hbm_to_vmem [thread:$0]  %s3, 24576, %s58, [#allocation9], 512, 512, 32
    $region17: #{tpu_custom_call.1} parent=1 // pred_fallthru
      _
    // Predicated region
    $region18: #{tpu_custom_call.1} parent=1 // pred_check
      _
    $region19: #{tpu_custom_call.1} parent=1 // pred_check_branch
      %65 = sbr.rel (0) target = $region21
    $region20: #{tpu_custom_call.1} parent=1 // pred_region
      %s67 = ssub.s32 128, 128
      %68 = vsyncadd [#allocation9], %s67
      %s70 = sshll.u32 [#allocation10], 4
      %s71 = int_to_ptr.vmem [resolvable:$true] %s70
      %73 = dma.hbm_to_vmem [thread:$0]  %s4, 128, %s71, [#allocation9]
    $region21: #{tpu_custom_call.1} parent=1 // pred_fallthru
      _
    // Predicated region
    $region22: #{tpu_custom_call.1} parent=1 // pred_check
      _
    $region23: #{tpu_custom_call.1} parent=1 // pred_check_branch
      %75 = sbr.rel (0) target = $region25
    $region24: #{tpu_custom_call.1} parent=1 // pred_region
      %s77 = ssub.s32 65536, 65536
      %78 = vsyncadd [#allocation12], %s77
      %s79 = sshll.u32 [#allocation11], 4
      %s80 = int_to_ptr.vmem [resolvable:$true] %s79
      %85 = dma.hbm_to_vmem [thread:$0]  %s5, 65536, %s80, [#allocation12], 512, 512, 32
    $region25: #{tpu_custom_call.1} parent=1 // pred_fallthru
      _
    // Predicated region
    $region26: #{tpu_custom_call.1} parent=1 // pred_check
      _
    $region27: #{tpu_custom_call.1} parent=1 // pred_check_branch
      %87 = sbr.rel (0) target = $region29
    $region28: #{tpu_custom_call.1} parent=1 // pred_region
      %s89 = ssub.s32 128, 128
      %90 = vsyncadd [#allocation12], %s89
      %s92 = sshll.u32 [#allocation13], 4
      %s93 = int_to_ptr.vmem [resolvable:$true] %s92
      %95 = dma.hbm_to_vmem [thread:$0]  %s6, 128, %s93, [#allocation12]
    $region29: #{tpu_custom_call.1} parent=1 // pred_fallthru
      _
    // Predicated region
    $region30: #{tpu_custom_call.1} parent=1 // pred_check
      _
    $region31: #{tpu_custom_call.1} parent=1 // pred_check_branch
      %97 = sbr.rel (0) target = $region33
    $region32: #{tpu_custom_call.1} parent=1 // pred_region
      %s99 = ssub.s32 8192, 8192
      %100 = vsyncadd [#allocation15], %s99
      %s101 = sshll.u32 [#allocation14], 4
      %s102 = int_to_ptr.vmem [resolvable:$true] %s101
      %107 = dma.hbm_to_vmem [thread:$0]  %s7, 8192, %s102, [#allocation15], 64, 64, 4
    $region33: #{tpu_custom_call.1} parent=1 // pred_fallthru
      _
    // Predicated region
    $region34: #{tpu_custom_call.1} parent=1 // pred_check
      _
    $region35: #{tpu_custom_call.1} parent=1 // pred_check_branch
      %109 = sbr.rel (0) target = $region37
    $region36: #{tpu_custom_call.1} parent=1 // pred_region
      %s111 = ssub.s32 16, 16
      %112 = vsyncadd [#allocation15], %s111
      %s114 = sshll.u32 [#allocation16], 4
      %s115 = int_to_ptr.vmem [resolvable:$true] %s114
      %117 = dma.hbm_to_vmem [thread:$0]  %s8, 16, %s115, [#allocation15]
    $region37: #{tpu_custom_call.1} parent=1 // pred_fallthru
      _
    // Predicated region
    $region38: #{tpu_custom_call.1} parent=1 // pred_check
      _
    $region39: #{tpu_custom_call.1} parent=1 // pred_check_branch
      %119 = sbr.rel (0) target = $region41
    $region40: #{tpu_custom_call.1} parent=1 // pred_region
      %120 = dma.done [#allocation3], 192
    $region41: #{tpu_custom_call.1} parent=1 // pred_fallthru
      _
    // Predicated region
    $region42: #{tpu_custom_call.1} parent=1 // pred_check
      _
    $region43: #{tpu_custom_call.1} parent=1 // pred_check_branch
      %122 = sbr.rel (0) target = $region45
    $region44: #{tpu_custom_call.1} parent=1 // pred_region
      %123 = dma.done [#allocation6], 9216
    $region45: #{tpu_custom_call.1} parent=1 // pred_fallthru
      _
    // Predicated region
    $region46: #{tpu_custom_call.1} parent=1 // pred_check
      _
    $region47: #{tpu_custom_call.1} parent=1 // pred_check_branch
      %125 = sbr.rel (0) target = $region49
    $region48: #{tpu_custom_call.1} parent=1 // pred_region
      %126 = dma.done [#allocation6], 48
    $region49: #{tpu_custom_call.1} parent=1 // pred_fallthru
      _
    // Predicated region
    $region50: #{tpu_custom_call.1} parent=1 // pred_check
      _
    $region51: #{tpu_custom_call.1} parent=1 // pred_check_branch
      %128 = sbr.rel (0) target = $region53
    $region52: #{tpu_custom_call.1} parent=1 // pred_region
      %129 = dma.done [#allocation9], 24576
    $region53: #{tpu_custom_call.1} parent=1 // pred_fallthru
      _
    // Predicated region
    $region54: #{tpu_custom_call.1} parent=1 // pred_check
      _
    $region55: #{tpu_custom_call.1} parent=1 // pred_check_branch
      %131 = sbr.rel (0) target = $region57
    $region56: #{tpu_custom_call.1} parent=1 // pred_region
      %132 = dma.done [#allocation9], 128
    $region57: #{tpu_custom_call.1} parent=1 // pred_fallthru
      _
    // Predicated region
    $region58: #{tpu_custom_call.1} parent=1 // pred_check
      _
    $region59: #{tpu_custom_call.1} parent=1 // pred_check_branch
      %134 = sbr.rel (0) target = $region61
    $region60: #{tpu_custom_call.1} parent=1 // pred_region
      %135 = dma.done [#allocation12], 65536
    $region61: #{tpu_custom_call.1} parent=1 // pred_fallthru
      _
    // Predicated region
    $region62: #{tpu_custom_call.1} parent=1 // pred_check
      _
    $region63: #{tpu_custom_call.1} parent=1 // pred_check_branch
      %137 = sbr.rel (0) target = $region65
    $region64: #{tpu_custom_call.1} parent=1 // pred_region
      %138 = dma.done [#allocation12], 128
    $region65: #{tpu_custom_call.1} parent=1 // pred_fallthru
      _
    // Predicated region
    $region66: #{tpu_custom_call.1} parent=1 // pred_check
      _
    $region67: #{tpu_custom_call.1} parent=1 // pred_check_branch
      %140 = sbr.rel (0) target = $region69
    $region68: #{tpu_custom_call.1} parent=1 // pred_region
      %141 = dma.done [#allocation15], 8192
    $region69: #{tpu_custom_call.1} parent=1 // pred_fallthru
      _
    // Predicated region
    $region70: #{tpu_custom_call.1} parent=1 // pred_check
      _
    $region71: #{tpu_custom_call.1} parent=1 // pred_check_branch
      %143 = sbr.rel (0) target = $region73
    $region72: #{tpu_custom_call.1} parent=1 // pred_region
      %144 = dma.done [#allocation15], 16
    $region73: #{tpu_custom_call.1} parent=1 // pred_fallthru
      _
    %v146 = vld [vmem:[#allocation2] sm:$0xff]
    %v147 = vld [vmem:[#allocation2 + $0x8] sm:$0xf]
    %v148 = vld [vmem:[#allocation5] sm:$0xff]
    %v149 = vld [vmem:[#allocation5 + $0x8] sm:$0xf]
    %v150 = vld [vmem:[#allocation5 + $0xc] sm:$0xff]
    %v151 = vld [vmem:[#allocation5 + $0x14] sm:$0xf]
    %v152 = vld [vmem:[#allocation5 + $0x18] sm:$0xff]
    %v153 = vld [vmem:[#allocation5 + $0x20] sm:$0xf]
    %v154 = vld [vmem:[#allocation5 + $0x24] sm:$0xff]
    %v155 = vld [vmem:[#allocation5 + $0x2c] sm:$0xf]
    %v156 = vld [vmem:[#allocation5 + $0x30] sm:$0xff]
    %v157 = vld [vmem:[#allocation5 + $0x38] sm:$0xf]
    %v158 = vld [vmem:[#allocation5 + $0x3c] sm:$0xff]
    %v159 = vld [vmem:[#allocation5 + $0x44] sm:$0xf]
    %v160 = vld [vmem:[#allocation5 + $0x48] sm:$0xff]
    %v161 = vld [vmem:[#allocation5 + $0x50] sm:$0xf]
    %v162 = vld [vmem:[#allocation5 + $0x54] sm:$0xff]
    %v163 = vld [vmem:[#allocation5 + $0x5c] sm:$0xf]
    %v164 = vld [vmem:[#allocation5 + $0x60] sm:$0xff]
    %v165 = vld [vmem:[#allocation5 + $0x68] sm:$0xf]
    %v166 = vld [vmem:[#allocation5 + $0x6c] sm:$0xff]
    %v167 = vld [vmem:[#allocation5 + $0x74] sm:$0xf]
    %v168 = vld [vmem:[#allocation5 + $0x78] sm:$0xff]
    %v169 = vld [vmem:[#allocation5 + $0x80] sm:$0xf]
    %v170 = vld [vmem:[#allocation5 + $0x84] sm:$0xff]
    %v171 = vld [vmem:[#allocation5 + $0x8c] sm:$0xf]
    %v172 = vld [vmem:[#allocation5 + $0x90] sm:$0xff]
    %v173 = vld [vmem:[#allocation5 + $0x98] sm:$0xf]
    %v174 = vld [vmem:[#allocation5 + $0x9c] sm:$0xff]
    %v175 = vld [vmem:[#allocation5 + $0xa4] sm:$0xf]
    %v176 = vld [vmem:[#allocation5 + $0xa8] sm:$0xff]
    %v177 = vld [vmem:[#allocation5 + $0xb0] sm:$0xf]
    %v178 = vld [vmem:[#allocation5 + $0xb4] sm:$0xff]
    %v179 = vld [vmem:[#allocation5 + $0xbc] sm:$0xf]
    %v180 = vld [vmem:[#allocation5 + $0xc0] sm:$0xff]
    %v181 = vld [vmem:[#allocation5 + $0xc8] sm:$0xf]
    %v182 = vld [vmem:[#allocation5 + $0xcc] sm:$0xff]
    %v183 = vld [vmem:[#allocation5 + $0xd4] sm:$0xf]
    %v184 = vld [vmem:[#allocation5 + $0xd8] sm:$0xff]
    %v185 = vld [vmem:[#allocation5 + $0xe0] sm:$0xf]
    %v186 = vld [vmem:[#allocation5 + $0xe4] sm:$0xff]
    %v187 = vld [vmem:[#allocation5 + $0xec] sm:$0xf]
    %v188 = vld [vmem:[#allocation5 + $0xf0] sm:$0xff]
    %v189 = vld [vmem:[#allocation5 + $0xf8] sm:$0xf]
    %v190 = vld [vmem:[#allocation5 + $0xfc] sm:$0xff]
    %v191 = vld [vmem:[#allocation5 + $0x104] sm:$0xf]
    %v192 = vld [vmem:[#allocation5 + $0x108] sm:$0xff]
    %v193 = vld [vmem:[#allocation5 + $0x110] sm:$0xf]
    %v194 = vld [vmem:[#allocation5 + $0x114] sm:$0xff]
    %v195 = vld [vmem:[#allocation5 + $0x11c] sm:$0xf]
    %v196 = vld [vmem:[#allocation5 + $0x120] sm:$0xff]
    %v197 = vld [vmem:[#allocation5 + $0x128] sm:$0xf]
    %v198 = vld [vmem:[#allocation5 + $0x12c] sm:$0xff]
    %v199 = vld [vmem:[#allocation5 + $0x134] sm:$0xf]
    %v200 = vld [vmem:[#allocation5 + $0x138] sm:$0xff]
    %v201 = vld [vmem:[#allocation5 + $0x140] sm:$0xf]
    %v202 = vld [vmem:[#allocation5 + $0x144] sm:$0xff]
    %v203 = vld [vmem:[#allocation5 + $0x14c] sm:$0xf]
    %v204 = vld [vmem:[#allocation5 + $0x150] sm:$0xff]
    %v205 = vld [vmem:[#allocation5 + $0x158] sm:$0xf]
    %v206 = vld [vmem:[#allocation5 + $0x15c] sm:$0xff]
    %v207 = vld [vmem:[#allocation5 + $0x164] sm:$0xf]
    %v208 = vld [vmem:[#allocation5 + $0x168] sm:$0xff]
    %v209 = vld [vmem:[#allocation5 + $0x170] sm:$0xf]
    %v210 = vld [vmem:[#allocation5 + $0x174] sm:$0xff]
    %v211 = vld [vmem:[#allocation5 + $0x17c] sm:$0xf]
    %v212 = vld [vmem:[#allocation5 + $0x180] sm:$0xff]
    %v213 = vld [vmem:[#allocation5 + $0x188] sm:$0xf]
    %v214 = vld [vmem:[#allocation5 + $0x18c] sm:$0xff]
    %v215 = vld [vmem:[#allocation5 + $0x194] sm:$0xf]
    %v216 = vld [vmem:[#allocation5 + $0x198] sm:$0xff]
    %v217 = vld [vmem:[#allocation5 + $0x1a0] sm:$0xf]
    %v218 = vld [vmem:[#allocation5 + $0x1a4] sm:$0xff]
    %v219 = vld [vmem:[#allocation5 + $0x1ac] sm:$0xf]
    %v220 = vld [vmem:[#allocation5 + $0x1b0] sm:$0xff]
    %v221 = vld [vmem:[#allocation5 + $0x1b8] sm:$0xf]
    %v222 = vld [vmem:[#allocation5 + $0x1bc] sm:$0xff]
    %v223 = vld [vmem:[#allocation5 + $0x1c4] sm:$0xf]
    %v224 = vld [vmem:[#allocation5 + $0x1c8] sm:$0xff]
    %v225 = vld [vmem:[#allocation5 + $0x1d0] sm:$0xf]
    %v226 = vld [vmem:[#allocation5 + $0x1d4] sm:$0xff]
    %v227 = vld [vmem:[#allocation5 + $0x1dc] sm:$0xf]
    %v228 = vld [vmem:[#allocation5 + $0x1e0] sm:$0xff]
    %v229 = vld [vmem:[#allocation5 + $0x1e8] sm:$0xf]
    %v230 = vld [vmem:[#allocation5 + $0x1ec] sm:$0xff]
    %v231 = vld [vmem:[#allocation5 + $0x1f4] sm:$0xf]
    %v232 = vld [vmem:[#allocation5 + $0x1f8] sm:$0xff]
    %v233 = vld [vmem:[#allocation5 + $0x200] sm:$0xf]
    %v234 = vld [vmem:[#allocation5 + $0x204] sm:$0xff]
    %v235 = vld [vmem:[#allocation5 + $0x20c] sm:$0xf]
    %v236 = vld [vmem:[#allocation5 + $0x210] sm:$0xff]
    %v237 = vld [vmem:[#allocation5 + $0x218] sm:$0xf]
    %v238 = vld [vmem:[#allocation5 + $0x21c] sm:$0xff]
    %v239 = vld [vmem:[#allocation5 + $0x224] sm:$0xf]
    %v240 = vld [vmem:[#allocation5 + $0x228] sm:$0xff]
    %v241 = vld [vmem:[#allocation5 + $0x230] sm:$0xf]
    %v242 = vld [vmem:[#allocation5 + $0x234] sm:$0xff]
    %v243 = vld [vmem:[#allocation5 + $0x23c] sm:$0xf]
    %v244 = vld [vmem:[#allocation7] sm:$0x7]
    %v246 = vlaneseq
    %v247 = vshrl.u32 %v246, 7
    %v248 = vsub.s32 0, %v247
    %v249 = vrot.slane %v244, %v248
    %v250 = vlaneseq
    %v251 = vshrl.u32 %v250, 7
    %v252 = vsub.s32 1, %v251
    %v253 = vrot.slane %v244, %v252
    %v254 = vlaneseq
    %v255 = vshrl.u32 %v254, 7
    %v256 = vsub.s32 2, %v255
    %v257 = vrot.slane %v244, %v256
    %v263 = vunpack.c.l.b16 %v146
    %v264 = vunpack.c.h.b16 %v146
    %v265 = vunpack.c.l.b16 %v147
    %v266 = vpack.c.b16 %v263, %v263
    %v267 = vpack.c.b16 %v264, %v264
    %v268 = vpack.c.b16 %v265, %v265
    %v368 = vunpack.c.l.b16 %v148
    %v369 = vunpack.c.h.b16 %v148
    %v370 = vunpack.c.l.b16 %v149
    %v371 = vunpack.c.l.b16 %v150
    %v372 = vunpack.c.h.b16 %v150
    %v373 = vunpack.c.l.b16 %v151
    %v374 = vunpack.c.l.b16 %v152
    %v375 = vunpack.c.h.b16 %v152
    %v376 = vunpack.c.l.b16 %v153
    %v377 = vunpack.c.l.b16 %v154
    %v378 = vunpack.c.h.b16 %v154
    %v379 = vunpack.c.l.b16 %v155
    %v380 = vunpack.c.l.b16 %v156
    %v381 = vunpack.c.h.b16 %v156
    %v382 = vunpack.c.l.b16 %v157
    %v383 = vunpack.c.l.b16 %v158
    %v384 = vunpack.c.h.b16 %v158
    %v385 = vunpack.c.l.b16 %v159
    %v386 = vunpack.c.l.b16 %v160
    %v387 = vunpack.c.h.b16 %v160
    %v388 = vunpack.c.l.b16 %v161
    %v389 = vunpack.c.l.b16 %v162
    %v390 = vunpack.c.h.b16 %v162
    %v391 = vunpack.c.l.b16 %v163
    %v392 = vunpack.c.l.b16 %v164
    %v393 = vunpack.c.h.b16 %v164
    %v394 = vunpack.c.l.b16 %v165
    %v395 = vunpack.c.l.b16 %v166
    %v396 = vunpack.c.h.b16 %v166
    %v397 = vunpack.c.l.b16 %v167
    %v398 = vunpack.c.l.b16 %v168
    %v399 = vunpack.c.h.b16 %v168
    %v400 = vunpack.c.l.b16 %v169
    %v401 = vunpack.c.l.b16 %v170
    %v402 = vunpack.c.h.b16 %v170
    %v403 = vunpack.c.l.b16 %v171
    %v404 = vunpack.c.l.b16 %v172
    %v405 = vunpack.c.h.b16 %v172
    %v406 = vunpack.c.l.b16 %v173
    %v407 = vunpack.c.l.b16 %v174
    %v408 = vunpack.c.h.b16 %v174
    %v409 = vunpack.c.l.b16 %v175
    %v410 = vunpack.c.l.b16 %v176
    %v411 = vunpack.c.h.b16 %v176
    %v412 = vunpack.c.l.b16 %v177
    %v413 = vunpack.c.l.b16 %v178
    %v414 = vunpack.c.h.b16 %v178
    %v415 = vunpack.c.l.b16 %v179
    %v416 = vunpack.c.l.b16 %v180
    %v417 = vunpack.c.h.b16 %v180
    %v418 = vunpack.c.l.b16 %v181
    %v419 = vunpack.c.l.b16 %v182
    %v420 = vunpack.c.h.b16 %v182
    %v421 = vunpack.c.l.b16 %v183
    %v422 = vunpack.c.l.b16 %v184
    %v423 = vunpack.c.h.b16 %v184
    %v424 = vunpack.c.l.b16 %v185
    %v425 = vunpack.c.l.b16 %v186
    %v426 = vunpack.c.h.b16 %v186
    %v427 = vunpack.c.l.b16 %v187
    %v428 = vunpack.c.l.b16 %v188
    %v429 = vunpack.c.h.b16 %v188
    %v430 = vunpack.c.l.b16 %v189
    %v431 = vunpack.c.l.b16 %v190
    %v432 = vunpack.c.h.b16 %v190
    %v433 = vunpack.c.l.b16 %v191
    %v434 = vunpack.c.l.b16 %v192
    %v435 = vunpack.c.h.b16 %v192
    %v436 = vunpack.c.l.b16 %v193
    %v437 = vunpack.c.l.b16 %v194
    %v438 = vunpack.c.h.b16 %v194
    %v439 = vunpack.c.l.b16 %v195
    %v440 = vunpack.c.l.b16 %v196
    %v441 = vunpack.c.h.b16 %v196
    %v442 = vunpack.c.l.b16 %v197
    %v443 = vunpack.c.l.b16 %v198
    %v444 = vunpack.c.h.b16 %v198
    %v445 = vunpack.c.l.b16 %v199
    %v446 = vunpack.c.l.b16 %v200
    %v447 = vunpack.c.h.b16 %v200
    %v448 = vunpack.c.l.b16 %v201
    %v449 = vunpack.c.l.b16 %v202
    %v450 = vunpack.c.h.b16 %v202
    %v451 = vunpack.c.l.b16 %v203
    %v452 = vunpack.c.l.b16 %v204
    %v453 = vunpack.c.h.b16 %v204
    %v454 = vunpack.c.l.b16 %v205
    %v455 = vunpack.c.l.b16 %v206
    %v456 = vunpack.c.h.b16 %v206
    %v457 = vunpack.c.l.b16 %v207
    %v458 = vunpack.c.l.b16 %v208
    %v459 = vunpack.c.h.b16 %v208
    %v460 = vunpack.c.l.b16 %v209
    %v461 = vunpack.c.l.b16 %v210
    %v462 = vunpack.c.h.b16 %v210
    %v463 = vunpack.c.l.b16 %v211
    %v464 = vunpack.c.l.b16 %v212
    %v465 = vunpack.c.h.b16 %v212
    %v466 = vunpack.c.l.b16 %v213
    %v467 = vunpack.c.l.b16 %v214
    %v468 = vunpack.c.h.b16 %v214
    %v469 = vunpack.c.l.b16 %v215
    %v470 = vunpack.c.l.b16 %v216
    %v471 = vunpack.c.h.b16 %v216
    %v472 = vunpack.c.l.b16 %v217
    %v473 = vunpack.c.l.b16 %v218
    %v474 = vunpack.c.h.b16 %v218
    %v475 = vunpack.c.l.b16 %v219
    %v476 = vunpack.c.l.b16 %v220
    %v477 = vunpack.c.h.b16 %v220
    %v478 = vunpack.c.l.b16 %v221
    %v479 = vunpack.c.l.b16 %v222
    %v480 = vunpack.c.h.b16 %v222
    %v481 = vunpack.c.l.b16 %v223
    %v482 = vunpack.c.l.b16 %v224
    %v483 = vunpack.c.h.b16 %v224
    %v484 = vunpack.c.l.b16 %v225
    %v485 = vunpack.c.l.b16 %v226
    %v486 = vunpack.c.h.b16 %v226
    %v487 = vunpack.c.l.b16 %v227
    %v488 = vunpack.c.l.b16 %v228
    %v489 = vunpack.c.h.b16 %v228
    %v490 = vunpack.c.l.b16 %v229
    %v491 = vunpack.c.l.b16 %v230
    %v492 = vunpack.c.h.b16 %v230
    %v493 = vunpack.c.l.b16 %v231
    %v494 = vunpack.c.l.b16 %v232
    %v495 = vunpack.c.h.b16 %v232
    %v496 = vunpack.c.l.b16 %v233
    %v497 = vunpack.c.l.b16 %v234
    %v498 = vunpack.c.h.b16 %v234
    %v499 = vunpack.c.l.b16 %v235
    %v500 = vunpack.c.l.b16 %v236
    %v501 = vunpack.c.h.b16 %v236
    %v502 = vunpack.c.l.b16 %v237
    %v503 = vunpack.c.l.b16 %v238
    %v504 = vunpack.c.h.b16 %v238
    %v505 = vunpack.c.l.b16 %v239
    %v506 = vunpack.c.l.b16 %v240
    %v507 = vunpack.c.h.b16 %v240
    %v508 = vunpack.c.l.b16 %v241
    %v509 = vunpack.c.l.b16 %v242
    %v510 = vunpack.c.h.b16 %v242
    %v511 = vunpack.c.l.b16 %v243
    %v512 = vpack.c.b16 %v371, %v368
    %v513 = vpack.c.b16 %v372, %v369
    %v514 = vpack.c.b16 %v373, %v370
    %v515 = vpack.c.b16 %v377, %v374
    %v516 = vpack.c.b16 %v378, %v375
    %v517 = vpack.c.b16 %v379, %v376
    %v518 = vpack.c.b16 %v383, %v380
    %v519 = vpack.c.b16 %v384, %v381
    %v520 = vpack.c.b16 %v385, %v382
    %v521 = vpack.c.b16 %v389, %v386
    %v522 = vpack.c.b16 %v390, %v387
    %v523 = vpack.c.b16 %v391, %v388
    %v524 = vpack.c.b16 %v395, %v392
    %v525 = vpack.c.b16 %v396, %v393
    %v526 = vpack.c.b16 %v397, %v394
    %v527 = vpack.c.b16 %v401, %v398
    %v528 = vpack.c.b16 %v402, %v399
    %v529 = vpack.c.b16 %v403, %v400
    %v530 = vpack.c.b16 %v407, %v404
    %v531 = vpack.c.b16 %v408, %v405
    %v532 = vpack.c.b16 %v409, %v406
    %v533 = vpack.c.b16 %v413, %v410
    %v534 = vpack.c.b16 %v414, %v411
    %v535 = vpack.c.b16 %v415, %v412
    %v536 = vpack.c.b16 %v419, %v416
    %v537 = vpack.c.b16 %v420, %v417
    %v538 = vpack.c.b16 %v421, %v418
    %v539 = vpack.c.b16 %v425, %v422
    %v540 = vpack.c.b16 %v426, %v423
    %v541 = vpack.c.b16 %v427, %v424
    %v542 = vpack.c.b16 %v431, %v428
    %v543 = vpack.c.b16 %v432, %v429
    %v544 = vpack.c.b16 %v433, %v430
    %v545 = vpack.c.b16 %v437, %v434
    %v546 = vpack.c.b16 %v438, %v435
    %v547 = vpack.c.b16 %v439, %v436
    %v548 = vpack.c.b16 %v443, %v440
    %v549 = vpack.c.b16 %v444, %v441
    %v550 = vpack.c.b16 %v445, %v442
    %v551 = vpack.c.b16 %v449, %v446
    %v552 = vpack.c.b16 %v450, %v447
    %v553 = vpack.c.b16 %v451, %v448
    %v554 = vpack.c.b16 %v455, %v452
    %v555 = vpack.c.b16 %v456, %v453
    %v556 = vpack.c.b16 %v457, %v454
    %v557 = vpack.c.b16 %v461, %v458
    %v558 = vpack.c.b16 %v462, %v459
    %v559 = vpack.c.b16 %v463, %v460
    %v560 = vpack.c.b16 %v467, %v464
    %v561 = vpack.c.b16 %v468, %v465
    %v562 = vpack.c.b16 %v469, %v466
    %v563 = vpack.c.b16 %v473, %v470
    %v564 = vpack.c.b16 %v474, %v471
    %v565 = vpack.c.b16 %v475, %v472
    %v566 = vpack.c.b16 %v479, %v476
    %v567 = vpack.c.b16 %v480, %v477
    %v568 = vpack.c.b16 %v481, %v478
    %v569 = vpack.c.b16 %v485, %v482
    %v570 = vpack.c.b16 %v486, %v483
    %v571 = vpack.c.b16 %v487, %v484
    %v572 = vpack.c.b16 %v491, %v488
    %v573 = vpack.c.b16 %v492, %v489
    %v574 = vpack.c.b16 %v493, %v490
    %v575 = vpack.c.b16 %v497, %v494
    %v576 = vpack.c.b16 %v498, %v495
    %v577 = vpack.c.b16 %v499, %v496
    %v578 = vpack.c.b16 %v503, %v500
    %v579 = vpack.c.b16 %v504, %v501
    %v580 = vpack.c.b16 %v505, %v502
    %v581 = vpack.c.b16 %v509, %v506
    %v582 = vpack.c.b16 %v510, %v507
    %v583 = vpack.c.b16 %v511, %v508
    %656 = vmatprep.subr.bf16.mxu0 %v534
    %657 = vmatpush1.bf16.msra.mxu0 %v533
    %658 = vmatprep.subr.bf16.mxu0 %v531
    %659 = vmatpush1.bf16.msra.mxu0 %v530
    %660 = vmatprep.subr.bf16.mxu0 %v528
    %661 = vmatpush1.bf16.msra.mxu0 %v527
    %662 = vmatprep.subr.bf16.mxu0 %v525
    %663 = vmatpush1.bf16.msra.mxu0 %v524
    %664 = vmatprep.subr.bf16.mxu0 %v522
    %665 = vmatpush1.bf16.msra.mxu0 %v521
    %666 = vmatprep.subr.bf16.mxu0 %v519
    %667 = vmatpush1.bf16.msra.mxu0 %v518
    %668 = vmatprep.subr.bf16.mxu0 %v516
    %669 = vmatpush1.bf16.msra.mxu0 %v515
    %670 = vmatprep.subr.bf16.mxu0 %v513
    %671 = vmatpush1.bf16.msra.mxu0 %v512
    %672 = vmatprep.subr.bf16.mxu0 %v558
    %673 = vmatpush2.bf16.msra.mxu0 %v557
    %674 = vmatprep.subr.bf16.mxu0 %v555
    %675 = vmatpush2.bf16.msra.mxu0 %v554
    %676 = vmatprep.subr.bf16.mxu0 %v552
    %677 = vmatpush2.bf16.msra.mxu0 %v551
    %678 = vmatprep.subr.bf16.mxu0 %v549
    %679 = vmatpush2.bf16.msra.mxu0 %v548
    %680 = vmatprep.subr.bf16.mxu0 %v546
    %681 = vmatpush2.bf16.msra.mxu0 %v545
    %682 = vmatprep.subr.bf16.mxu0 %v543
    %683 = vmatpush2.bf16.msra.mxu0 %v542
    %684 = vmatprep.subr.bf16.mxu0 %v540
    %685 = vmatpush2.bf16.msra.mxu0 %v539
    %686 = vmatprep.subr.bf16.mxu0 %v537
    %687 = vmatpush2.bf16.msra.mxu0 %v536
    %688 = vmatprep.mubr.bf16.mxu0 %v267
    %689 = vmatmul.mubr.bf16.gmra.mxu0 %v266
    %v690 = vpop.f32.mrf.mxu0
    %v691 = vadd.f32 %v249, %v690
    %v692 = vpop.f32.mrf.mxu0
    %v693 = vadd.f32 %v253, %v692
    %v694 = vpop.f32.mrf.mxu0
    %v695 = vpop.f32.mrf.mxu0
    %696 = vdwg.mxu0
    %697 = vmatprep.subr.bf16.mxu0 %v582
    %698 = vmatpush1.bf16.msra.mxu0 %v581
    %699 = vmatprep.subr.bf16.mxu0 %v579
    %700 = vmatpush1.bf16.msra.mxu0 %v578
    %701 = vmatprep.subr.bf16.mxu0 %v576
    %702 = vmatpush1.bf16.msra.mxu0 %v575
    %703 = vmatprep.subr.bf16.mxu0 %v573
    %704 = vmatpush1.bf16.msra.mxu0 %v572
    %705 = vmatprep.subr.bf16.mxu0 %v570
    %706 = vmatpush1.bf16.msra.mxu0 %v569
    %707 = vmatprep.subr.bf16.mxu0 %v567
    %708 = vmatpush1.bf16.msra.mxu0 %v566
    %709 = vmatprep.subr.bf16.mxu0 %v564
    %710 = vmatpush1.bf16.msra.mxu0 %v563
    %711 = vmatprep.subr.bf16.mxu0 %v561
    %712 = vmatpush1.bf16.msra.mxu0 %v560
    %713 = vmatprep.subr.bf16.mxu0 0
    %714 = vmatpush2.bf16.msra.mxu0 0
    %715 = vmatprep.subr.bf16.mxu0 0
    %716 = vmatpush2.bf16.msra.mxu0 0
    %717 = vmatprep.subr.bf16.mxu0 0
    %718 = vmatpush2.bf16.msra.mxu0 0
    %719 = vmatprep.subr.bf16.mxu0 0
    %720 = vmatpush2.bf16.msra.mxu0 0
    %721 = vmatprep.subr.bf16.mxu0 0
    %722 = vmatpush2.bf16.msra.mxu0 0
    %723 = vmatprep.subr.bf16.mxu0 0
    %724 = vmatpush2.bf16.msra.mxu0 0
    %725 = vmatprep.subr.bf16.mxu0 0
    %726 = vmatpush2.bf16.msra.mxu0 0
    %727 = vmatprep.subr.bf16.mxu0 0
    %728 = vmatpush2.bf16.msra.mxu0 0
    %729 = vmatprep.mubr.bf16.mxu0 0
    %730 = vmatmul.mubr.bf16.gmra.mxu0 %v268
    %v731 = vpop.f32.mrf.mxu0
    %v732 = vadd.f32 %v691, %v731
    %v733 = vpop.f32.mrf.mxu0
    %v734 = vadd.f32 %v693, %v733
    %v735 = vpop.f32.mrf.mxu0
    %v736 = vpop.f32.mrf.mxu0
    %737 = vdwg.mxu0
    %738 = vmatprep.subr.bf16.mxu0 0
    %739 = vmatpush1.bf16.msra.mxu0 %v535
    %740 = vmatprep.subr.bf16.mxu0 0
    %741 = vmatpush1.bf16.msra.mxu0 %v532
    %742 = vmatprep.subr.bf16.mxu0 0
    %743 = vmatpush1.bf16.msra.mxu0 %v529
    %744 = vmatprep.subr.bf16.mxu0 0
    %745 = vmatpush1.bf16.msra.mxu0 %v526
    %746 = vmatprep.subr.bf16.mxu0 0
    %747 = vmatpush1.bf16.msra.mxu0 %v523
    %748 = vmatprep.subr.bf16.mxu0 0
    %749 = vmatpush1.bf16.msra.mxu0 %v520
    %750 = vmatprep.subr.bf16.mxu0 0
    %751 = vmatpush1.bf16.msra.mxu0 %v517
    %752 = vmatprep.subr.bf16.mxu0 0
    %753 = vmatpush1.bf16.msra.mxu0 %v514
    %754 = vmatprep.subr.bf16.mxu0 0
    %755 = vmatpush2.bf16.msra.mxu0 %v559
    %756 = vmatprep.subr.bf16.mxu0 0
    %757 = vmatpush2.bf16.msra.mxu0 %v556
    %758 = vmatprep.subr.bf16.mxu0 0
    %759 = vmatpush2.bf16.msra.mxu0 %v553
    %760 = vmatprep.subr.bf16.mxu0 0
    %761 = vmatpush2.bf16.msra.mxu0 %v550
    %762 = vmatprep.subr.bf16.mxu0 0
    %763 = vmatpush2.bf16.msra.mxu0 %v547
    %764 = vmatprep.subr.bf16.mxu0 0
    %765 = vmatpush2.bf16.msra.mxu0 %v544
    %766 = vmatprep.subr.bf16.mxu0 0
    %767 = vmatpush2.bf16.msra.mxu0 %v541
    %768 = vmatprep.subr.bf16.mxu0 0
    %769 = vmatpush2.bf16.msra.mxu0 %v538
    %770 = vmatprep.mubr.bf16.mxu0 %v267
    %771 = vmatmul.mubr.bf16.gmra.mxu0 %v266
    %v772 = vpop.f32.mrf.mxu0
    %v773 = vadd.f32 %v257, %v772
    %v774 = vpop.f32.mrf.mxu0
    %v775 = vpop.f32.mrf.mxu0
    %v776 = vpop.f32.mrf.mxu0
    %777 = vdwg.mxu0
    %778 = vmatprep.subr.bf16.mxu0 0
    %779 = vmatpush1.bf16.msra.mxu0 %v583
    %780 = vmatprep.subr.bf16.mxu0 0
    %781 = vmatpush1.bf16.msra.mxu0 %v580
    %782 = vmatprep.subr.bf16.mxu0 0
    %783 = vmatpush1.bf16.msra.mxu0 %v577
    %784 = vmatprep.subr.bf16.mxu0 0
    %785 = vmatpush1.bf16.msra.mxu0 %v574
    %786 = vmatprep.subr.bf16.mxu0 0
    %787 = vmatpush1.bf16.msra.mxu0 %v571
    %788 = vmatprep.subr.bf16.mxu0 0
    %789 = vmatpush1.bf16.msra.mxu0 %v568
    %790 = vmatprep.subr.bf16.mxu0 0
    %791 = vmatpush1.bf16.msra.mxu0 %v565
    %792 = vmatprep.subr.bf16.mxu0 0
    %793 = vmatpush1.bf16.msra.mxu0 %v562
    %794 = vmatprep.subr.bf16.mxu0 0
    %795 = vmatpush2.bf16.msra.mxu0 0
    %796 = vmatprep.subr.bf16.mxu0 0
    %797 = vmatpush2.bf16.msra.mxu0 0
    %798 = vmatprep.subr.bf16.mxu0 0
    %799 = vmatpush2.bf16.msra.mxu0 0
    %800 = vmatprep.subr.bf16.mxu0 0
    %801 = vmatpush2.bf16.msra.mxu0 0
    %802 = vmatprep.subr.bf16.mxu0 0
    %803 = vmatpush2.bf16.msra.mxu0 0
    %804 = vmatprep.subr.bf16.mxu0 0
    %805 = vmatpush2.bf16.msra.mxu0 0
    %806 = vmatprep.subr.bf16.mxu0 0
    %807 = vmatpush2.bf16.msra.mxu0 0
    %808 = vmatprep.subr.bf16.mxu0 0
    %809 = vmatpush2.bf16.msra.mxu0 0
    %810 = vmatprep.mubr.bf16.mxu0 0
    %811 = vmatmul.mubr.bf16.gmra.mxu0 %v268
    %v812 = vpop.f32.mrf.mxu0
    %v813 = vadd.f32 %v773, %v812
    %v814 = vpop.f32.mrf.mxu0
    %v815 = vpop.f32.mrf.mxu0
    %v816 = vpop.f32.mrf.mxu0
    %817 = vdwg.mxu0
    %v818 = vmax.f32 %v732, 0.0
    %v819 = vmax.f32 %v734, 0.0
    %v820 = vmax.f32 %v813, 0.0
    %v821 = vpack.c.bf16 %v818, %v818
    %v822 = vpack.c.bf16 %v819, %v819
    %v823 = vpack.c.bf16 %v820, %v820
    %v824 = vld [vmem:[#allocation8] sm:$0xff]
    %v825 = vld [vmem:[#allocation8 + $0x8] sm:$0xff]
    %v826 = vld [vmem:[#allocation8 + $0x10] sm:$0xff]
    %v827 = vld [vmem:[#allocation8 + $0x18] sm:$0xff]
    %v828 = vld [vmem:[#allocation8 + $0x20] sm:$0xff]
    %v829 = vld [vmem:[#allocation8 + $0x28] sm:$0xff]
    %v830 = vld [vmem:[#allocation8 + $0x30] sm:$0xff]
    %v831 = vld [vmem:[#allocation8 + $0x38] sm:$0xff]
    %v832 = vld [vmem:[#allocation8 + $0x40] sm:$0xff]
    %v833 = vld [vmem:[#allocation8 + $0x48] sm:$0xff]
    %v834 = vld [vmem:[#allocation8 + $0x50] sm:$0xff]
    %v835 = vld [vmem:[#allocation8 + $0x58] sm:$0xff]
    %v836 = vld [vmem:[#allocation8 + $0x60] sm:$0xff]
    %v837 = vld [vmem:[#allocation8 + $0x68] sm:$0xff]
    %v838 = vld [vmem:[#allocation8 + $0x70] sm:$0xff]
    %v839 = vld [vmem:[#allocation8 + $0x78] sm:$0xff]
    %v840 = vld [vmem:[#allocation8 + $0x80] sm:$0xff]
    %v841 = vld [vmem:[#allocation8 + $0x88] sm:$0xff]
    %v842 = vld [vmem:[#allocation8 + $0x90] sm:$0xff]
    %v843 = vld [vmem:[#allocation8 + $0x98] sm:$0xff]
    %v844 = vld [vmem:[#allocation8 + $0xa0] sm:$0xff]
    %v845 = vld [vmem:[#allocation8 + $0xa8] sm:$0xff]
    %v846 = vld [vmem:[#allocation8 + $0xb0] sm:$0xff]
    %v847 = vld [vmem:[#allocation8 + $0xb8] sm:$0xff]
    %v848 = vld [vmem:[#allocation8 + $0xc0] sm:$0xff]
    %v849 = vld [vmem:[#allocation8 + $0xc8] sm:$0xff]
    %v850 = vld [vmem:[#allocation8 + $0xd0] sm:$0xff]
    %v851 = vld [vmem:[#allocation8 + $0xd8] sm:$0xff]
    %v852 = vld [vmem:[#allocation8 + $0xe0] sm:$0xff]
    %v853 = vld [vmem:[#allocation8 + $0xe8] sm:$0xff]
    %v854 = vld [vmem:[#allocation8 + $0xf0] sm:$0xff]
    %v855 = vld [vmem:[#allocation8 + $0xf8] sm:$0xff]
    %v856 = vld [vmem:[#allocation8 + $0x100] sm:$0xff]
    %v857 = vld [vmem:[#allocation8 + $0x108] sm:$0xff]
    %v858 = vld [vmem:[#allocation8 + $0x110] sm:$0xff]
    %v859 = vld [vmem:[#allocation8 + $0x118] sm:$0xff]
    %v860 = vld [vmem:[#allocation8 + $0x120] sm:$0xff]
    %v861 = vld [vmem:[#allocation8 + $0x128] sm:$0xff]
    %v862 = vld [vmem:[#allocation8 + $0x130] sm:$0xff]
    %v863 = vld [vmem:[#allocation8 + $0x138] sm:$0xff]
    %v864 = vld [vmem:[#allocation8 + $0x140] sm:$0xff]
    %v865 = vld [vmem:[#allocation8 + $0x148] sm:$0xff]
    %v866 = vld [vmem:[#allocation8 + $0x150] sm:$0xff]
    %v867 = vld [vmem:[#allocation8 + $0x158] sm:$0xff]
    %v868 = vld [vmem:[#allocation8 + $0x160] sm:$0xff]
    %v869 = vld [vmem:[#allocation8 + $0x168] sm:$0xff]
    %v870 = vld [vmem:[#allocation8 + $0x170] sm:$0xff]
    %v871 = vld [vmem:[#allocation8 + $0x178] sm:$0xff]
    %v872 = vld [vmem:[#allocation8 + $0x180] sm:$0xff]
    %v873 = vld [vmem:[#allocation8 + $0x188] sm:$0xff]
    %v874 = vld [vmem:[#allocation8 + $0x190] sm:$0xff]
    %v875 = vld [vmem:[#allocation8 + $0x198] sm:$0xff]
    %v876 = vld [vmem:[#allocation8 + $0x1a0] sm:$0xff]
    %v877 = vld [vmem:[#allocation8 + $0x1a8] sm:$0xff]
    %v878 = vld [vmem:[#allocation8 + $0x1b0] sm:$0xff]
    %v879 = vld [vmem:[#allocation8 + $0x1b8] sm:$0xff]
    %v880 = vld [vmem:[#allocation8 + $0x1c0] sm:$0xff]
    %v881 = vld [vmem:[#allocation8 + $0x1c8] sm:$0xff]
    %v882 = vld [vmem:[#allocation8 + $0x1d0] sm:$0xff]
    %v883 = vld [vmem:[#allocation8 + $0x1d8] sm:$0xff]
    %v884 = vld [vmem:[#allocation8 + $0x1e0] sm:$0xff]
    %v885 = vld [vmem:[#allocation8 + $0x1e8] sm:$0xff]
    %v886 = vld [vmem:[#allocation8 + $0x1f0] sm:$0xff]
    %v887 = vld [vmem:[#allocation8 + $0x1f8] sm:$0xff]
    %v888 = vld [vmem:[#allocation8 + $0x200] sm:$0xff]
    %v889 = vld [vmem:[#allocation8 + $0x208] sm:$0xff]
    %v890 = vld [vmem:[#allocation8 + $0x210] sm:$0xff]
    %v891 = vld [vmem:[#allocation8 + $0x218] sm:$0xff]
    %v892 = vld [vmem:[#allocation8 + $0x220] sm:$0xff]
    %v893 = vld [vmem:[#allocation8 + $0x228] sm:$0xff]
    %v894 = vld [vmem:[#allocation8 + $0x230] sm:$0xff]
    %v895 = vld [vmem:[#allocation8 + $0x238] sm:$0xff]
    %v896 = vld [vmem:[#allocation8 + $0x240] sm:$0xff]
    %v897 = vld [vmem:[#allocation8 + $0x248] sm:$0xff]
    %v898 = vld [vmem:[#allocation8 + $0x250] sm:$0xff]
    %v899 = vld [vmem:[#allocation8 + $0x258] sm:$0xff]
    %v900 = vld [vmem:[#allocation8 + $0x260] sm:$0xff]
    %v901 = vld [vmem:[#allocation8 + $0x268] sm:$0xff]
    %v902 = vld [vmem:[#allocation8 + $0x270] sm:$0xff]
    %v903 = vld [vmem:[#allocation8 + $0x278] sm:$0xff]
    %v904 = vld [vmem:[#allocation8 + $0x280] sm:$0xff]
    %v905 = vld [vmem:[#allocation8 + $0x288] sm:$0xff]
    %v906 = vld [vmem:[#allocation8 + $0x290] sm:$0xff]
    %v907 = vld [vmem:[#allocation8 + $0x298] sm:$0xff]
    %v908 = vld [vmem:[#allocation8 + $0x2a0] sm:$0xff]
    %v909 = vld [vmem:[#allocation8 + $0x2a8] sm:$0xff]
    %v910 = vld [vmem:[#allocation8 + $0x2b0] sm:$0xff]
    %v911 = vld [vmem:[#allocation8 + $0x2b8] sm:$0xff]
    %v912 = vld [vmem:[#allocation8 + $0x2c0] sm:$0xff]
    %v913 = vld [vmem:[#allocation8 + $0x2c8] sm:$0xff]
    %v914 = vld [vmem:[#allocation8 + $0x2d0] sm:$0xff]
    %v915 = vld [vmem:[#allocation8 + $0x2d8] sm:$0xff]
    %v916 = vld [vmem:[#allocation8 + $0x2e0] sm:$0xff]
    %v917 = vld [vmem:[#allocation8 + $0x2e8] sm:$0xff]
    %v918 = vld [vmem:[#allocation8 + $0x2f0] sm:$0xff]
    %v919 = vld [vmem:[#allocation8 + $0x2f8] sm:$0xff]
    %v920 = vld [vmem:[#allocation8 + $0x300] sm:$0xff]
    %v921 = vld [vmem:[#allocation8 + $0x308] sm:$0xff]
    %v922 = vld [vmem:[#allocation8 + $0x310] sm:$0xff]
    %v923 = vld [vmem:[#allocation8 + $0x318] sm:$0xff]
    %v924 = vld [vmem:[#allocation8 + $0x320] sm:$0xff]
    %v925 = vld [vmem:[#allocation8 + $0x328] sm:$0xff]
    %v926 = vld [vmem:[#allocation8 + $0x330] sm:$0xff]
    %v927 = vld [vmem:[#allocation8 + $0x338] sm:$0xff]
    %v928 = vld [vmem:[#allocation8 + $0x340] sm:$0xff]
    %v929 = vld [vmem:[#allocation8 + $0x348] sm:$0xff]
    %v930 = vld [vmem:[#allocation8 + $0x350] sm:$0xff]
    %v931 = vld [vmem:[#allocation8 + $0x358] sm:$0xff]
    %v932 = vld [vmem:[#allocation8 + $0x360] sm:$0xff]
    %v933 = vld [vmem:[#allocation8 + $0x368] sm:$0xff]
    %v934 = vld [vmem:[#allocation8 + $0x370] sm:$0xff]
    %v935 = vld [vmem:[#allocation8 + $0x378] sm:$0xff]
    %v936 = vld [vmem:[#allocation8 + $0x380] sm:$0xff]
    %v937 = vld [vmem:[#allocation8 + $0x388] sm:$0xff]
    %v938 = vld [vmem:[#allocation8 + $0x390] sm:$0xff]
    %v939 = vld [vmem:[#allocation8 + $0x398] sm:$0xff]
    %v940 = vld [vmem:[#allocation8 + $0x3a0] sm:$0xff]
    %v941 = vld [vmem:[#allocation8 + $0x3a8] sm:$0xff]
    %v942 = vld [vmem:[#allocation8 + $0x3b0] sm:$0xff]
    %v943 = vld [vmem:[#allocation8 + $0x3b8] sm:$0xff]
    %v944 = vld [vmem:[#allocation8 + $0x3c0] sm:$0xff]
    %v945 = vld [vmem:[#allocation8 + $0x3c8] sm:$0xff]
    %v946 = vld [vmem:[#allocation8 + $0x3d0] sm:$0xff]
    %v947 = vld [vmem:[#allocation8 + $0x3d8] sm:$0xff]
    %v948 = vld [vmem:[#allocation8 + $0x3e0] sm:$0xff]
    %v949 = vld [vmem:[#allocation8 + $0x3e8] sm:$0xff]
    %v950 = vld [vmem:[#allocation8 + $0x3f0] sm:$0xff]
    %v951 = vld [vmem:[#allocation8 + $0x3f8] sm:$0xff]
    %v952 = vld [vmem:[#allocation8 + $0x400] sm:$0xff]
    %v953 = vld [vmem:[#allocation8 + $0x408] sm:$0xff]
    %v954 = vld [vmem:[#allocation8 + $0x410] sm:$0xff]
    %v955 = vld [vmem:[#allocation8 + $0x418] sm:$0xff]
    %v956 = vld [vmem:[#allocation8 + $0x420] sm:$0xff]
    %v957 = vld [vmem:[#allocation8 + $0x428] sm:$0xff]
    %v958 = vld [vmem:[#allocation8 + $0x430] sm:$0xff]
    %v959 = vld [vmem:[#allocation8 + $0x438] sm:$0xff]
    %v960 = vld [vmem:[#allocation8 + $0x440] sm:$0xff]
    %v961 = vld [vmem:[#allocation8 + $0x448] sm:$0xff]
    %v962 = vld [vmem:[#allocation8 + $0x450] sm:$0xff]
    %v963 = vld [vmem:[#allocation8 + $0x458] sm:$0xff]
    %v964 = vld [vmem:[#allocation8 + $0x460] sm:$0xff]
    %v965 = vld [vmem:[#allocation8 + $0x468] sm:$0xff]
    %v966 = vld [vmem:[#allocation8 + $0x470] sm:$0xff]
    %v967 = vld [vmem:[#allocation8 + $0x478] sm:$0xff]
    %v968 = vld [vmem:[#allocation8 + $0x480] sm:$0xff]
    %v969 = vld [vmem:[#allocation8 + $0x488] sm:$0xff]
    %v970 = vld [vmem:[#allocation8 + $0x490] sm:$0xff]
    %v971 = vld [vmem:[#allocation8 + $0x498] sm:$0xff]
    %v972 = vld [vmem:[#allocation8 + $0x4a0] sm:$0xff]
    %v973 = vld [vmem:[#allocation8 + $0x4a8] sm:$0xff]
    %v974 = vld [vmem:[#allocation8 + $0x4b0] sm:$0xff]
    %v975 = vld [vmem:[#allocation8 + $0x4b8] sm:$0xff]
    %v976 = vld [vmem:[#allocation8 + $0x4c0] sm:$0xff]
    %v977 = vld [vmem:[#allocation8 + $0x4c8] sm:$0xff]
    %v978 = vld [vmem:[#allocation8 + $0x4d0] sm:$0xff]
    %v979 = vld [vmem:[#allocation8 + $0x4d8] sm:$0xff]
    %v980 = vld [vmem:[#allocation8 + $0x4e0] sm:$0xff]
    %v981 = vld [vmem:[#allocation8 + $0x4e8] sm:$0xff]
    %v982 = vld [vmem:[#allocation8 + $0x4f0] sm:$0xff]
    %v983 = vld [vmem:[#allocation8 + $0x4f8] sm:$0xff]
    %v984 = vld [vmem:[#allocation8 + $0x500] sm:$0xff]
    %v985 = vld [vmem:[#allocation8 + $0x508] sm:$0xff]
    %v986 = vld [vmem:[#allocation8 + $0x510] sm:$0xff]
    %v987 = vld [vmem:[#allocation8 + $0x518] sm:$0xff]
    %v988 = vld [vmem:[#allocation8 + $0x520] sm:$0xff]
    %v989 = vld [vmem:[#allocation8 + $0x528] sm:$0xff]
    %v990 = vld [vmem:[#allocation8 + $0x530] sm:$0xff]
    %v991 = vld [vmem:[#allocation8 + $0x538] sm:$0xff]
    %v992 = vld [vmem:[#allocation8 + $0x540] sm:$0xff]
    %v993 = vld [vmem:[#allocation8 + $0x548] sm:$0xff]
    %v994 = vld [vmem:[#allocation8 + $0x550] sm:$0xff]
    %v995 = vld [vmem:[#allocation8 + $0x558] sm:$0xff]
    %v996 = vld [vmem:[#allocation8 + $0x560] sm:$0xff]
    %v997 = vld [vmem:[#allocation8 + $0x568] sm:$0xff]
    %v998 = vld [vmem:[#allocation8 + $0x570] sm:$0xff]
    %v999 = vld [vmem:[#allocation8 + $0x578] sm:$0xff]
    %v1000 = vld [vmem:[#allocation8 + $0x580] sm:$0xff]
    %v1001 = vld [vmem:[#allocation8 + $0x588] sm:$0xff]
    %v1002 = vld [vmem:[#allocation8 + $0x590] sm:$0xff]
    %v1003 = vld [vmem:[#allocation8 + $0x598] sm:$0xff]
    %v1004 = vld [vmem:[#allocation8 + $0x5a0] sm:$0xff]
    %v1005 = vld [vmem:[#allocation8 + $0x5a8] sm:$0xff]
    %v1006 = vld [vmem:[#allocation8 + $0x5b0] sm:$0xff]
    %v1007 = vld [vmem:[#allocation8 + $0x5b8] sm:$0xff]
    %v1008 = vld [vmem:[#allocation8 + $0x5c0] sm:$0xff]
    %v1009 = vld [vmem:[#allocation8 + $0x5c8] sm:$0xff]
    %v1010 = vld [vmem:[#allocation8 + $0x5d0] sm:$0xff]
    %v1011 = vld [vmem:[#allocation8 + $0x5d8] sm:$0xff]
    %v1012 = vld [vmem:[#allocation8 + $0x5e0] sm:$0xff]
    %v1013 = vld [vmem:[#allocation8 + $0x5e8] sm:$0xff]
    %v1014 = vld [vmem:[#allocation8 + $0x5f0] sm:$0xff]
    %v1015 = vld [vmem:[#allocation8 + $0x5f8] sm:$0xff]
    %v1016 = vld [vmem:[#allocation10] sm:$0xff]
    %v1018 = vlaneseq
    %v1019 = vshrl.u32 %v1018, 7
    %v1020 = vsub.s32 0, %v1019
    %v1021 = vrot.slane %v1016, %v1020
    %v1022 = vlaneseq
    %v1023 = vshrl.u32 %v1022, 7
    %v1024 = vsub.s32 1, %v1023
    %v1025 = vrot.slane %v1016, %v1024
    %v1026 = vlaneseq
    %v1027 = vshrl.u32 %v1026, 7
    %v1028 = vsub.s32 2, %v1027
    %v1029 = vrot.slane %v1016, %v1028
    %v1030 = vlaneseq
    %v1031 = vshrl.u32 %v1030, 7
    %v1032 = vsub.s32 3, %v1031
    %v1033 = vrot.slane %v1016, %v1032
    %v1034 = vlaneseq
    %v1035 = vshrl.u32 %v1034, 7
    %v1036 = vsub.s32 4, %v1035
    %v1037 = vrot.slane %v1016, %v1036
    %v1038 = vlaneseq
    %v1039 = vshrl.u32 %v1038, 7
    %v1040 = vsub.s32 5, %v1039
    %v1041 = vrot.slane %v1016, %v1040
    %v1042 = vlaneseq
    %v1043 = vshrl.u32 %v1042, 7
    %v1044 = vsub.s32 6, %v1043
    %v1045 = vrot.slane %v1016, %v1044
    %v1046 = vlaneseq
    %v1047 = vshrl.u32 %v1046, 7
    %v1048 = vsub.s32 7, %v1047
    %v1049 = vrot.slane %v1016, %v1048
    %v1250 = vunpack.c.l.b16 %v824
    %v1251 = vunpack.c.h.b16 %v824
    %v1252 = vunpack.c.l.b16 %v825
    %v1253 = vunpack.c.h.b16 %v825
    %v1254 = vunpack.c.l.b16 %v826
    %v1255 = vunpack.c.h.b16 %v826
    %v1256 = vunpack.c.l.b16 %v827
    %v1257 = vunpack.c.h.b16 %v827
    %v1258 = vunpack.c.l.b16 %v828
    %v1259 = vunpack.c.h.b16 %v828
    %v1260 = vunpack.c.l.b16 %v829
    %v1261 = vunpack.c.h.b16 %v829
    %v1262 = vunpack.c.l.b16 %v830
    %v1263 = vunpack.c.h.b16 %v830
    %v1264 = vunpack.c.l.b16 %v831
    %v1265 = vunpack.c.h.b16 %v831
    %v1266 = vunpack.c.l.b16 %v832
    %v1267 = vunpack.c.h.b16 %v832
    %v1268 = vunpack.c.l.b16 %v833
    %v1269 = vunpack.c.h.b16 %v833
    %v1270 = vunpack.c.l.b16 %v834
    %v1271 = vunpack.c.h.b16 %v834
    %v1272 = vunpack.c.l.b16 %v835
    %v1273 = vunpack.c.h.b16 %v835
    %v1274 = vunpack.c.l.b16 %v836
    %v1275 = vunpack.c.h.b16 %v836
    %v1276 = vunpack.c.l.b16 %v837
    %v1277 = vunpack.c.h.b16 %v837
    %v1278 = vunpack.c.l.b16 %v838
    %v1279 = vunpack.c.h.b16 %v838
    %v1280 = vunpack.c.l.b16 %v839
    %v1281 = vunpack.c.h.b16 %v839
    %v1282 = vunpack.c.l.b16 %v840
    %v1283 = vunpack.c.h.b16 %v840
    %v1284 = vunpack.c.l.b16 %v841
    %v1285 = vunpack.c.h.b16 %v841
    %v1286 = vunpack.c.l.b16 %v842
    %v1287 = vunpack.c.h.b16 %v842
    %v1288 = vunpack.c.l.b16 %v843
    %v1289 = vunpack.c.h.b16 %v843
    %v1290 = vunpack.c.l.b16 %v844
    %v1291 = vunpack.c.h.b16 %v844
    %v1292 = vunpack.c.l.b16 %v845
    %v1293 = vunpack.c.h.b16 %v845
    %v1294 = vunpack.c.l.b16 %v846
    %v1295 = vunpack.c.h.b16 %v846
    %v1296 = vunpack.c.l.b16 %v847
    %v1297 = vunpack.c.h.b16 %v847
    %v1298 = vunpack.c.l.b16 %v848
    %v1299 = vunpack.c.h.b16 %v848
    %v1300 = vunpack.c.l.b16 %v849
    %v1301 = vunpack.c.h.b16 %v849
    %v1302 = vunpack.c.l.b16 %v850
    %v1303 = vunpack.c.h.b16 %v850
    %v1304 = vunpack.c.l.b16 %v851
    %v1305 = vunpack.c.h.b16 %v851
    %v1306 = vunpack.c.l.b16 %v852
    %v1307 = vunpack.c.h.b16 %v852
    %v1308 = vunpack.c.l.b16 %v853
    %v1309 = vunpack.c.h.b16 %v853
    %v1310 = vunpack.c.l.b16 %v854
    %v1311 = vunpack.c.h.b16 %v854
    %v1312 = vunpack.c.l.b16 %v855
    %v1313 = vunpack.c.h.b16 %v855
    %v1314 = vunpack.c.l.b16 %v856
    %v1315 = vunpack.c.h.b16 %v856
    %v1316 = vunpack.c.l.b16 %v857
    %v1317 = vunpack.c.h.b16 %v857
    %v1318 = vunpack.c.l.b16 %v858
    %v1319 = vunpack.c.h.b16 %v858
    %v1320 = vunpack.c.l.b16 %v859
    %v1321 = vunpack.c.h.b16 %v859
    %v1322 = vunpack.c.l.b16 %v860
    %v1323 = vunpack.c.h.b16 %v860
    %v1324 = vunpack.c.l.b16 %v861
    %v1325 = vunpack.c.h.b16 %v861
    %v1326 = vunpack.c.l.b16 %v862
    %v1327 = vunpack.c.h.b16 %v862
    %v1328 = vunpack.c.l.b16 %v863
    %v1329 = vunpack.c.h.b16 %v863
    %v1330 = vunpack.c.l.b16 %v864
    %v1331 = vunpack.c.h.b16 %v864
    %v1332 = vunpack.c.l.b16 %v865
    %v1333 = vunpack.c.h.b16 %v865
    %v1334 = vunpack.c.l.b16 %v866
    %v1335 = vunpack.c.h.b16 %v866
    %v1336 = vunpack.c.l.b16 %v867
    %v1337 = vunpack.c.h.b16 %v867
    %v1338 = vunpack.c.l.b16 %v868
    %v1339 = vunpack.c.h.b16 %v868
    %v1340 = vunpack.c.l.b16 %v869
    %v1341 = vunpack.c.h.b16 %v869
    %v1342 = vunpack.c.l.b16 %v870
    %v1343 = vunpack.c.h.b16 %v870
    %v1344 = vunpack.c.l.b16 %v871
    %v1345 = vunpack.c.h.b16 %v871
    %v1346 = vunpack.c.l.b16 %v872
    %v1347 = vunpack.c.h.b16 %v872
    %v1348 = vunpack.c.l.b16 %v873
    %v1349 = vunpack.c.h.b16 %v873
    %v1350 = vunpack.c.l.b16 %v874
    %v1351 = vunpack.c.h.b16 %v874
    %v1352 = vunpack.c.l.b16 %v875
    %v1353 = vunpack.c.h.b16 %v875
    %v1354 = vunpack.c.l.b16 %v876
    %v1355 = vunpack.c.h.b16 %v876
    %v1356 = vunpack.c.l.b16 %v877
    %v1357 = vunpack.c.h.b16 %v877
    %v1358 = vunpack.c.l.b16 %v878
    %v1359 = vunpack.c.h.b16 %v878
    %v1360 = vunpack.c.l.b16 %v879
    %v1361 = vunpack.c.h.b16 %v879
    %v1362 = vunpack.c.l.b16 %v880
    %v1363 = vunpack.c.h.b16 %v880
    %v1364 = vunpack.c.l.b16 %v881
    %v1365 = vunpack.c.h.b16 %v881
    %v1366 = vunpack.c.l.b16 %v882
    %v1367 = vunpack.c.h.b16 %v882
    %v1368 = vunpack.c.l.b16 %v883
    %v1369 = vunpack.c.h.b16 %v883
    %v1370 = vunpack.c.l.b16 %v884
    %v1371 = vunpack.c.h.b16 %v884
    %v1372 = vunpack.c.l.b16 %v885
    %v1373 = vunpack.c.h.b16 %v885
    %v1374 = vunpack.c.l.b16 %v886
    %v1375 = vunpack.c.h.b16 %v886
    %v1376 = vunpack.c.l.b16 %v887
    %v1377 = vunpack.c.h.b16 %v887
    %v1378 = vunpack.c.l.b16 %v888
    %v1379 = vunpack.c.h.b16 %v888
    %v1380 = vunpack.c.l.b16 %v889
    %v1381 = vunpack.c.h.b16 %v889
    %v1382 = vunpack.c.l.b16 %v890
    %v1383 = vunpack.c.h.b16 %v890
    %v1384 = vunpack.c.l.b16 %v891
    %v1385 = vunpack.c.h.b16 %v891
    %v1386 = vunpack.c.l.b16 %v892
    %v1387 = vunpack.c.h.b16 %v892
    %v1388 = vunpack.c.l.b16 %v893
    %v1389 = vunpack.c.h.b16 %v893
    %v1390 = vunpack.c.l.b16 %v894
    %v1391 = vunpack.c.h.b16 %v894
    %v1392 = vunpack.c.l.b16 %v895
    %v1393 = vunpack.c.h.b16 %v895
    %v1394 = vunpack.c.l.b16 %v896
    %v1395 = vunpack.c.h.b16 %v896
    %v1396 = vunpack.c.l.b16 %v897
    %v1397 = vunpack.c.h.b16 %v897
    %v1398 = vunpack.c.l.b16 %v898
    %v1399 = vunpack.c.h.b16 %v898
    %v1400 = vunpack.c.l.b16 %v899
    %v1401 = vunpack.c.h.b16 %v899
    %v1402 = vunpack.c.l.b16 %v900
    %v1403 = vunpack.c.h.b16 %v900
    %v1404 = vunpack.c.l.b16 %v901
    %v1405 = vunpack.c.h.b16 %v901
    %v1406 = vunpack.c.l.b16 %v902
    %v1407 = vunpack.c.h.b16 %v902
    %v1408 = vunpack.c.l.b16 %v903
    %v1409 = vunpack.c.h.b16 %v903
    %v1410 = vunpack.c.l.b16 %v904
    %v1411 = vunpack.c.h.b16 %v904
    %v1412 = vunpack.c.l.b16 %v905
    %v1413 = vunpack.c.h.b16 %v905
    %v1414 = vunpack.c.l.b16 %v906
    %v1415 = vunpack.c.h.b16 %v906
    %v1416 = vunpack.c.l.b16 %v907
    %v1417 = vunpack.c.h.b16 %v907
    %v1418 = vunpack.c.l.b16 %v908
    %v1419 = vunpack.c.h.b16 %v908
    %v1420 = vunpack.c.l.b16 %v909
    %v1421 = vunpack.c.h.b16 %v909
    %v1422 = vunpack.c.l.b16 %v910
    %v1423 = vunpack.c.h.b16 %v910
    %v1424 = vunpack.c.l.b16 %v911
    %v1425 = vunpack.c.h.b16 %v911
    %v1426 = vunpack.c.l.b16 %v912
    %v1427 = vunpack.c.h.b16 %v912
    %v1428 = vunpack.c.l.b16 %v913
    %v1429 = vunpack.c.h.b16 %v913
    %v1430 = vunpack.c.l.b16 %v914
    %v1431 = vunpack.c.h.b16 %v914
    %v1432 = vunpack.c.l.b16 %v915
    %v1433 = vunpack.c.h.b16 %v915
    %v1434 = vunpack.c.l.b16 %v916
    %v1435 = vunpack.c.h.b16 %v916
    %v1436 = vunpack.c.l.b16 %v917
    %v1437 = vunpack.c.h.b16 %v917
    %v1438 = vunpack.c.l.b16 %v918
    %v1439 = vunpack.c.h.b16 %v918
    %v1440 = vunpack.c.l.b16 %v919
    %v1441 = vunpack.c.h.b16 %v919
    %v1442 = vunpack.c.l.b16 %v920
    %v1443 = vunpack.c.h.b16 %v920
    %v1444 = vunpack.c.l.b16 %v921
    %v1445 = vunpack.c.h.b16 %v921
    %v1446 = vunpack.c.l.b16 %v922
    %v1447 = vunpack.c.h.b16 %v922
    %v1448 = vunpack.c.l.b16 %v923
    %v1449 = vunpack.c.h.b16 %v923
    %v1450 = vunpack.c.l.b16 %v924
    %v1451 = vunpack.c.h.b16 %v924
    %v1452 = vunpack.c.l.b16 %v925
    %v1453 = vunpack.c.h.b16 %v925
    %v1454 = vunpack.c.l.b16 %v926
    %v1455 = vunpack.c.h.b16 %v926
    %v1456 = vunpack.c.l.b16 %v927
    %v1457 = vunpack.c.h.b16 %v927
    %v1458 = vunpack.c.l.b16 %v928
    %v1459 = vunpack.c.h.b16 %v928
    %v1460 = vunpack.c.l.b16 %v929
    %v1461 = vunpack.c.h.b16 %v929
    %v1462 = vunpack.c.l.b16 %v930
    %v1463 = vunpack.c.h.b16 %v930
    %v1464 = vunpack.c.l.b16 %v931
    %v1465 = vunpack.c.h.b16 %v931
    %v1466 = vunpack.c.l.b16 %v932
    %v1467 = vunpack.c.h.b16 %v932
    %v1468 = vunpack.c.l.b16 %v933
    %v1469 = vunpack.c.h.b16 %v933
    %v1470 = vunpack.c.l.b16 %v934
    %v1471 = vunpack.c.h.b16 %v934
    %v1472 = vunpack.c.l.b16 %v935
    %v1473 = vunpack.c.h.b16 %v935
    %v1474 = vunpack.c.l.b16 %v936
    %v1475 = vunpack.c.h.b16 %v936
    %v1476 = vunpack.c.l.b16 %v937
    %v1477 = vunpack.c.h.b16 %v937
    %v1478 = vunpack.c.l.b16 %v938
    %v1479 = vunpack.c.h.b16 %v938
    %v1480 = vunpack.c.l.b16 %v939
    %v1481 = vunpack.c.h.b16 %v939
    %v1482 = vunpack.c.l.b16 %v940
    %v1483 = vunpack.c.h.b16 %v940
    %v1484 = vunpack.c.l.b16 %v941
    %v1485 = vunpack.c.h.b16 %v941
    %v1486 = vunpack.c.l.b16 %v942
    %v1487 = vunpack.c.h.b16 %v942
    %v1488 = vunpack.c.l.b16 %v943
    %v1489 = vunpack.c.h.b16 %v943
    %v1490 = vunpack.c.l.b16 %v944
    %v1491 = vunpack.c.h.b16 %v944
    %v1492 = vunpack.c.l.b16 %v945
    %v1493 = vunpack.c.h.b16 %v945
    %v1494 = vunpack.c.l.b16 %v946
    %v1495 = vunpack.c.h.b16 %v946
    %v1496 = vunpack.c.l.b16 %v947
    %v1497 = vunpack.c.h.b16 %v947
    %v1498 = vunpack.c.l.b16 %v948
    %v1499 = vunpack.c.h.b16 %v948
    %v1500 = vunpack.c.l.b16 %v949
    %v1501 = vunpack.c.h.b16 %v949
    %v1502 = vunpack.c.l.b16 %v950
    %v1503 = vunpack.c.h.b16 %v950
    %v1504 = vunpack.c.l.b16 %v951
    %v1505 = vunpack.c.h.b16 %v951
    %v1506 = vunpack.c.l.b16 %v952
    %v1507 = vunpack.c.h.b16 %v952
    %v1508 = vunpack.c.l.b16 %v953
    %v1509 = vunpack.c.h.b16 %v953
    %v1510 = vunpack.c.l.b16 %v954
    %v1511 = vunpack.c.h.b16 %v954
    %v1512 = vunpack.c.l.b16 %v955
    %v1513 = vunpack.c.h.b16 %v955
    %v1514 = vunpack.c.l.b16 %v956
    %v1515 = vunpack.c.h.b16 %v956
    %v1516 = vunpack.c.l.b16 %v957
    %v1517 = vunpack.c.h.b16 %v957
    %v1518 = vunpack.c.l.b16 %v958
    %v1519 = vunpack.c.h.b16 %v958
    %v1520 = vunpack.c.l.b16 %v959
    %v1521 = vunpack.c.h.b16 %v959
    %v1522 = vunpack.c.l.b16 %v960
    %v1523 = vunpack.c.h.b16 %v960
    %v1524 = vunpack.c.l.b16 %v961
    %v1525 = vunpack.c.h.b16 %v961
    %v1526 = vunpack.c.l.b16 %v962
    %v1527 = vunpack.c.h.b16 %v962
    %v1528 = vunpack.c.l.b16 %v963
    %v1529 = vunpack.c.h.b16 %v963
    %v1530 = vunpack.c.l.b16 %v964
    %v1531 = vunpack.c.h.b16 %v964
    %v1532 = vunpack.c.l.b16 %v965
    %v1533 = vunpack.c.h.b16 %v965
    %v1534 = vunpack.c.l.b16 %v966
    %v1535 = vunpack.c.h.b16 %v966
    %v1536 = vunpack.c.l.b16 %v967
    %v1537 = vunpack.c.h.b16 %v967
    %v1538 = vunpack.c.l.b16 %v968
    %v1539 = vunpack.c.h.b16 %v968
    %v1540 = vunpack.c.l.b16 %v969
    %v1541 = vunpack.c.h.b16 %v969
    %v1542 = vunpack.c.l.b16 %v970
    %v1543 = vunpack.c.h.b16 %v970
    %v1544 = vunpack.c.l.b16 %v971
    %v1545 = vunpack.c.h.b16 %v971
    %v1546 = vunpack.c.l.b16 %v972
    %v1547 = vunpack.c.h.b16 %v972
    %v1548 = vunpack.c.l.b16 %v973
    %v1549 = vunpack.c.h.b16 %v973
    %v1550 = vunpack.c.l.b16 %v974
    %v1551 = vunpack.c.h.b16 %v974
    %v1552 = vunpack.c.l.b16 %v975
    %v1553 = vunpack.c.h.b16 %v975
    %v1554 = vunpack.c.l.b16 %v976
    %v1555 = vunpack.c.h.b16 %v976
    %v1556 = vunpack.c.l.b16 %v977
    %v1557 = vunpack.c.h.b16 %v977
    %v1558 = vunpack.c.l.b16 %v978
    %v1559 = vunpack.c.h.b16 %v978
    %v1560 = vunpack.c.l.b16 %v979
    %v1561 = vunpack.c.h.b16 %v979
    %v1562 = vunpack.c.l.b16 %v980
    %v1563 = vunpack.c.h.b16 %v980
    %v1564 = vunpack.c.l.b16 %v981
    %v1565 = vunpack.c.h.b16 %v981
    %v1566 = vunpack.c.l.b16 %v982
    %v1567 = vunpack.c.h.b16 %v982
    %v1568 = vunpack.c.l.b16 %v983
    %v1569 = vunpack.c.h.b16 %v983
    %v1570 = vunpack.c.l.b16 %v984
    %v1571 = vunpack.c.h.b16 %v984
    %v1572 = vunpack.c.l.b16 %v985
    %v1573 = vunpack.c.h.b16 %v985
    %v1574 = vunpack.c.l.b16 %v986
    %v1575 = vunpack.c.h.b16 %v986
    %v1576 = vunpack.c.l.b16 %v987
    %v1577 = vunpack.c.h.b16 %v987
    %v1578 = vunpack.c.l.b16 %v988
    %v1579 = vunpack.c.h.b16 %v988
    %v1580 = vunpack.c.l.b16 %v989
    %v1581 = vunpack.c.h.b16 %v989
    %v1582 = vunpack.c.l.b16 %v990
    %v1583 = vunpack.c.h.b16 %v990
    %v1584 = vunpack.c.l.b16 %v991
    %v1585 = vunpack.c.h.b16 %v991
    %v1586 = vunpack.c.l.b16 %v992
    %v1587 = vunpack.c.h.b16 %v992
    %v1588 = vunpack.c.l.b16 %v993
    %v1589 = vunpack.c.h.b16 %v993
    %v1590 = vunpack.c.l.b16 %v994
    %v1591 = vunpack.c.h.b16 %v994
    %v1592 = vunpack.c.l.b16 %v995
    %v1593 = vunpack.c.h.b16 %v995
    %v1594 = vunpack.c.l.b16 %v996
    %v1595 = vunpack.c.h.b16 %v996
    %v1596 = vunpack.c.l.b16 %v997
    %v1597 = vunpack.c.h.b16 %v997
    %v1598 = vunpack.c.l.b16 %v998
    %v1599 = vunpack.c.h.b16 %v998
    %v1600 = vunpack.c.l.b16 %v999
    %v1601 = vunpack.c.h.b16 %v999
    %v1602 = vunpack.c.l.b16 %v1000
    %v1603 = vunpack.c.h.b16 %v1000
    %v1604 = vunpack.c.l.b16 %v1001
    %v1605 = vunpack.c.h.b16 %v1001
    %v1606 = vunpack.c.l.b16 %v1002
    %v1607 = vunpack.c.h.b16 %v1002
    %v1608 = vunpack.c.l.b16 %v1003
    %v1609 = vunpack.c.h.b16 %v1003
    %v1610 = vunpack.c.l.b16 %v1004
    %v1611 = vunpack.c.h.b16 %v1004
    %v1612 = vunpack.c.l.b16 %v1005
    %v1613 = vunpack.c.h.b16 %v1005
    %v1614 = vunpack.c.l.b16 %v1006
    %v1615 = vunpack.c.h.b16 %v1006
    %v1616 = vunpack.c.l.b16 %v1007
    %v1617 = vunpack.c.h.b16 %v1007
    %v1618 = vunpack.c.l.b16 %v1008
    %v1619 = vunpack.c.h.b16 %v1008
    %v1620 = vunpack.c.l.b16 %v1009
    %v1621 = vunpack.c.h.b16 %v1009
    %v1622 = vunpack.c.l.b16 %v1010
    %v1623 = vunpack.c.h.b16 %v1010
    %v1624 = vunpack.c.l.b16 %v1011
    %v1625 = vunpack.c.h.b16 %v1011
    %v1626 = vunpack.c.l.b16 %v1012
    %v1627 = vunpack.c.h.b16 %v1012
    %v1628 = vunpack.c.l.b16 %v1013
    %v1629 = vunpack.c.h.b16 %v1013
    %v1630 = vunpack.c.l.b16 %v1014
    %v1631 = vunpack.c.h.b16 %v1014
    %v1632 = vunpack.c.l.b16 %v1015
    %v1633 = vunpack.c.h.b16 %v1015
    %v1634 = vpack.c.b16 %v1258, %v1250
    %v1635 = vpack.c.b16 %v1259, %v1251
    %v1636 = vpack.c.b16 %v1260, %v1252
    %v1637 = vpack.c.b16 %v1261, %v1253
    %v1638 = vpack.c.b16 %v1262, %v1254
    %v1639 = vpack.c.b16 %v1263, %v1255
    %v1640 = vpack.c.b16 %v1264, %v1256
    %v1641 = vpack.c.b16 %v1265, %v1257
    %v1642 = vpack.c.b16 %v1274, %v1266
    %v1643 = vpack.c.b16 %v1275, %v1267
    %v1644 = vpack.c.b16 %v1276, %v1268
    %v1645 = vpack.c.b16 %v1277, %v1269
    %v1646 = vpack.c.b16 %v1278, %v1270
    %v1647 = vpack.c.b16 %v1279, %v1271
    %v1648 = vpack.c.b16 %v1280, %v1272
    %v1649 = vpack.c.b16 %v1281, %v1273
    %v1650 = vpack.c.b16 %v1290, %v1282
    %v1651 = vpack.c.b16 %v1291, %v1283
    %v1652 = vpack.c.b16 %v1292, %v1284
    %v1653 = vpack.c.b16 %v1293, %v1285
    %v1654 = vpack.c.b16 %v1294, %v1286
    %v1655 = vpack.c.b16 %v1295, %v1287
    %v1656 = vpack.c.b16 %v1296, %v1288
    %v1657 = vpack.c.b16 %v1297, %v1289
    %v1658 = vpack.c.b16 %v1306, %v1298
    %v1659 = vpack.c.b16 %v1307, %v1299
    %v1660 = vpack.c.b16 %v1308, %v1300
    %v1661 = vpack.c.b16 %v1309, %v1301
    %v1662 = vpack.c.b16 %v1310, %v1302
    %v1663 = vpack.c.b16 %v1311, %v1303
    %v1664 = vpack.c.b16 %v1312, %v1304
    %v1665 = vpack.c.b16 %v1313, %v1305
    %v1666 = vpack.c.b16 %v1322, %v1314
    %v1667 = vpack.c.b16 %v1323, %v1315
    %v1668 = vpack.c.b16 %v1324, %v1316
    %v1669 = vpack.c.b16 %v1325, %v1317
    %v1670 = vpack.c.b16 %v1326, %v1318
    %v1671 = vpack.c.b16 %v1327, %v1319
    %v1672 = vpack.c.b16 %v1328, %v1320
    %v1673 = vpack.c.b16 %v1329, %v1321
    %v1674 = vpack.c.b16 %v1338, %v1330
    %v1675 = vpack.c.b16 %v1339, %v1331
    %v1676 = vpack.c.b16 %v1340, %v1332
    %v1677 = vpack.c.b16 %v1341, %v1333
    %v1678 = vpack.c.b16 %v1342, %v1334
    %v1679 = vpack.c.b16 %v1343, %v1335
    %v1680 = vpack.c.b16 %v1344, %v1336
    %v1681 = vpack.c.b16 %v1345, %v1337
    %v1682 = vpack.c.b16 %v1354, %v1346
    %v1683 = vpack.c.b16 %v1355, %v1347
    %v1684 = vpack.c.b16 %v1356, %v1348
    %v1685 = vpack.c.b16 %v1357, %v1349
    %v1686 = vpack.c.b16 %v1358, %v1350
    %v1687 = vpack.c.b16 %v1359, %v1351
    %v1688 = vpack.c.b16 %v1360, %v1352
    %v1689 = vpack.c.b16 %v1361, %v1353
    %v1690 = vpack.c.b16 %v1370, %v1362
    %v1691 = vpack.c.b16 %v1371, %v1363
    %v1692 = vpack.c.b16 %v1372, %v1364
    %v1693 = vpack.c.b16 %v1373, %v1365
    %v1694 = vpack.c.b16 %v1374, %v1366
    %v1695 = vpack.c.b16 %v1375, %v1367
    %v1696 = vpack.c.b16 %v1376, %v1368
    %v1697 = vpack.c.b16 %v1377, %v1369
    %v1698 = vpack.c.b16 %v1386, %v1378
    %v1699 = vpack.c.b16 %v1387, %v1379
    %v1700 = vpack.c.b16 %v1388, %v1380
    %v1701 = vpack.c.b16 %v1389, %v1381
    %v1702 = vpack.c.b16 %v1390, %v1382
    %v1703 = vpack.c.b16 %v1391, %v1383
    %v1704 = vpack.c.b16 %v1392, %v1384
    %v1705 = vpack.c.b16 %v1393, %v1385
    %v1706 = vpack.c.b16 %v1402, %v1394
    %v1707 = vpack.c.b16 %v1403, %v1395
    %v1708 = vpack.c.b16 %v1404, %v1396
    %v1709 = vpack.c.b16 %v1405, %v1397
    %v1710 = vpack.c.b16 %v1406, %v1398
    %v1711 = vpack.c.b16 %v1407, %v1399
    %v1712 = vpack.c.b16 %v1408, %v1400
    %v1713 = vpack.c.b16 %v1409, %v1401
    %v1714 = vpack.c.b16 %v1418, %v1410
    %v1715 = vpack.c.b16 %v1419, %v1411
    %v1716 = vpack.c.b16 %v1420, %v1412
    %v1717 = vpack.c.b16 %v1421, %v1413
    %v1718 = vpack.c.b16 %v1422, %v1414
    %v1719 = vpack.c.b16 %v1423, %v1415
    %v1720 = vpack.c.b16 %v1424, %v1416
    %v1721 = vpack.c.b16 %v1425, %v1417
    %v1722 = vpack.c.b16 %v1434, %v1426
    %v1723 = vpack.c.b16 %v1435, %v1427
    %v1724 = vpack.c.b16 %v1436, %v1428
    %v1725 = vpack.c.b16 %v1437, %v1429
    %v1726 = vpack.c.b16 %v1438, %v1430
    %v1727 = vpack.c.b16 %v1439, %v1431
    %v1728 = vpack.c.b16 %v1440, %v1432
    %v1729 = vpack.c.b16 %v1441, %v1433
    %v1730 = vpack.c.b16 %v1450, %v1442
    %v1731 = vpack.c.b16 %v1451, %v1443
    %v1732 = vpack.c.b16 %v1452, %v1444
    %v1733 = vpack.c.b16 %v1453, %v1445
    %v1734 = vpack.c.b16 %v1454, %v1446
    %v1735 = vpack.c.b16 %v1455, %v1447
    %v1736 = vpack.c.b16 %v1456, %v1448
    %v1737 = vpack.c.b16 %v1457, %v1449
    %v1738 = vpack.c.b16 %v1466, %v1458
    %v1739 = vpack.c.b16 %v1467, %v1459
    %v1740 = vpack.c.b16 %v1468, %v1460
    %v1741 = vpack.c.b16 %v1469, %v1461
    %v1742 = vpack.c.b16 %v1470, %v1462
    %v1743 = vpack.c.b16 %v1471, %v1463
    %v1744 = vpack.c.b16 %v1472, %v1464
    %v1745 = vpack.c.b16 %v1473, %v1465
    %v1746 = vpack.c.b16 %v1482, %v1474
    %v1747 = vpack.c.b16 %v1483, %v1475
    %v1748 = vpack.c.b16 %v1484, %v1476
    %v1749 = vpack.c.b16 %v1485, %v1477
    %v1750 = vpack.c.b16 %v1486, %v1478
    %v1751 = vpack.c.b16 %v1487, %v1479
    %v1752 = vpack.c.b16 %v1488, %v1480
    %v1753 = vpack.c.b16 %v1489, %v1481
    %v1754 = vpack.c.b16 %v1498, %v1490
    %v1755 = vpack.c.b16 %v1499, %v1491
    %v1756 = vpack.c.b16 %v1500, %v1492
    %v1757 = vpack.c.b16 %v1501, %v1493
    %v1758 = vpack.c.b16 %v1502, %v1494
    %v1759 = vpack.c.b16 %v1503, %v1495
    %v1760 = vpack.c.b16 %v1504, %v1496
    %v1761 = vpack.c.b16 %v1505, %v1497
    %v1762 = vpack.c.b16 %v1514, %v1506
    %v1763 = vpack.c.b16 %v1515, %v1507
    %v1764 = vpack.c.b16 %v1516, %v1508
    %v1765 = vpack.c.b16 %v1517, %v1509
    %v1766 = vpack.c.b16 %v1518, %v1510
    %v1767 = vpack.c.b16 %v1519, %v1511
    %v1768 = vpack.c.b16 %v1520, %v1512
    %v1769 = vpack.c.b16 %v1521, %v1513
    %v1770 = vpack.c.b16 %v1530, %v1522
    %v1771 = vpack.c.b16 %v1531, %v1523
    %v1772 = vpack.c.b16 %v1532, %v1524
    %v1773 = vpack.c.b16 %v1533, %v1525
    %v1774 = vpack.c.b16 %v1534, %v1526
    %v1775 = vpack.c.b16 %v1535, %v1527
    %v1776 = vpack.c.b16 %v1536, %v1528
    %v1777 = vpack.c.b16 %v1537, %v1529
    %v1778 = vpack.c.b16 %v1546, %v1538
    %v1779 = vpack.c.b16 %v1547, %v1539
    %v1780 = vpack.c.b16 %v1548, %v1540
    %v1781 = vpack.c.b16 %v1549, %v1541
    %v1782 = vpack.c.b16 %v1550, %v1542
    %v1783 = vpack.c.b16 %v1551, %v1543
    %v1784 = vpack.c.b16 %v1552, %v1544
    %v1785 = vpack.c.b16 %v1553, %v1545
    %v1786 = vpack.c.b16 %v1562, %v1554
    %v1787 = vpack.c.b16 %v1563, %v1555
    %v1788 = vpack.c.b16 %v1564, %v1556
    %v1789 = vpack.c.b16 %v1565, %v1557
    %v1790 = vpack.c.b16 %v1566, %v1558
    %v1791 = vpack.c.b16 %v1567, %v1559
    %v1792 = vpack.c.b16 %v1568, %v1560
    %v1793 = vpack.c.b16 %v1569, %v1561
    %v1794 = vpack.c.b16 %v1578, %v1570
    %v1795 = vpack.c.b16 %v1579, %v1571
    %v1796 = vpack.c.b16 %v1580, %v1572
    %v1797 = vpack.c.b16 %v1581, %v1573
    %v1798 = vpack.c.b16 %v1582, %v1574
    %v1799 = vpack.c.b16 %v1583, %v1575
    %v1800 = vpack.c.b16 %v1584, %v1576
    %v1801 = vpack.c.b16 %v1585, %v1577
    %v1802 = vpack.c.b16 %v1594, %v1586
    %v1803 = vpack.c.b16 %v1595, %v1587
    %v1804 = vpack.c.b16 %v1596, %v1588
    %v1805 = vpack.c.b16 %v1597, %v1589
    %v1806 = vpack.c.b16 %v1598, %v1590
    %v1807 = vpack.c.b16 %v1599, %v1591
    %v1808 = vpack.c.b16 %v1600, %v1592
    %v1809 = vpack.c.b16 %v1601, %v1593
    %v1810 = vpack.c.b16 %v1610, %v1602
    %v1811 = vpack.c.b16 %v1611, %v1603
    %v1812 = vpack.c.b16 %v1612, %v1604
    %v1813 = vpack.c.b16 %v1613, %v1605
    %v1814 = vpack.c.b16 %v1614, %v1606
    %v1815 = vpack.c.b16 %v1615, %v1607
    %v1816 = vpack.c.b16 %v1616, %v1608
    %v1817 = vpack.c.b16 %v1617, %v1609
    %v1818 = vpack.c.b16 %v1626, %v1618
    %v1819 = vpack.c.b16 %v1627, %v1619
    %v1820 = vpack.c.b16 %v1628, %v1620
    %v1821 = vpack.c.b16 %v1629, %v1621
    %v1822 = vpack.c.b16 %v1630, %v1622
    %v1823 = vpack.c.b16 %v1631, %v1623
    %v1824 = vpack.c.b16 %v1632, %v1624
    %v1825 = vpack.c.b16 %v1633, %v1625
    %2018 = vmatprep.subr.bf16.mxu0 %v1691
    %2019 = vmatpush1.bf16.msra.mxu0 %v1690
    %2020 = vmatprep.subr.bf16.mxu0 %v1683
    %2021 = vmatpush1.bf16.msra.mxu0 %v1682
    %2022 = vmatprep.subr.bf16.mxu0 %v1675
    %2023 = vmatpush1.bf16.msra.mxu0 %v1674
    %2024 = vmatprep.subr.bf16.mxu0 %v1667
    %2025 = vmatpush1.bf16.msra.mxu0 %v1666
    %2026 = vmatprep.subr.bf16.mxu0 %v1659
    %2027 = vmatpush1.bf16.msra.mxu0 %v1658
    %2028 = vmatprep.subr.bf16.mxu0 %v1651
    %2029 = vmatpush1.bf16.msra.mxu0 %v1650
    %2030 = vmatprep.subr.bf16.mxu0 %v1643
    %2031 = vmatpush1.bf16.msra.mxu0 %v1642
    %2032 = vmatprep.subr.bf16.mxu0 %v1635
    %2033 = vmatpush1.bf16.msra.mxu0 %v1634
    %2034 = vmatprep.subr.bf16.mxu0 %v1755
    %2035 = vmatpush2.bf16.msra.mxu0 %v1754
    %2036 = vmatprep.subr.bf16.mxu0 %v1747
    %2037 = vmatpush2.bf16.msra.mxu0 %v1746
    %2038 = vmatprep.subr.bf16.mxu0 %v1739
    %2039 = vmatpush2.bf16.msra.mxu0 %v1738
    %2040 = vmatprep.subr.bf16.mxu0 %v1731
    %2041 = vmatpush2.bf16.msra.mxu0 %v1730
    %2042 = vmatprep.subr.bf16.mxu0 %v1723
    %2043 = vmatpush2.bf16.msra.mxu0 %v1722
    %2044 = vmatprep.subr.bf16.mxu0 %v1715
    %2045 = vmatpush2.bf16.msra.mxu0 %v1714
    %2046 = vmatprep.subr.bf16.mxu0 %v1707
    %2047 = vmatpush2.bf16.msra.mxu0 %v1706
    %2048 = vmatprep.subr.bf16.mxu0 %v1699
    %2049 = vmatpush2.bf16.msra.mxu0 %v1698
    %2050 = vmatprep.mubr.bf16.mxu0 %v822
    %2051 = vmatmul.mubr.bf16.gmra.mxu0 %v821
    %v2052 = vpop.f32.mrf.mxu0
    %v2053 = vadd.f32 %v1021, %v2052
    %v2054 = vpop.f32.mrf.mxu0
    %v2055 = vadd.f32 %v1025, %v2054
    %v2056 = vpop.f32.mrf.mxu0
    %v2057 = vpop.f32.mrf.mxu0
    %2058 = vdwg.mxu0
    %2059 = vmatprep.subr.bf16.mxu0 %v1819
    %2060 = vmatpush1.bf16.msra.mxu0 %v1818
    %2061 = vmatprep.subr.bf16.mxu0 %v1811
    %2062 = vmatpush1.bf16.msra.mxu0 %v1810
    %2063 = vmatprep.subr.bf16.mxu0 %v1803
    %2064 = vmatpush1.bf16.msra.mxu0 %v1802
    %2065 = vmatprep.subr.bf16.mxu0 %v1795
    %2066 = vmatpush1.bf16.msra.mxu0 %v1794
    %2067 = vmatprep.subr.bf16.mxu0 %v1787
    %2068 = vmatpush1.bf16.msra.mxu0 %v1786
    %2069 = vmatprep.subr.bf16.mxu0 %v1779
    %2070 = vmatpush1.bf16.msra.mxu0 %v1778
    %2071 = vmatprep.subr.bf16.mxu0 %v1771
    %2072 = vmatpush1.bf16.msra.mxu0 %v1770
    %2073 = vmatprep.subr.bf16.mxu0 %v1763
    %2074 = vmatpush1.bf16.msra.mxu0 %v1762
    %2075 = vmatprep.subr.bf16.mxu0 0
    %2076 = vmatpush2.bf16.msra.mxu0 0
    %2077 = vmatprep.subr.bf16.mxu0 0
    %2078 = vmatpush2.bf16.msra.mxu0 0
    %2079 = vmatprep.subr.bf16.mxu0 0
    %2080 = vmatpush2.bf16.msra.mxu0 0
    %2081 = vmatprep.subr.bf16.mxu0 0
    %2082 = vmatpush2.bf16.msra.mxu0 0
    %2083 = vmatprep.subr.bf16.mxu0 0
    %2084 = vmatpush2.bf16.msra.mxu0 0
    %2085 = vmatprep.subr.bf16.mxu0 0
    %2086 = vmatpush2.bf16.msra.mxu0 0
    %2087 = vmatprep.subr.bf16.mxu0 0
    %2088 = vmatpush2.bf16.msra.mxu0 0
    %2089 = vmatprep.subr.bf16.mxu0 0
    %2090 = vmatpush2.bf16.msra.mxu0 0
    %2091 = vmatprep.mubr.bf16.mxu0 0
    %2092 = vmatmul.mubr.bf16.gmra.mxu0 %v823
    %v2093 = vpop.f32.mrf.mxu0
    %v2094 = vadd.f32 %v2053, %v2093
    %v2095 = vpop.f32.mrf.mxu0
    %v2096 = vadd.f32 %v2055, %v2095
    %v2097 = vpop.f32.mrf.mxu0
    %v2098 = vpop.f32.mrf.mxu0
    %2099 = vdwg.mxu0
    %2100 = vmatprep.subr.bf16.mxu0 %v1693
    %2101 = vmatpush1.bf16.msra.mxu0 %v1692
    %2102 = vmatprep.subr.bf16.mxu0 %v1685
    %2103 = vmatpush1.bf16.msra.mxu0 %v1684
    %2104 = vmatprep.subr.bf16.mxu0 %v1677
    %2105 = vmatpush1.bf16.msra.mxu0 %v1676
    %2106 = vmatprep.subr.bf16.mxu0 %v1669
    %2107 = vmatpush1.bf16.msra.mxu0 %v1668
    %2108 = vmatprep.subr.bf16.mxu0 %v1661
    %2109 = vmatpush1.bf16.msra.mxu0 %v1660
    %2110 = vmatprep.subr.bf16.mxu0 %v1653
    %2111 = vmatpush1.bf16.msra.mxu0 %v1652
    %2112 = vmatprep.subr.bf16.mxu0 %v1645
    %2113 = vmatpush1.bf16.msra.mxu0 %v1644
    %2114 = vmatprep.subr.bf16.mxu0 %v1637
    %2115 = vmatpush1.bf16.msra.mxu0 %v1636
    %2116 = vmatprep.subr.bf16.mxu0 %v1757
    %2117 = vmatpush2.bf16.msra.mxu0 %v1756
    %2118 = vmatprep.subr.bf16.mxu0 %v1749
    %2119 = vmatpush2.bf16.msra.mxu0 %v1748
    %2120 = vmatprep.subr.bf16.mxu0 %v1741
    %2121 = vmatpush2.bf16.msra.mxu0 %v1740
    %2122 = vmatprep.subr.bf16.mxu0 %v1733
    %2123 = vmatpush2.bf16.msra.mxu0 %v1732
    %2124 = vmatprep.subr.bf16.mxu0 %v1725
    %2125 = vmatpush2.bf16.msra.mxu0 %v1724
    %2126 = vmatprep.subr.bf16.mxu0 %v1717
    %2127 = vmatpush2.bf16.msra.mxu0 %v1716
    %2128 = vmatprep.subr.bf16.mxu0 %v1709
    %2129 = vmatpush2.bf16.msra.mxu0 %v1708
    %2130 = vmatprep.subr.bf16.mxu0 %v1701
    %2131 = vmatpush2.bf16.msra.mxu0 %v1700
    %2132 = vmatprep.mubr.bf16.mxu0 %v822
    %2133 = vmatmul.mubr.bf16.gmra.mxu0 %v821
    %v2134 = vpop.f32.mrf.mxu0
    %v2135 = vadd.f32 %v1029, %v2134
    %v2136 = vpop.f32.mrf.mxu0
    %v2137 = vadd.f32 %v1033, %v2136
    %v2138 = vpop.f32.mrf.mxu0
    %v2139 = vpop.f32.mrf.mxu0
    %2140 = vdwg.mxu0
    %2141 = vmatprep.subr.bf16.mxu0 %v1821
    %2142 = vmatpush1.bf16.msra.mxu0 %v1820
    %2143 = vmatprep.subr.bf16.mxu0 %v1813
    %2144 = vmatpush1.bf16.msra.mxu0 %v1812
    %2145 = vmatprep.subr.bf16.mxu0 %v1805
    %2146 = vmatpush1.bf16.msra.mxu0 %v1804
    %2147 = vmatprep.subr.bf16.mxu0 %v1797
    %2148 = vmatpush1.bf16.msra.mxu0 %v1796
    %2149 = vmatprep.subr.bf16.mxu0 %v1789
    %2150 = vmatpush1.bf16.msra.mxu0 %v1788
    %2151 = vmatprep.subr.bf16.mxu0 %v1781
    %2152 = vmatpush1.bf16.msra.mxu0 %v1780
    %2153 = vmatprep.subr.bf16.mxu0 %v1773
    %2154 = vmatpush1.bf16.msra.mxu0 %v1772
    %2155 = vmatprep.subr.bf16.mxu0 %v1765
    %2156 = vmatpush1.bf16.msra.mxu0 %v1764
    %2157 = vmatprep.subr.bf16.mxu0 0
    %2158 = vmatpush2.bf16.msra.mxu0 0
    %2159 = vmatprep.subr.bf16.mxu0 0
    %2160 = vmatpush2.bf16.msra.mxu0 0
    %2161 = vmatprep.subr.bf16.mxu0 0
    %2162 = vmatpush2.bf16.msra.mxu0 0
    %2163 = vmatprep.subr.bf16.mxu0 0
    %2164 = vmatpush2.bf16.msra.mxu0 0
    %2165 = vmatprep.subr.bf16.mxu0 0
    %2166 = vmatpush2.bf16.msra.mxu0 0
    %2167 = vmatprep.subr.bf16.mxu0 0
    %2168 = vmatpush2.bf16.msra.mxu0 0
    %2169 = vmatprep.subr.bf16.mxu0 0
    %2170 = vmatpush2.bf16.msra.mxu0 0
    %2171 = vmatprep.subr.bf16.mxu0 0
    %2172 = vmatpush2.bf16.msra.mxu0 0
    %2173 = vmatprep.mubr.bf16.mxu0 0
    %2174 = vmatmul.mubr.bf16.gmra.mxu0 %v823
    %v2175 = vpop.f32.mrf.mxu0
    %v2176 = vadd.f32 %v2135, %v2175
    %v2177 = vpop.f32.mrf.mxu0
    %v2178 = vadd.f32 %v2137, %v2177
    %v2179 = vpop.f32.mrf.mxu0
    %v2180 = vpop.f32.mrf.mxu0
    %2181 = vdwg.mxu0
    %2182 = vmatprep.subr.bf16.mxu0 %v1695
    %2183 = vmatpush1.bf16.msra.mxu0 %v1694
    %2184 = vmatprep.subr.bf16.mxu0 %v1687
    %2185 = vmatpush1.bf16.msra.mxu0 %v1686
    %2186 = vmatprep.subr.bf16.mxu0 %v1679
    %2187 = vmatpush1.bf16.msra.mxu0 %v1678
    %2188 = vmatprep.subr.bf16.mxu0 %v1671
    %2189 = vmatpush1.bf16.msra.mxu0 %v1670
    %2190 = vmatprep.subr.bf16.mxu0 %v1663
    %2191 = vmatpush1.bf16.msra.mxu0 %v1662
    %2192 = vmatprep.subr.bf16.mxu0 %v1655
    %2193 = vmatpush1.bf16.msra.mxu0 %v1654
    %2194 = vmatprep.subr.bf16.mxu0 %v1647
    %2195 = vmatpush1.bf16.msra.mxu0 %v1646
    %2196 = vmatprep.subr.bf16.mxu0 %v1639
    %2197 = vmatpush1.bf16.msra.mxu0 %v1638
    %2198 = vmatprep.subr.bf16.mxu0 %v1759
    %2199 = vmatpush2.bf16.msra.mxu0 %v1758
    %2200 = vmatprep.subr.bf16.mxu0 %v1751
    %2201 = vmatpush2.bf16.msra.mxu0 %v1750
    %2202 = vmatprep.subr.bf16.mxu0 %v1743
    %2203 = vmatpush2.bf16.msra.mxu0 %v1742
    %2204 = vmatprep.subr.bf16.mxu0 %v1735
    %2205 = vmatpush2.bf16.msra.mxu0 %v1734
    %2206 = vmatprep.subr.bf16.mxu0 %v1727
    %2207 = vmatpush2.bf16.msra.mxu0 %v1726
    %2208 = vmatprep.subr.bf16.mxu0 %v1719
    %2209 = vmatpush2.bf16.msra.mxu0 %v1718
    %2210 = vmatprep.subr.bf16.mxu0 %v1711
    %2211 = vmatpush2.bf16.msra.mxu0 %v1710
    %2212 = vmatprep.subr.bf16.mxu0 %v1703
    %2213 = vmatpush2.bf16.msra.mxu0 %v1702
    %2214 = vmatprep.mubr.bf16.mxu0 %v822
    %2215 = vmatmul.mubr.bf16.gmra.mxu0 %v821
    %v2216 = vpop.f32.mrf.mxu0
    %v2217 = vadd.f32 %v1037, %v2216
    %v2218 = vpop.f32.mrf.mxu0
    %v2219 = vadd.f32 %v1041, %v2218
    %v2220 = vpop.f32.mrf.mxu0
    %v2221 = vpop.f32.mrf.mxu0
    %2222 = vdwg.mxu0
    %2223 = vmatprep.subr.bf16.mxu0 %v1823
    %2224 = vmatpush1.bf16.msra.mxu0 %v1822
    %2225 = vmatprep.subr.bf16.mxu0 %v1815
    %2226 = vmatpush1.bf16.msra.mxu0 %v1814
    %2227 = vmatprep.subr.bf16.mxu0 %v1807
    %2228 = vmatpush1.bf16.msra.mxu0 %v1806
    %2229 = vmatprep.subr.bf16.mxu0 %v1799
    %2230 = vmatpush1.bf16.msra.mxu0 %v1798
    %2231 = vmatprep.subr.bf16.mxu0 %v1791
    %2232 = vmatpush1.bf16.msra.mxu0 %v1790
    %2233 = vmatprep.subr.bf16.mxu0 %v1783
    %2234 = vmatpush1.bf16.msra.mxu0 %v1782
    %2235 = vmatprep.subr.bf16.mxu0 %v1775
    %2236 = vmatpush1.bf16.msra.mxu0 %v1774
    %2237 = vmatprep.subr.bf16.mxu0 %v1767
    %2238 = vmatpush1.bf16.msra.mxu0 %v1766
    %2239 = vmatprep.subr.bf16.mxu0 0
    %2240 = vmatpush2.bf16.msra.mxu0 0
    %2241 = vmatprep.subr.bf16.mxu0 0
    %2242 = vmatpush2.bf16.msra.mxu0 0
    %2243 = vmatprep.subr.bf16.mxu0 0
    %2244 = vmatpush2.bf16.msra.mxu0 0
    %2245 = vmatprep.subr.bf16.mxu0 0
    %2246 = vmatpush2.bf16.msra.mxu0 0
    %2247 = vmatprep.subr.bf16.mxu0 0
    %2248 = vmatpush2.bf16.msra.mxu0 0
    %2249 = vmatprep.subr.bf16.mxu0 0
    %2250 = vmatpush2.bf16.msra.mxu0 0
    %2251 = vmatprep.subr.bf16.mxu0 0
    %2252 = vmatpush2.bf16.msra.mxu0 0
    %2253 = vmatprep.subr.bf16.mxu0 0
    %2254 = vmatpush2.bf16.msra.mxu0 0
    %2255 = vmatprep.mubr.bf16.mxu0 0
    %2256 = vmatmul.mubr.bf16.gmra.mxu0 %v823
    %v2257 = vpop.f32.mrf.mxu0
    %v2258 = vadd.f32 %v2217, %v2257
    %v2259 = vpop.f32.mrf.mxu0
    %v2260 = vadd.f32 %v2219, %v2259
    %v2261 = vpop.f32.mrf.mxu0
    %v2262 = vpop.f32.mrf.mxu0
    %2263 = vdwg.mxu0
    %2264 = vmatprep.subr.bf16.mxu0 %v1697
    %2265 = vmatpush1.bf16.msra.mxu0 %v1696
    %2266 = vmatprep.subr.bf16.mxu0 %v1689
    %2267 = vmatpush1.bf16.msra.mxu0 %v1688
    %2268 = vmatprep.subr.bf16.mxu0 %v1681
    %2269 = vmatpush1.bf16.msra.mxu0 %v1680
    %2270 = vmatprep.subr.bf16.mxu0 %v1673
    %2271 = vmatpush1.bf16.msra.mxu0 %v1672
    %2272 = vmatprep.subr.bf16.mxu0 %v1665
    %2273 = vmatpush1.bf16.msra.mxu0 %v1664
    %2274 = vmatprep.subr.bf16.mxu0 %v1657
    %2275 = vmatpush1.bf16.msra.mxu0 %v1656
    %2276 = vmatprep.subr.bf16.mxu0 %v1649
    %2277 = vmatpush1.bf16.msra.mxu0 %v1648
    %2278 = vmatprep.subr.bf16.mxu0 %v1641
    %2279 = vmatpush1.bf16.msra.mxu0 %v1640
    %2280 = vmatprep.subr.bf16.mxu0 %v1761
    %2281 = vmatpush2.bf16.msra.mxu0 %v1760
    %2282 = vmatprep.subr.bf16.mxu0 %v1753
    %2283 = vmatpush2.bf16.msra.mxu0 %v1752
    %2284 = vmatprep.subr.bf16.mxu0 %v1745
    %2285 = vmatpush2.bf16.msra.mxu0 %v1744
    %2286 = vmatprep.subr.bf16.mxu0 %v1737
    %2287 = vmatpush2.bf16.msra.mxu0 %v1736
    %2288 = vmatprep.subr.bf16.mxu0 %v1729
    %2289 = vmatpush2.bf16.msra.mxu0 %v1728
    %2290 = vmatprep.subr.bf16.mxu0 %v1721
    %2291 = vmatpush2.bf16.msra.mxu0 %v1720
    %2292 = vmatprep.subr.bf16.mxu0 %v1713
    %2293 = vmatpush2.bf16.msra.mxu0 %v1712
    %2294 = vmatprep.subr.bf16.mxu0 %v1705
    %2295 = vmatpush2.bf16.msra.mxu0 %v1704
    %2296 = vmatprep.mubr.bf16.mxu0 %v822
    %2297 = vmatmul.mubr.bf16.gmra.mxu0 %v821
    %v2298 = vpop.f32.mrf.mxu0
    %v2299 = vadd.f32 %v1045, %v2298
    %v2300 = vpop.f32.mrf.mxu0
    %v2301 = vadd.f32 %v1049, %v2300
    %v2302 = vpop.f32.mrf.mxu0
    %v2303 = vpop.f32.mrf.mxu0
    %2304 = vdwg.mxu0
    %2305 = vmatprep.subr.bf16.mxu0 %v1825
    %2306 = vmatpush1.bf16.msra.mxu0 %v1824
    %2307 = vmatprep.subr.bf16.mxu0 %v1817
    %2308 = vmatpush1.bf16.msra.mxu0 %v1816
    %2309 = vmatprep.subr.bf16.mxu0 %v1809
    %2310 = vmatpush1.bf16.msra.mxu0 %v1808
    %2311 = vmatprep.subr.bf16.mxu0 %v1801
    %2312 = vmatpush1.bf16.msra.mxu0 %v1800
    %2313 = vmatprep.subr.bf16.mxu0 %v1793
    %2314 = vmatpush1.bf16.msra.mxu0 %v1792
    %2315 = vmatprep.subr.bf16.mxu0 %v1785
    %2316 = vmatpush1.bf16.msra.mxu0 %v1784
    %2317 = vmatprep.subr.bf16.mxu0 %v1777
    %2318 = vmatpush1.bf16.msra.mxu0 %v1776
    %2319 = vmatprep.subr.bf16.mxu0 %v1769
    %2320 = vmatpush1.bf16.msra.mxu0 %v1768
    %2321 = vmatprep.subr.bf16.mxu0 0
    %2322 = vmatpush2.bf16.msra.mxu0 0
    %2323 = vmatprep.subr.bf16.mxu0 0
    %2324 = vmatpush2.bf16.msra.mxu0 0
    %2325 = vmatprep.subr.bf16.mxu0 0
    %2326 = vmatpush2.bf16.msra.mxu0 0
    %2327 = vmatprep.subr.bf16.mxu0 0
    %2328 = vmatpush2.bf16.msra.mxu0 0
    %2329 = vmatprep.subr.bf16.mxu0 0
    %2330 = vmatpush2.bf16.msra.mxu0 0
    %2331 = vmatprep.subr.bf16.mxu0 0
    %2332 = vmatpush2.bf16.msra.mxu0 0
    %2333 = vmatprep.subr.bf16.mxu0 0
    %2334 = vmatpush2.bf16.msra.mxu0 0
    %2335 = vmatprep.subr.bf16.mxu0 0
    %2336 = vmatpush2.bf16.msra.mxu0 0
    %2337 = vmatprep.mubr.bf16.mxu0 0
    %2338 = vmatmul.mubr.bf16.gmra.mxu0 %v823
    %v2339 = vpop.f32.mrf.mxu0
    %v2340 = vadd.f32 %v2299, %v2339
    %v2341 = vpop.f32.mrf.mxu0
    %v2342 = vadd.f32 %v2301, %v2341
    %v2343 = vpop.f32.mrf.mxu0
    %v2344 = vpop.f32.mrf.mxu0
    %2345 = vdwg.mxu0
    %v2346 = vmax.f32 %v2094, 0.0
    %v2347 = vmax.f32 %v2096, 0.0
    %v2348 = vmax.f32 %v2176, 0.0
    %v2349 = vmax.f32 %v2178, 0.0
    %v2350 = vmax.f32 %v2258, 0.0
    %v2351 = vmax.f32 %v2260, 0.0
    %v2352 = vmax.f32 %v2340, 0.0
    %v2353 = vmax.f32 %v2342, 0.0
    %v2354 = vpack.c.bf16 %v2346, %v2346
    %v2355 = vpack.c.bf16 %v2347, %v2347
    %v2356 = vpack.c.bf16 %v2348, %v2348
    %v2357 = vpack.c.bf16 %v2349, %v2349
    %v2358 = vpack.c.bf16 %v2350, %v2350
    %v2359 = vpack.c.bf16 %v2351, %v2351
    %v2360 = vpack.c.bf16 %v2352, %v2352
    %v2361 = vpack.c.bf16 %v2353, %v2353
    %v2362 = vld [vmem:[#allocation11] sm:$0xff]
    %v2363 = vld [vmem:[#allocation11 + $0x8] sm:$0xff]
    %v2364 = vld [vmem:[#allocation11 + $0x10] sm:$0xff]
    %v2365 = vld [vmem:[#allocation11 + $0x18] sm:$0xff]
    %v2366 = vld [vmem:[#allocation11 + $0x20] sm:$0xff]
    %v2367 = vld [vmem:[#allocation11 + $0x28] sm:$0xff]
    %v2368 = vld [vmem:[#allocation11 + $0x30] sm:$0xff]
    %v2369 = vld [vmem:[#allocation11 + $0x38] sm:$0xff]
    %v2370 = vld [vmem:[#allocation11 + $0x40] sm:$0xff]
    %v2371 = vld [vmem:[#allocation11 + $0x48] sm:$0xff]
    %v2372 = vld [vmem:[#allocation11 + $0x50] sm:$0xff]
    %v2373 = vld [vmem:[#allocation11 + $0x58] sm:$0xff]
    %v2374 = vld [vmem:[#allocation11 + $0x60] sm:$0xff]
    %v2375 = vld [vmem:[#allocation11 + $0x68] sm:$0xff]
    %v2376 = vld [vmem:[#allocation11 + $0x70] sm:$0xff]
    %v2377 = vld [vmem:[#allocation11 + $0x78] sm:$0xff]
    %v2378 = vld [vmem:[#allocation11 + $0x80] sm:$0xff]
    %v2379 = vld [vmem:[#allocation11 + $0x88] sm:$0xff]
    %v2380 = vld [vmem:[#allocation11 + $0x90] sm:$0xff]
    %v2381 = vld [vmem:[#allocation11 + $0x98] sm:$0xff]
    %v2382 = vld [vmem:[#allocation11 + $0xa0] sm:$0xff]
    %v2383 = vld [vmem:[#allocation11 + $0xa8] sm:$0xff]
    %v2384 = vld [vmem:[#allocation11 + $0xb0] sm:$0xff]
    %v2385 = vld [vmem:[#allocation11 + $0xb8] sm:$0xff]
    %v2386 = vld [vmem:[#allocation11 + $0xc0] sm:$0xff]
    %v2387 = vld [vmem:[#allocation11 + $0xc8] sm:$0xff]
    %v2388 = vld [vmem:[#allocation11 + $0xd0] sm:$0xff]
    %v2389 = vld [vmem:[#allocation11 + $0xd8] sm:$0xff]
    %v2390 = vld [vmem:[#allocation11 + $0xe0] sm:$0xff]
    %v2391 = vld [vmem:[#allocation11 + $0xe8] sm:$0xff]
    %v2392 = vld [vmem:[#allocation11 + $0xf0] sm:$0xff]
    %v2393 = vld [vmem:[#allocation11 + $0xf8] sm:$0xff]
    %v2394 = vld [vmem:[#allocation11 + $0x100] sm:$0xff]
    %v2395 = vld [vmem:[#allocation11 + $0x108] sm:$0xff]
    %v2396 = vld [vmem:[#allocation11 + $0x110] sm:$0xff]
    %v2397 = vld [vmem:[#allocation11 + $0x118] sm:$0xff]
    %v2398 = vld [vmem:[#allocation11 + $0x120] sm:$0xff]
    %v2399 = vld [vmem:[#allocation11 + $0x128] sm:$0xff]
    %v2400 = vld [vmem:[#allocation11 + $0x130] sm:$0xff]
    %v2401 = vld [vmem:[#allocation11 + $0x138] sm:$0xff]
    %v2402 = vld [vmem:[#allocation11 + $0x140] sm:$0xff]
    %v2403 = vld [vmem:[#allocation11 + $0x148] sm:$0xff]
    %v2404 = vld [vmem:[#allocation11 + $0x150] sm:$0xff]
    %v2405 = vld [vmem:[#allocation11 + $0x158] sm:$0xff]
    %v2406 = vld [vmem:[#allocation11 + $0x160] sm:$0xff]
    %v2407 = vld [vmem:[#allocation11 + $0x168] sm:$0xff]
    %v2408 = vld [vmem:[#allocation11 + $0x170] sm:$0xff]
    %v2409 = vld [vmem:[#allocation11 + $0x178] sm:$0xff]
    %v2410 = vld [vmem:[#allocation11 + $0x180] sm:$0xff]
    %v2411 = vld [vmem:[#allocation11 + $0x188] sm:$0xff]
    %v2412 = vld [vmem:[#allocation11 + $0x190] sm:$0xff]
    %v2413 = vld [vmem:[#allocation11 + $0x198] sm:$0xff]
    %v2414 = vld [vmem:[#allocation11 + $0x1a0] sm:$0xff]
    %v2415 = vld [vmem:[#allocation11 + $0x1a8] sm:$0xff]
    %v2416 = vld [vmem:[#allocation11 + $0x1b0] sm:$0xff]
    %v2417 = vld [vmem:[#allocation11 + $0x1b8] sm:$0xff]
    %v2418 = vld [vmem:[#allocation11 + $0x1c0] sm:$0xff]
    %v2419 = vld [vmem:[#allocation11 + $0x1c8] sm:$0xff]
    %v2420 = vld [vmem:[#allocation11 + $0x1d0] sm:$0xff]
    %v2421 = vld [vmem:[#allocation11 + $0x1d8] sm:$0xff]
    %v2422 = vld [vmem:[#allocation11 + $0x1e0] sm:$0xff]
    %v2423 = vld [vmem:[#allocation11 + $0x1e8] sm:$0xff]
    %v2424 = vld [vmem:[#allocation11 + $0x1f0] sm:$0xff]
    %v2425 = vld [vmem:[#allocation11 + $0x1f8] sm:$0xff]
    %v2426 = vld [vmem:[#allocation11 + $0x200] sm:$0xff]
    %v2427 = vld [vmem:[#allocation11 + $0x208] sm:$0xff]
    %v2428 = vld [vmem:[#allocation11 + $0x210] sm:$0xff]
    %v2429 = vld [vmem:[#allocation11 + $0x218] sm:$0xff]
    %v2430 = vld [vmem:[#allocation11 + $0x220] sm:$0xff]
    %v2431 = vld [vmem:[#allocation11 + $0x228] sm:$0xff]
    %v2432 = vld [vmem:[#allocation11 + $0x230] sm:$0xff]
    %v2433 = vld [vmem:[#allocation11 + $0x238] sm:$0xff]
    %v2434 = vld [vmem:[#allocation11 + $0x240] sm:$0xff]
    %v2435 = vld [vmem:[#allocation11 + $0x248] sm:$0xff]
    %v2436 = vld [vmem:[#allocation11 + $0x250] sm:$0xff]
    %v2437 = vld [vmem:[#allocation11 + $0x258] sm:$0xff]
    %v2438 = vld [vmem:[#allocation11 + $0x260] sm:$0xff]
    %v2439 = vld [vmem:[#allocation11 + $0x268] sm:$0xff]
    %v2440 = vld [vmem:[#allocation11 + $0x270] sm:$0xff]
    %v2441 = vld [vmem:[#allocation11 + $0x278] sm:$0xff]
    %v2442 = vld [vmem:[#allocation11 + $0x280] sm:$0xff]
    %v2443 = vld [vmem:[#allocation11 + $0x288] sm:$0xff]
    %v2444 = vld [vmem:[#allocation11 + $0x290] sm:$0xff]
    %v2445 = vld [vmem:[#allocation11 + $0x298] sm:$0xff]
    %v2446 = vld [vmem:[#allocation11 + $0x2a0] sm:$0xff]
    %v2447 = vld [vmem:[#allocation11 + $0x2a8] sm:$0xff]
    %v2448 = vld [vmem:[#allocation11 + $0x2b0] sm:$0xff]
    %v2449 = vld [vmem:[#allocation11 + $0x2b8] sm:$0xff]
    %v2450 = vld [vmem:[#allocation11 + $0x2c0] sm:$0xff]
    %v2451 = vld [vmem:[#allocation11 + $0x2c8] sm:$0xff]
    %v2452 = vld [vmem:[#allocation11 + $0x2d0] sm:$0xff]
    %v2453 = vld [vmem:[#allocation11 + $0x2d8] sm:$0xff]
    %v2454 = vld [vmem:[#allocation11 + $0x2e0] sm:$0xff]
    %v2455 = vld [vmem:[#allocation11 + $0x2e8] sm:$0xff]
    %v2456 = vld [vmem:[#allocation11 + $0x2f0] sm:$0xff]
    %v2457 = vld [vmem:[#allocation11 + $0x2f8] sm:$0xff]
    %v2458 = vld [vmem:[#allocation11 + $0x300] sm:$0xff]
    %v2459 = vld [vmem:[#allocation11 + $0x308] sm:$0xff]
    %v2460 = vld [vmem:[#allocation11 + $0x310] sm:$0xff]
    %v2461 = vld [vmem:[#allocation11 + $0x318] sm:$0xff]
    %v2462 = vld [vmem:[#allocation11 + $0x320] sm:$0xff]
    %v2463 = vld [vmem:[#allocation11 + $0x328] sm:$0xff]
    %v2464 = vld [vmem:[#allocation11 + $0x330] sm:$0xff]
    %v2465 = vld [vmem:[#allocation11 + $0x338] sm:$0xff]
    %v2466 = vld [vmem:[#allocation11 + $0x340] sm:$0xff]
    %v2467 = vld [vmem:[#allocation11 + $0x348] sm:$0xff]
    %v2468 = vld [vmem:[#allocation11 + $0x350] sm:$0xff]
    %v2469 = vld [vmem:[#allocation11 + $0x358] sm:$0xff]
    %v2470 = vld [vmem:[#allocation11 + $0x360] sm:$0xff]
    %v2471 = vld [vmem:[#allocation11 + $0x368] sm:$0xff]
    %v2472 = vld [vmem:[#allocation11 + $0x370] sm:$0xff]
    %v2473 = vld [vmem:[#allocation11 + $0x378] sm:$0xff]
    %v2474 = vld [vmem:[#allocation11 + $0x380] sm:$0xff]
    %v2475 = vld [vmem:[#allocation11 + $0x388] sm:$0xff]
    %v2476 = vld [vmem:[#allocation11 + $0x390] sm:$0xff]
    %v2477 = vld [vmem:[#allocation11 + $0x398] sm:$0xff]
    %v2478 = vld [vmem:[#allocation11 + $0x3a0] sm:$0xff]
    %v2479 = vld [vmem:[#allocation11 + $0x3a8] sm:$0xff]
    %v2480 = vld [vmem:[#allocation11 + $0x3b0] sm:$0xff]
    %v2481 = vld [vmem:[#allocation11 + $0x3b8] sm:$0xff]
    %v2482 = vld [vmem:[#allocation11 + $0x3c0] sm:$0xff]
    %v2483 = vld [vmem:[#allocation11 + $0x3c8] sm:$0xff]
    %v2484 = vld [vmem:[#allocation11 + $0x3d0] sm:$0xff]
    %v2485 = vld [vmem:[#allocation11 + $0x3d8] sm:$0xff]
    %v2486 = vld [vmem:[#allocation11 + $0x3e0] sm:$0xff]
    %v2487 = vld [vmem:[#allocation11 + $0x3e8] sm:$0xff]
    %v2488 = vld [vmem:[#allocation11 + $0x3f0] sm:$0xff]
    %v2489 = vld [vmem:[#allocation11 + $0x3f8] sm:$0xff]
    %v2490 = vld [vmem:[#allocation11 + $0x400] sm:$0xff]
    %v2491 = vld [vmem:[#allocation11 + $0x408] sm:$0xff]
    %v2492 = vld [vmem:[#allocation11 + $0x410] sm:$0xff]
    %v2493 = vld [vmem:[#allocation11 + $0x418] sm:$0xff]
    %v2494 = vld [vmem:[#allocation11 + $0x420] sm:$0xff]
    %v2495 = vld [vmem:[#allocation11 + $0x428] sm:$0xff]
    %v2496 = vld [vmem:[#allocation11 + $0x430] sm:$0xff]
    %v2497 = vld [vmem:[#allocation11 + $0x438] sm:$0xff]
    %v2498 = vld [vmem:[#allocation11 + $0x440] sm:$0xff]
    %v2499 = vld [vmem:[#allocation11 + $0x448] sm:$0xff]
    %v2500 = vld [vmem:[#allocation11 + $0x450] sm:$0xff]
    %v2501 = vld [vmem:[#allocation11 + $0x458] sm:$0xff]
    %v2502 = vld [vmem:[#allocation11 + $0x460] sm:$0xff]
    %v2503 = vld [vmem:[#allocation11 + $0x468] sm:$0xff]
    %v2504 = vld [vmem:[#allocation11 + $0x470] sm:$0xff]
    %v2505 = vld [vmem:[#allocation11 + $0x478] sm:$0xff]
    %v2506 = vld [vmem:[#allocation11 + $0x480] sm:$0xff]
    %v2507 = vld [vmem:[#allocation11 + $0x488] sm:$0xff]
    %v2508 = vld [vmem:[#allocation11 + $0x490] sm:$0xff]
    %v2509 = vld [vmem:[#allocation11 + $0x498] sm:$0xff]
    %v2510 = vld [vmem:[#allocation11 + $0x4a0] sm:$0xff]
    %v2511 = vld [vmem:[#allocation11 + $0x4a8] sm:$0xff]
    %v2512 = vld [vmem:[#allocation11 + $0x4b0] sm:$0xff]
    %v2513 = vld [vmem:[#allocation11 + $0x4b8] sm:$0xff]
    %v2514 = vld [vmem:[#allocation11 + $0x4c0] sm:$0xff]
    %v2515 = vld [vmem:[#allocation11 + $0x4c8] sm:$0xff]
    %v2516 = vld [vmem:[#allocation11 + $0x4d0] sm:$0xff]
    %v2517 = vld [vmem:[#allocation11 + $0x4d8] sm:$0xff]
    %v2518 = vld [vmem:[#allocation11 + $0x4e0] sm:$0xff]
    %v2519 = vld [vmem:[#allocation11 + $0x4e8] sm:$0xff]
    %v2520 = vld [vmem:[#allocation11 + $0x4f0] sm:$0xff]
    %v2521 = vld [vmem:[#allocation11 + $0x4f8] sm:$0xff]
    %v2522 = vld [vmem:[#allocation11 + $0x500] sm:$0xff]
    %v2523 = vld [vmem:[#allocation11 + $0x508] sm:$0xff]
    %v2524 = vld [vmem:[#allocation11 + $0x510] sm:$0xff]
    %v2525 = vld [vmem:[#allocation11 + $0x518] sm:$0xff]
    %v2526 = vld [vmem:[#allocation11 + $0x520] sm:$0xff]
    %v2527 = vld [vmem:[#allocation11 + $0x528] sm:$0xff]
    %v2528 = vld [vmem:[#allocation11 + $0x530] sm:$0xff]
    %v2529 = vld [vmem:[#allocation11 + $0x538] sm:$0xff]
    %v2530 = vld [vmem:[#allocation11 + $0x540] sm:$0xff]
    %v2531 = vld [vmem:[#allocation11 + $0x548] sm:$0xff]
    %v2532 = vld [vmem:[#allocation11 + $0x550] sm:$0xff]
    %v2533 = vld [vmem:[#allocation11 + $0x558] sm:$0xff]
    %v2534 = vld [vmem:[#allocation11 + $0x560] sm:$0xff]
    %v2535 = vld [vmem:[#allocation11 + $0x568] sm:$0xff]
    %v2536 = vld [vmem:[#allocation11 + $0x570] sm:$0xff]
    %v2537 = vld [vmem:[#allocation11 + $0x578] sm:$0xff]
    %v2538 = vld [vmem:[#allocation11 + $0x580] sm:$0xff]
    %v2539 = vld [vmem:[#allocation11 + $0x588] sm:$0xff]
    %v2540 = vld [vmem:[#allocation11 + $0x590] sm:$0xff]
    %v2541 = vld [vmem:[#allocation11 + $0x598] sm:$0xff]
    %v2542 = vld [vmem:[#allocation11 + $0x5a0] sm:$0xff]
    %v2543 = vld [vmem:[#allocation11 + $0x5a8] sm:$0xff]
    %v2544 = vld [vmem:[#allocation11 + $0x5b0] sm:$0xff]
    %v2545 = vld [vmem:[#allocation11 + $0x5b8] sm:$0xff]
    %v2546 = vld [vmem:[#allocation11 + $0x5c0] sm:$0xff]
    %v2547 = vld [vmem:[#allocation11 + $0x5c8] sm:$0xff]
    %v2548 = vld [vmem:[#allocation11 + $0x5d0] sm:$0xff]
    %v2549 = vld [vmem:[#allocation11 + $0x5d8] sm:$0xff]
    %v2550 = vld [vmem:[#allocation11 + $0x5e0] sm:$0xff]
    %v2551 = vld [vmem:[#allocation11 + $0x5e8] sm:$0xff]
    %v2552 = vld [vmem:[#allocation11 + $0x5f0] sm:$0xff]
    %v2553 = vld [vmem:[#allocation11 + $0x5f8] sm:$0xff]
    %v2554 = vld [vmem:[#allocation11 + $0x600] sm:$0xff]
    %v2555 = vld [vmem:[#allocation11 + $0x608] sm:$0xff]
    %v2556 = vld [vmem:[#allocation11 + $0x610] sm:$0xff]
    %v2557 = vld [vmem:[#allocation11 + $0x618] sm:$0xff]
    %v2558 = vld [vmem:[#allocation11 + $0x620] sm:$0xff]
    %v2559 = vld [vmem:[#allocation11 + $0x628] sm:$0xff]
    %v2560 = vld [vmem:[#allocation11 + $0x630] sm:$0xff]
    %v2561 = vld [vmem:[#allocation11 + $0x638] sm:$0xff]
    %v2562 = vld [vmem:[#allocation11 + $0x640] sm:$0xff]
    %v2563 = vld [vmem:[#allocation11 + $0x648] sm:$0xff]
    %v2564 = vld [vmem:[#allocation11 + $0x650] sm:$0xff]
    %v2565 = vld [vmem:[#allocation11 + $0x658] sm:$0xff]
    %v2566 = vld [vmem:[#allocation11 + $0x660] sm:$0xff]
    %v2567 = vld [vmem:[#allocation11 + $0x668] sm:$0xff]
    %v2568 = vld [vmem:[#allocation11 + $0x670] sm:$0xff]
    %v2569 = vld [vmem:[#allocation11 + $0x678] sm:$0xff]
    %v2570 = vld [vmem:[#allocation11 + $0x680] sm:$0xff]
    %v2571 = vld [vmem:[#allocation11 + $0x688] sm:$0xff]
    %v2572 = vld [vmem:[#allocation11 + $0x690] sm:$0xff]
    %v2573 = vld [vmem:[#allocation11 + $0x698] sm:$0xff]
    %v2574 = vld [vmem:[#allocation11 + $0x6a0] sm:$0xff]
    %v2575 = vld [vmem:[#allocation11 + $0x6a8] sm:$0xff]
    %v2576 = vld [vmem:[#allocation11 + $0x6b0] sm:$0xff]
    %v2577 = vld [vmem:[#allocation11 + $0x6b8] sm:$0xff]
    %v2578 = vld [vmem:[#allocation11 + $0x6c0] sm:$0xff]
    %v2579 = vld [vmem:[#allocation11 + $0x6c8] sm:$0xff]
    %v2580 = vld [vmem:[#allocation11 + $0x6d0] sm:$0xff]
    %v2581 = vld [vmem:[#allocation11 + $0x6d8] sm:$0xff]
    %v2582 = vld [vmem:[#allocation11 + $0x6e0] sm:$0xff]
    %v2583 = vld [vmem:[#allocation11 + $0x6e8] sm:$0xff]
    %v2584 = vld [vmem:[#allocation11 + $0x6f0] sm:$0xff]
    %v2585 = vld [vmem:[#allocation11 + $0x6f8] sm:$0xff]
    %v2586 = vld [vmem:[#allocation11 + $0x700] sm:$0xff]
    %v2587 = vld [vmem:[#allocation11 + $0x708] sm:$0xff]
    %v2588 = vld [vmem:[#allocation11 + $0x710] sm:$0xff]
    %v2589 = vld [vmem:[#allocation11 + $0x718] sm:$0xff]
    %v2590 = vld [vmem:[#allocation11 + $0x720] sm:$0xff]
    %v2591 = vld [vmem:[#allocation11 + $0x728] sm:$0xff]
    %v2592 = vld [vmem:[#allocation11 + $0x730] sm:$0xff]
    %v2593 = vld [vmem:[#allocation11 + $0x738] sm:$0xff]
    %v2594 = vld [vmem:[#allocation11 + $0x740] sm:$0xff]
    %v2595 = vld [vmem:[#allocation11 + $0x748] sm:$0xff]
    %v2596 = vld [vmem:[#allocation11 + $0x750] sm:$0xff]
    %v2597 = vld [vmem:[#allocation11 + $0x758] sm:$0xff]
    %v2598 = vld [vmem:[#allocation11 + $0x760] sm:$0xff]
    %v2599 = vld [vmem:[#allocation11 + $0x768] sm:$0xff]
    %v2600 = vld [vmem:[#allocation11 + $0x770] sm:$0xff]
    %v2601 = vld [vmem:[#allocation11 + $0x778] sm:$0xff]
    %v2602 = vld [vmem:[#allocation11 + $0x780] sm:$0xff]
    %v2603 = vld [vmem:[#allocation11 + $0x788] sm:$0xff]
    %v2604 = vld [vmem:[#allocation11 + $0x790] sm:$0xff]
    %v2605 = vld [vmem:[#allocation11 + $0x798] sm:$0xff]
    %v2606 = vld [vmem:[#allocation11 + $0x7a0] sm:$0xff]
    %v2607 = vld [vmem:[#allocation11 + $0x7a8] sm:$0xff]
    %v2608 = vld [vmem:[#allocation11 + $0x7b0] sm:$0xff]
    %v2609 = vld [vmem:[#allocation11 + $0x7b8] sm:$0xff]
    %v2610 = vld [vmem:[#allocation11 + $0x7c0] sm:$0xff]
    %v2611 = vld [vmem:[#allocation11 + $0x7c8] sm:$0xff]
    %v2612 = vld [vmem:[#allocation11 + $0x7d0] sm:$0xff]
    %v2613 = vld [vmem:[#allocation11 + $0x7d8] sm:$0xff]
    %v2614 = vld [vmem:[#allocation11 + $0x7e0] sm:$0xff]
    %v2615 = vld [vmem:[#allocation11 + $0x7e8] sm:$0xff]
    %v2616 = vld [vmem:[#allocation11 + $0x7f0] sm:$0xff]
    %v2617 = vld [vmem:[#allocation11 + $0x7f8] sm:$0xff]
    %v2618 = vld [vmem:[#allocation11 + $0x800] sm:$0xff]
    %v2619 = vld [vmem:[#allocation11 + $0x808] sm:$0xff]
    %v2620 = vld [vmem:[#allocation11 + $0x810] sm:$0xff]
    %v2621 = vld [vmem:[#allocation11 + $0x818] sm:$0xff]
    %v2622 = vld [vmem:[#allocation11 + $0x820] sm:$0xff]
    %v2623 = vld [vmem:[#allocation11 + $0x828] sm:$0xff]
    %v2624 = vld [vmem:[#allocation11 + $0x830] sm:$0xff]
    %v2625 = vld [vmem:[#allocation11 + $0x838] sm:$0xff]
    %v2626 = vld [vmem:[#allocation11 + $0x840] sm:$0xff]
    %v2627 = vld [vmem:[#allocation11 + $0x848] sm:$0xff]
    %v2628 = vld [vmem:[#allocation11 + $0x850] sm:$0xff]
    %v2629 = vld [vmem:[#allocation11 + $0x858] sm:$0xff]
    %v2630 = vld [vmem:[#allocation11 + $0x860] sm:$0xff]
    %v2631 = vld [vmem:[#allocation11 + $0x868] sm:$0xff]
    %v2632 = vld [vmem:[#allocation11 + $0x870] sm:$0xff]
    %v2633 = vld [vmem:[#allocation11 + $0x878] sm:$0xff]
    %v2634 = vld [vmem:[#allocation11 + $0x880] sm:$0xff]
    %v2635 = vld [vmem:[#allocation11 + $0x888] sm:$0xff]
    %v2636 = vld [vmem:[#allocation11 + $0x890] sm:$0xff]
    %v2637 = vld [vmem:[#allocation11 + $0x898] sm:$0xff]
    %v2638 = vld [vmem:[#allocation11 + $0x8a0] sm:$0xff]
    %v2639 = vld [vmem:[#allocation11 + $0x8a8] sm:$0xff]
    %v2640 = vld [vmem:[#allocation11 + $0x8b0] sm:$0xff]
    %v2641 = vld [vmem:[#allocation11 + $0x8b8] sm:$0xff]
    %v2642 = vld [vmem:[#allocation11 + $0x8c0] sm:$0xff]
    %v2643 = vld [vmem:[#allocation11 + $0x8c8] sm:$0xff]
    %v2644 = vld [vmem:[#allocation11 + $0x8d0] sm:$0xff]
    %v2645 = vld [vmem:[#allocation11 + $0x8d8] sm:$0xff]
    %v2646 = vld [vmem:[#allocation11 + $0x8e0] sm:$0xff]
    %v2647 = vld [vmem:[#allocation11 + $0x8e8] sm:$0xff]
    %v2648 = vld [vmem:[#allocation11 + $0x8f0] sm:$0xff]
    %v2649 = vld [vmem:[#allocation11 + $0x8f8] sm:$0xff]
    %v2650 = vld [vmem:[#allocation11 + $0x900] sm:$0xff]
    %v2651 = vld [vmem:[#allocation11 + $0x908] sm:$0xff]
    %v2652 = vld [vmem:[#allocation11 + $0x910] sm:$0xff]
    %v2653 = vld [vmem:[#allocation11 + $0x918] sm:$0xff]
    %v2654 = vld [vmem:[#allocation11 + $0x920] sm:$0xff]
    %v2655 = vld [vmem:[#allocation11 + $0x928] sm:$0xff]
    %v2656 = vld [vmem:[#allocation11 + $0x930] sm:$0xff]
    %v2657 = vld [vmem:[#allocation11 + $0x938] sm:$0xff]
    %v2658 = vld [vmem:[#allocation11 + $0x940] sm:$0xff]
    %v2659 = vld [vmem:[#allocation11 + $0x948] sm:$0xff]
    %v2660 = vld [vmem:[#allocation11 + $0x950] sm:$0xff]
    %v2661 = vld [vmem:[#allocation11 + $0x958] sm:$0xff]
    %v2662 = vld [vmem:[#allocation11 + $0x960] sm:$0xff]
    %v2663 = vld [vmem:[#allocation11 + $0x968] sm:$0xff]
    %v2664 = vld [vmem:[#allocation11 + $0x970] sm:$0xff]
    %v2665 = vld [vmem:[#allocation11 + $0x978] sm:$0xff]
    %v2666 = vld [vmem:[#allocation11 + $0x980] sm:$0xff]
    %v2667 = vld [vmem:[#allocation11 + $0x988] sm:$0xff]
    %v2668 = vld [vmem:[#allocation11 + $0x990] sm:$0xff]
    %v2669 = vld [vmem:[#allocation11 + $0x998] sm:$0xff]
    %v2670 = vld [vmem:[#allocation11 + $0x9a0] sm:$0xff]
    %v2671 = vld [vmem:[#allocation11 + $0x9a8] sm:$0xff]
    %v2672 = vld [vmem:[#allocation11 + $0x9b0] sm:$0xff]
    %v2673 = vld [vmem:[#allocation11 + $0x9b8] sm:$0xff]
    %v2674 = vld [vmem:[#allocation11 + $0x9c0] sm:$0xff]
    %v2675 = vld [vmem:[#allocation11 + $0x9c8] sm:$0xff]
    %v2676 = vld [vmem:[#allocation11 + $0x9d0] sm:$0xff]
    %v2677 = vld [vmem:[#allocation11 + $0x9d8] sm:$0xff]
    %v2678 = vld [vmem:[#allocation11 + $0x9e0] sm:$0xff]
    %v2679 = vld [vmem:[#allocation11 + $0x9e8] sm:$0xff]
    %v2680 = vld [vmem:[#allocation11 + $0x9f0] sm:$0xff]
    %v2681 = vld [vmem:[#allocation11 + $0x9f8] sm:$0xff]
    %v2682 = vld [vmem:[#allocation11 + $0xa00] sm:$0xff]
    %v2683 = vld [vmem:[#allocation11 + $0xa08] sm:$0xff]
    %v2684 = vld [vmem:[#allocation11 + $0xa10] sm:$0xff]
    %v2685 = vld [vmem:[#allocation11 + $0xa18] sm:$0xff]
    %v2686 = vld [vmem:[#allocation11 + $0xa20] sm:$0xff]
    %v2687 = vld [vmem:[#allocation11 + $0xa28] sm:$0xff]
    %v2688 = vld [vmem:[#allocation11 + $0xa30] sm:$0xff]
    %v2689 = vld [vmem:[#allocation11 + $0xa38] sm:$0xff]
    %v2690 = vld [vmem:[#allocation11 + $0xa40] sm:$0xff]
    %v2691 = vld [vmem:[#allocation11 + $0xa48] sm:$0xff]
    %v2692 = vld [vmem:[#allocation11 + $0xa50] sm:$0xff]
    %v2693 = vld [vmem:[#allocation11 + $0xa58] sm:$0xff]
    %v2694 = vld [vmem:[#allocation11 + $0xa60] sm:$0xff]
    %v2695 = vld [vmem:[#allocation11 + $0xa68] sm:$0xff]
    %v2696 = vld [vmem:[#allocation11 + $0xa70] sm:$0xff]
    %v2697 = vld [vmem:[#allocation11 + $0xa78] sm:$0xff]
    %v2698 = vld [vmem:[#allocation11 + $0xa80] sm:$0xff]
    %v2699 = vld [vmem:[#allocation11 + $0xa88] sm:$0xff]
    %v2700 = vld [vmem:[#allocation11 + $0xa90] sm:$0xff]
    %v2701 = vld [vmem:[#allocation11 + $0xa98] sm:$0xff]
    %v2702 = vld [vmem:[#allocation11 + $0xaa0] sm:$0xff]
    %v2703 = vld [vmem:[#allocation11 + $0xaa8] sm:$0xff]
    %v2704 = vld [vmem:[#allocation11 + $0xab0] sm:$0xff]
    %v2705 = vld [vmem:[#allocation11 + $0xab8] sm:$0xff]
    %v2706 = vld [vmem:[#allocation11 + $0xac0] sm:$0xff]
    %v2707 = vld [vmem:[#allocation11 + $0xac8] sm:$0xff]
    %v2708 = vld [vmem:[#allocation11 + $0xad0] sm:$0xff]
    %v2709 = vld [vmem:[#allocation11 + $0xad8] sm:$0xff]
    %v2710 = vld [vmem:[#allocation11 + $0xae0] sm:$0xff]
    %v2711 = vld [vmem:[#allocation11 + $0xae8] sm:$0xff]
    %v2712 = vld [vmem:[#allocation11 + $0xaf0] sm:$0xff]
    %v2713 = vld [vmem:[#allocation11 + $0xaf8] sm:$0xff]
    %v2714 = vld [vmem:[#allocation11 + $0xb00] sm:$0xff]
    %v2715 = vld [vmem:[#allocation11 + $0xb08] sm:$0xff]
    %v2716 = vld [vmem:[#allocation11 + $0xb10] sm:$0xff]
    %v2717 = vld [vmem:[#allocation11 + $0xb18] sm:$0xff]
    %v2718 = vld [vmem:[#allocation11 + $0xb20] sm:$0xff]
    %v2719 = vld [vmem:[#allocation11 + $0xb28] sm:$0xff]
    %v2720 = vld [vmem:[#allocation11 + $0xb30] sm:$0xff]
    %v2721 = vld [vmem:[#allocation11 + $0xb38] sm:$0xff]
    %v2722 = vld [vmem:[#allocation11 + $0xb40] sm:$0xff]
    %v2723 = vld [vmem:[#allocation11 + $0xb48] sm:$0xff]
    %v2724 = vld [vmem:[#allocation11 + $0xb50] sm:$0xff]
    %v2725 = vld [vmem:[#allocation11 + $0xb58] sm:$0xff]
    %v2726 = vld [vmem:[#allocation11 + $0xb60] sm:$0xff]
    %v2727 = vld [vmem:[#allocation11 + $0xb68] sm:$0xff]
    %v2728 = vld [vmem:[#allocation11 + $0xb70] sm:$0xff]
    %v2729 = vld [vmem:[#allocation11 + $0xb78] sm:$0xff]
    %v2730 = vld [vmem:[#allocation11 + $0xb80] sm:$0xff]
    %v2731 = vld [vmem:[#allocation11 + $0xb88] sm:$0xff]
    %v2732 = vld [vmem:[#allocation11 + $0xb90] sm:$0xff]
    %v2733 = vld [vmem:[#allocation11 + $0xb98] sm:$0xff]
    %v2734 = vld [vmem:[#allocation11 + $0xba0] sm:$0xff]
    %v2735 = vld [vmem:[#allocation11 + $0xba8] sm:$0xff]
    %v2736 = vld [vmem:[#allocation11 + $0xbb0] sm:$0xff]
    %v2737 = vld [vmem:[#allocation11 + $0xbb8] sm:$0xff]
    %v2738 = vld [vmem:[#allocation11 + $0xbc0] sm:$0xff]
    %v2739 = vld [vmem:[#allocation11 + $0xbc8] sm:$0xff]
    %v2740 = vld [vmem:[#allocation11 + $0xbd0] sm:$0xff]
    %v2741 = vld [vmem:[#allocation11 + $0xbd8] sm:$0xff]
    %v2742 = vld [vmem:[#allocation11 + $0xbe0] sm:$0xff]
    %v2743 = vld [vmem:[#allocation11 + $0xbe8] sm:$0xff]
    %v2744 = vld [vmem:[#allocation11 + $0xbf0] sm:$0xff]
    %v2745 = vld [vmem:[#allocation11 + $0xbf8] sm:$0xff]
    %v2746 = vld [vmem:[#allocation11 + $0xc00] sm:$0xff]
    %v2747 = vld [vmem:[#allocation11 + $0xc08] sm:$0xff]
    %v2748 = vld [vmem:[#allocation11 + $0xc10] sm:$0xff]
    %v2749 = vld [vmem:[#allocation11 + $0xc18] sm:$0xff]
    %v2750 = vld [vmem:[#allocation11 + $0xc20] sm:$0xff]
    %v2751 = vld [vmem:[#allocation11 + $0xc28] sm:$0xff]
    %v2752 = vld [vmem:[#allocation11 + $0xc30] sm:$0xff]
    %v2753 = vld [vmem:[#allocation11 + $0xc38] sm:$0xff]
    %v2754 = vld [vmem:[#allocation11 + $0xc40] sm:$0xff]
    %v2755 = vld [vmem:[#allocation11 + $0xc48] sm:$0xff]
    %v2756 = vld [vmem:[#allocation11 + $0xc50] sm:$0xff]
    %v2757 = vld [vmem:[#allocation11 + $0xc58] sm:$0xff]
    %v2758 = vld [vmem:[#allocation11 + $0xc60] sm:$0xff]
    %v2759 = vld [vmem:[#allocation11 + $0xc68] sm:$0xff]
    %v2760 = vld [vmem:[#allocation11 + $0xc70] sm:$0xff]
    %v2761 = vld [vmem:[#allocation11 + $0xc78] sm:$0xff]
    %v2762 = vld [vmem:[#allocation11 + $0xc80] sm:$0xff]
    %v2763 = vld [vmem:[#allocation11 + $0xc88] sm:$0xff]
    %v2764 = vld [vmem:[#allocation11 + $0xc90] sm:$0xff]
    %v2765 = vld [vmem:[#allocation11 + $0xc98] sm:$0xff]
    %v2766 = vld [vmem:[#allocation11 + $0xca0] sm:$0xff]
    %v2767 = vld [vmem:[#allocation11 + $0xca8] sm:$0xff]
    %v2768 = vld [vmem:[#allocation11 + $0xcb0] sm:$0xff]
    %v2769 = vld [vmem:[#allocation11 + $0xcb8] sm:$0xff]
    %v2770 = vld [vmem:[#allocation11 + $0xcc0] sm:$0xff]
    %v2771 = vld [vmem:[#allocation11 + $0xcc8] sm:$0xff]
    %v2772 = vld [vmem:[#allocation11 + $0xcd0] sm:$0xff]
    %v2773 = vld [vmem:[#allocation11 + $0xcd8] sm:$0xff]
    %v2774 = vld [vmem:[#allocation11 + $0xce0] sm:$0xff]
    %v2775 = vld [vmem:[#allocation11 + $0xce8] sm:$0xff]
    %v2776 = vld [vmem:[#allocation11 + $0xcf0] sm:$0xff]
    %v2777 = vld [vmem:[#allocation11 + $0xcf8] sm:$0xff]
    %v2778 = vld [vmem:[#allocation11 + $0xd00] sm:$0xff]
    %v2779 = vld [vmem:[#allocation11 + $0xd08] sm:$0xff]
    %v2780 = vld [vmem:[#allocation11 + $0xd10] sm:$0xff]
    %v2781 = vld [vmem:[#allocation11 + $0xd18] sm:$0xff]
    %v2782 = vld [vmem:[#allocation11 + $0xd20] sm:$0xff]
    %v2783 = vld [vmem:[#allocation11 + $0xd28] sm:$0xff]
    %v2784 = vld [vmem:[#allocation11 + $0xd30] sm:$0xff]
    %v2785 = vld [vmem:[#allocation11 + $0xd38] sm:$0xff]
    %v2786 = vld [vmem:[#allocation11 + $0xd40] sm:$0xff]
    %v2787 = vld [vmem:[#allocation11 + $0xd48] sm:$0xff]
    %v2788 = vld [vmem:[#allocation11 + $0xd50] sm:$0xff]
    %v2789 = vld [vmem:[#allocation11 + $0xd58] sm:$0xff]
    %v2790 = vld [vmem:[#allocation11 + $0xd60] sm:$0xff]
    %v2791 = vld [vmem:[#allocation11 + $0xd68] sm:$0xff]
    %v2792 = vld [vmem:[#allocation11 + $0xd70] sm:$0xff]
    %v2793 = vld [vmem:[#allocation11 + $0xd78] sm:$0xff]
    %v2794 = vld [vmem:[#allocation11 + $0xd80] sm:$0xff]
    %v2795 = vld [vmem:[#allocation11 + $0xd88] sm:$0xff]
    %v2796 = vld [vmem:[#allocation11 + $0xd90] sm:$0xff]
    %v2797 = vld [vmem:[#allocation11 + $0xd98] sm:$0xff]
    %v2798 = vld [vmem:[#allocation11 + $0xda0] sm:$0xff]
    %v2799 = vld [vmem:[#allocation11 + $0xda8] sm:$0xff]
    %v2800 = vld [vmem:[#allocation11 + $0xdb0] sm:$0xff]
    %v2801 = vld [vmem:[#allocation11 + $0xdb8] sm:$0xff]
    %v2802 = vld [vmem:[#allocation11 + $0xdc0] sm:$0xff]
    %v2803 = vld [vmem:[#allocation11 + $0xdc8] sm:$0xff]
    %v2804 = vld [vmem:[#allocation11 + $0xdd0] sm:$0xff]
    %v2805 = vld [vmem:[#allocation11 + $0xdd8] sm:$0xff]
    %v2806 = vld [vmem:[#allocation11 + $0xde0] sm:$0xff]
    %v2807 = vld [vmem:[#allocation11 + $0xde8] sm:$0xff]
    %v2808 = vld [vmem:[#allocation11 + $0xdf0] sm:$0xff]
    %v2809 = vld [vmem:[#allocation11 + $0xdf8] sm:$0xff]
    %v2810 = vld [vmem:[#allocation11 + $0xe00] sm:$0xff]
    %v2811 = vld [vmem:[#allocation11 + $0xe08] sm:$0xff]
    %v2812 = vld [vmem:[#allocation11 + $0xe10] sm:$0xff]
    %v2813 = vld [vmem:[#allocation11 + $0xe18] sm:$0xff]
    %v2814 = vld [vmem:[#allocation11 + $0xe20] sm:$0xff]
    %v2815 = vld [vmem:[#allocation11 + $0xe28] sm:$0xff]
    %v2816 = vld [vmem:[#allocation11 + $0xe30] sm:$0xff]
    %v2817 = vld [vmem:[#allocation11 + $0xe38] sm:$0xff]
    %v2818 = vld [vmem:[#allocation11 + $0xe40] sm:$0xff]
    %v2819 = vld [vmem:[#allocation11 + $0xe48] sm:$0xff]
    %v2820 = vld [vmem:[#allocation11 + $0xe50] sm:$0xff]
    %v2821 = vld [vmem:[#allocation11 + $0xe58] sm:$0xff]
    %v2822 = vld [vmem:[#allocation11 + $0xe60] sm:$0xff]
    %v2823 = vld [vmem:[#allocation11 + $0xe68] sm:$0xff]
    %v2824 = vld [vmem:[#allocation11 + $0xe70] sm:$0xff]
    %v2825 = vld [vmem:[#allocation11 + $0xe78] sm:$0xff]
    %v2826 = vld [vmem:[#allocation11 + $0xe80] sm:$0xff]
    %v2827 = vld [vmem:[#allocation11 + $0xe88] sm:$0xff]
    %v2828 = vld [vmem:[#allocation11 + $0xe90] sm:$0xff]
    %v2829 = vld [vmem:[#allocation11 + $0xe98] sm:$0xff]
    %v2830 = vld [vmem:[#allocation11 + $0xea0] sm:$0xff]
    %v2831 = vld [vmem:[#allocation11 + $0xea8] sm:$0xff]
    %v2832 = vld [vmem:[#allocation11 + $0xeb0] sm:$0xff]
    %v2833 = vld [vmem:[#allocation11 + $0xeb8] sm:$0xff]
    %v2834 = vld [vmem:[#allocation11 + $0xec0] sm:$0xff]
    %v2835 = vld [vmem:[#allocation11 + $0xec8] sm:$0xff]
    %v2836 = vld [vmem:[#allocation11 + $0xed0] sm:$0xff]
    %v2837 = vld [vmem:[#allocation11 + $0xed8] sm:$0xff]
    %v2838 = vld [vmem:[#allocation11 + $0xee0] sm:$0xff]
    %v2839 = vld [vmem:[#allocation11 + $0xee8] sm:$0xff]
    %v2840 = vld [vmem:[#allocation11 + $0xef0] sm:$0xff]
    %v2841 = vld [vmem:[#allocation11 + $0xef8] sm:$0xff]
    %v2842 = vld [vmem:[#allocation11 + $0xf00] sm:$0xff]
    %v2843 = vld [vmem:[#allocation11 + $0xf08] sm:$0xff]
    %v2844 = vld [vmem:[#allocation11 + $0xf10] sm:$0xff]
    %v2845 = vld [vmem:[#allocation11 + $0xf18] sm:$0xff]
    %v2846 = vld [vmem:[#allocation11 + $0xf20] sm:$0xff]
    %v2847 = vld [vmem:[#allocation11 + $0xf28] sm:$0xff]
    %v2848 = vld [vmem:[#allocation11 + $0xf30] sm:$0xff]
    %v2849 = vld [vmem:[#allocation11 + $0xf38] sm:$0xff]
    %v2850 = vld [vmem:[#allocation11 + $0xf40] sm:$0xff]
    %v2851 = vld [vmem:[#allocation11 + $0xf48] sm:$0xff]
    %v2852 = vld [vmem:[#allocation11 + $0xf50] sm:$0xff]
    %v2853 = vld [vmem:[#allocation11 + $0xf58] sm:$0xff]
    %v2854 = vld [vmem:[#allocation11 + $0xf60] sm:$0xff]
    %v2855 = vld [vmem:[#allocation11 + $0xf68] sm:$0xff]
    %v2856 = vld [vmem:[#allocation11 + $0xf70] sm:$0xff]
    %v2857 = vld [vmem:[#allocation11 + $0xf78] sm:$0xff]
    %v2858 = vld [vmem:[#allocation11 + $0xf80] sm:$0xff]
    %v2859 = vld [vmem:[#allocation11 + $0xf88] sm:$0xff]
    %v2860 = vld [vmem:[#allocation11 + $0xf90] sm:$0xff]
    %v2861 = vld [vmem:[#allocation11 + $0xf98] sm:$0xff]
    %v2862 = vld [vmem:[#allocation11 + $0xfa0] sm:$0xff]
    %v2863 = vld [vmem:[#allocation11 + $0xfa8] sm:$0xff]
    %v2864 = vld [vmem:[#allocation11 + $0xfb0] sm:$0xff]
    %v2865 = vld [vmem:[#allocation11 + $0xfb8] sm:$0xff]
    %v2866 = vld [vmem:[#allocation11 + $0xfc0] sm:$0xff]
    %v2867 = vld [vmem:[#allocation11 + $0xfc8] sm:$0xff]
    %v2868 = vld [vmem:[#allocation11 + $0xfd0] sm:$0xff]
    %v2869 = vld [vmem:[#allocation11 + $0xfd8] sm:$0xff]
    %v2870 = vld [vmem:[#allocation11 + $0xfe0] sm:$0xff]
    %v2871 = vld [vmem:[#allocation11 + $0xfe8] sm:$0xff]
    %v2872 = vld [vmem:[#allocation11 + $0xff0] sm:$0xff]
    %v2873 = vld [vmem:[#allocation11 + $0xff8] sm:$0xff]
    %v2874 = vld [vmem:[#allocation13] sm:$0xff]
    %v2876 = vlaneseq
    %v2877 = vshrl.u32 %v2876, 7
    %v2878 = vsub.s32 0, %v2877
    %v2879 = vrot.slane %v2874, %v2878
    %v2880 = vlaneseq
    %v2881 = vshrl.u32 %v2880, 7
    %v2882 = vsub.s32 1, %v2881
    %v2883 = vrot.slane %v2874, %v2882
    %v2884 = vlaneseq
    %v2885 = vshrl.u32 %v2884, 7
    %v2886 = vsub.s32 2, %v2885
    %v2887 = vrot.slane %v2874, %v2886
    %v2888 = vlaneseq
    %v2889 = vshrl.u32 %v2888, 7
    %v2890 = vsub.s32 3, %v2889
    %v2891 = vrot.slane %v2874, %v2890
    %v2892 = vlaneseq
    %v2893 = vshrl.u32 %v2892, 7
    %v2894 = vsub.s32 4, %v2893
    %v2895 = vrot.slane %v2874, %v2894
    %v2896 = vlaneseq
    %v2897 = vshrl.u32 %v2896, 7
    %v2898 = vsub.s32 5, %v2897
    %v2899 = vrot.slane %v2874, %v2898
    %v2900 = vlaneseq
    %v2901 = vshrl.u32 %v2900, 7
    %v2902 = vsub.s32 6, %v2901
    %v2903 = vrot.slane %v2874, %v2902
    %v2904 = vlaneseq
    %v2905 = vshrl.u32 %v2904, 7
    %v2906 = vsub.s32 7, %v2905
    %v2907 = vrot.slane %v2874, %v2906
    %v3428 = vunpack.c.l.b16 %v2362
    %v3429 = vunpack.c.h.b16 %v2362
    %v3430 = vunpack.c.l.b16 %v2363
    %v3431 = vunpack.c.h.b16 %v2363
    %v3432 = vunpack.c.l.b16 %v2364
    %v3433 = vunpack.c.h.b16 %v2364
    %v3434 = vunpack.c.l.b16 %v2365
    %v3435 = vunpack.c.h.b16 %v2365
    %v3436 = vunpack.c.l.b16 %v2366
    %v3437 = vunpack.c.h.b16 %v2366
    %v3438 = vunpack.c.l.b16 %v2367
    %v3439 = vunpack.c.h.b16 %v2367
    %v3440 = vunpack.c.l.b16 %v2368
    %v3441 = vunpack.c.h.b16 %v2368
    %v3442 = vunpack.c.l.b16 %v2369
    %v3443 = vunpack.c.h.b16 %v2369
    %v3444 = vunpack.c.l.b16 %v2370
    %v3445 = vunpack.c.h.b16 %v2370
    %v3446 = vunpack.c.l.b16 %v2371
    %v3447 = vunpack.c.h.b16 %v2371
    %v3448 = vunpack.c.l.b16 %v2372
    %v3449 = vunpack.c.h.b16 %v2372
    %v3450 = vunpack.c.l.b16 %v2373
    %v3451 = vunpack.c.h.b16 %v2373
    %v3452 = vunpack.c.l.b16 %v2374
    %v3453 = vunpack.c.h.b16 %v2374
    %v3454 = vunpack.c.l.b16 %v2375
    %v3455 = vunpack.c.h.b16 %v2375
    %v3456 = vunpack.c.l.b16 %v2376
    %v3457 = vunpack.c.h.b16 %v2376
    %v3458 = vunpack.c.l.b16 %v2377
    %v3459 = vunpack.c.h.b16 %v2377
    %v3460 = vunpack.c.l.b16 %v2378
    %v3461 = vunpack.c.h.b16 %v2378
    %v3462 = vunpack.c.l.b16 %v2379
    %v3463 = vunpack.c.h.b16 %v2379
    %v3464 = vunpack.c.l.b16 %v2380
    %v3465 = vunpack.c.h.b16 %v2380
    %v3466 = vunpack.c.l.b16 %v2381
    %v3467 = vunpack.c.h.b16 %v2381
    %v3468 = vunpack.c.l.b16 %v2382
    %v3469 = vunpack.c.h.b16 %v2382
    %v3470 = vunpack.c.l.b16 %v2383
    %v3471 = vunpack.c.h.b16 %v2383
    %v3472 = vunpack.c.l.b16 %v2384
    %v3473 = vunpack.c.h.b16 %v2384
    %v3474 = vunpack.c.l.b16 %v2385
    %v3475 = vunpack.c.h.b16 %v2385
    %v3476 = vunpack.c.l.b16 %v2386
    %v3477 = vunpack.c.h.b16 %v2386
    %v3478 = vunpack.c.l.b16 %v2387
    %v3479 = vunpack.c.h.b16 %v2387
    %v3480 = vunpack.c.l.b16 %v2388
    %v3481 = vunpack.c.h.b16 %v2388
    %v3482 = vunpack.c.l.b16 %v2389
    %v3483 = vunpack.c.h.b16 %v2389
    %v3484 = vunpack.c.l.b16 %v2390
    %v3485 = vunpack.c.h.b16 %v2390
    %v3486 = vunpack.c.l.b16 %v2391
    %v3487 = vunpack.c.h.b16 %v2391
    %v3488 = vunpack.c.l.b16 %v2392
    %v3489 = vunpack.c.h.b16 %v2392
    %v3490 = vunpack.c.l.b16 %v2393
    %v3491 = vunpack.c.h.b16 %v2393
    %v3492 = vunpack.c.l.b16 %v2394
    %v3493 = vunpack.c.h.b16 %v2394
    %v3494 = vunpack.c.l.b16 %v2395
    %v3495 = vunpack.c.h.b16 %v2395
    %v3496 = vunpack.c.l.b16 %v2396
    %v3497 = vunpack.c.h.b16 %v2396
    %v3498 = vunpack.c.l.b16 %v2397
    %v3499 = vunpack.c.h.b16 %v2397
    %v3500 = vunpack.c.l.b16 %v2398
    %v3501 = vunpack.c.h.b16 %v2398
    %v3502 = vunpack.c.l.b16 %v2399
    %v3503 = vunpack.c.h.b16 %v2399
    %v3504 = vunpack.c.l.b16 %v2400
    %v3505 = vunpack.c.h.b16 %v2400
    %v3506 = vunpack.c.l.b16 %v2401
    %v3507 = vunpack.c.h.b16 %v2401
    %v3508 = vunpack.c.l.b16 %v2402
    %v3509 = vunpack.c.h.b16 %v2402
    %v3510 = vunpack.c.l.b16 %v2403
    %v3511 = vunpack.c.h.b16 %v2403
    %v3512 = vunpack.c.l.b16 %v2404
    %v3513 = vunpack.c.h.b16 %v2404
    %v3514 = vunpack.c.l.b16 %v2405
    %v3515 = vunpack.c.h.b16 %v2405
    %v3516 = vunpack.c.l.b16 %v2406
    %v3517 = vunpack.c.h.b16 %v2406
    %v3518 = vunpack.c.l.b16 %v2407
    %v3519 = vunpack.c.h.b16 %v2407
    %v3520 = vunpack.c.l.b16 %v2408
    %v3521 = vunpack.c.h.b16 %v2408
    %v3522 = vunpack.c.l.b16 %v2409
    %v3523 = vunpack.c.h.b16 %v2409
    %v3524 = vunpack.c.l.b16 %v2410
    %v3525 = vunpack.c.h.b16 %v2410
    %v3526 = vunpack.c.l.b16 %v2411
    %v3527 = vunpack.c.h.b16 %v2411
    %v3528 = vunpack.c.l.b16 %v2412
    %v3529 = vunpack.c.h.b16 %v2412
    %v3530 = vunpack.c.l.b16 %v2413
    %v3531 = vunpack.c.h.b16 %v2413
    %v3532 = vunpack.c.l.b16 %v2414
    %v3533 = vunpack.c.h.b16 %v2414
    %v3534 = vunpack.c.l.b16 %v2415
    %v3535 = vunpack.c.h.b16 %v2415
    %v3536 = vunpack.c.l.b16 %v2416
    %v3537 = vunpack.c.h.b16 %v2416
    %v3538 = vunpack.c.l.b16 %v2417
    %v3539 = vunpack.c.h.b16 %v2417
    %v3540 = vunpack.c.l.b16 %v2418
    %v3541 = vunpack.c.h.b16 %v2418
    %v3542 = vunpack.c.l.b16 %v2419
    %v3543 = vunpack.c.h.b16 %v2419
    %v3544 = vunpack.c.l.b16 %v2420
    %v3545 = vunpack.c.h.b16 %v2420
    %v3546 = vunpack.c.l.b16 %v2421
    %v3547 = vunpack.c.h.b16 %v2421
    %v3548 = vunpack.c.l.b16 %v2422
    %v3549 = vunpack.c.h.b16 %v2422
    %v3550 = vunpack.c.l.b16 %v2423
    %v3551 = vunpack.c.h.b16 %v2423
    %v3552 = vunpack.c.l.b16 %v2424
    %v3553 = vunpack.c.h.b16 %v2424
    %v3554 = vunpack.c.l.b16 %v2425
    %v3555 = vunpack.c.h.b16 %v2425
    %v3556 = vunpack.c.l.b16 %v2426
    %v3557 = vunpack.c.h.b16 %v2426
    %v3558 = vunpack.c.l.b16 %v2427
    %v3559 = vunpack.c.h.b16 %v2427
    %v3560 = vunpack.c.l.b16 %v2428
    %v3561 = vunpack.c.h.b16 %v2428
    %v3562 = vunpack.c.l.b16 %v2429
    %v3563 = vunpack.c.h.b16 %v2429
    %v3564 = vunpack.c.l.b16 %v2430
    %v3565 = vunpack.c.h.b16 %v2430
    %v3566 = vunpack.c.l.b16 %v2431
    %v3567 = vunpack.c.h.b16 %v2431
    %v3568 = vunpack.c.l.b16 %v2432
    %v3569 = vunpack.c.h.b16 %v2432
    %v3570 = vunpack.c.l.b16 %v2433
    %v3571 = vunpack.c.h.b16 %v2433
    %v3572 = vunpack.c.l.b16 %v2434
    %v3573 = vunpack.c.h.b16 %v2434
    %v3574 = vunpack.c.l.b16 %v2435
    %v3575 = vunpack.c.h.b16 %v2435
    %v3576 = vunpack.c.l.b16 %v2436
    %v3577 = vunpack.c.h.b16 %v2436
    %v3578 = vunpack.c.l.b16 %v2437
    %v3579 = vunpack.c.h.b16 %v2437
    %v3580 = vunpack.c.l.b16 %v2438
    %v3581 = vunpack.c.h.b16 %v2438
    %v3582 = vunpack.c.l.b16 %v2439
    %v3583 = vunpack.c.h.b16 %v2439
    %v3584 = vunpack.c.l.b16 %v2440
    %v3585 = vunpack.c.h.b16 %v2440
    %v3586 = vunpack.c.l.b16 %v2441
    %v3587 = vunpack.c.h.b16 %v2441
    %v3588 = vunpack.c.l.b16 %v2442
    %v3589 = vunpack.c.h.b16 %v2442
    %v3590 = vunpack.c.l.b16 %v2443
    %v3591 = vunpack.c.h.b16 %v2443
    %v3592 = vunpack.c.l.b16 %v2444
    %v3593 = vunpack.c.h.b16 %v2444
    %v3594 = vunpack.c.l.b16 %v2445
    %v3595 = vunpack.c.h.b16 %v2445
    %v3596 = vunpack.c.l.b16 %v2446
    %v3597 = vunpack.c.h.b16 %v2446
    %v3598 = vunpack.c.l.b16 %v2447
    %v3599 = vunpack.c.h.b16 %v2447
    %v3600 = vunpack.c.l.b16 %v2448
    %v3601 = vunpack.c.h.b16 %v2448
    %v3602 = vunpack.c.l.b16 %v2449
    %v3603 = vunpack.c.h.b16 %v2449
    %v3604 = vunpack.c.l.b16 %v2450
    %v3605 = vunpack.c.h.b16 %v2450
    %v3606 = vunpack.c.l.b16 %v2451
    %v3607 = vunpack.c.h.b16 %v2451
    %v3608 = vunpack.c.l.b16 %v2452
    %v3609 = vunpack.c.h.b16 %v2452
    %v3610 = vunpack.c.l.b16 %v2453
    %v3611 = vunpack.c.h.b16 %v2453
    %v3612 = vunpack.c.l.b16 %v2454
    %v3613 = vunpack.c.h.b16 %v2454
    %v3614 = vunpack.c.l.b16 %v2455
    %v3615 = vunpack.c.h.b16 %v2455
    %v3616 = vunpack.c.l.b16 %v2456
    %v3617 = vunpack.c.h.b16 %v2456
    %v3618 = vunpack.c.l.b16 %v2457
    %v3619 = vunpack.c.h.b16 %v2457
    %v3620 = vunpack.c.l.b16 %v2458
    %v3621 = vunpack.c.h.b16 %v2458
    %v3622 = vunpack.c.l.b16 %v2459
    %v3623 = vunpack.c.h.b16 %v2459
    %v3624 = vunpack.c.l.b16 %v2460
    %v3625 = vunpack.c.h.b16 %v2460
    %v3626 = vunpack.c.l.b16 %v2461
    %v3627 = vunpack.c.h.b16 %v2461
    %v3628 = vunpack.c.l.b16 %v2462
    %v3629 = vunpack.c.h.b16 %v2462
    %v3630 = vunpack.c.l.b16 %v2463
    %v3631 = vunpack.c.h.b16 %v2463
    %v3632 = vunpack.c.l.b16 %v2464
    %v3633 = vunpack.c.h.b16 %v2464
    %v3634 = vunpack.c.l.b16 %v2465
    %v3635 = vunpack.c.h.b16 %v2465
    %v3636 = vunpack.c.l.b16 %v2466
    %v3637 = vunpack.c.h.b16 %v2466
    %v3638 = vunpack.c.l.b16 %v2467
    %v3639 = vunpack.c.h.b16 %v2467
    %v3640 = vunpack.c.l.b16 %v2468
    %v3641 = vunpack.c.h.b16 %v2468
    %v3642 = vunpack.c.l.b16 %v2469
    %v3643 = vunpack.c.h.b16 %v2469
    %v3644 = vunpack.c.l.b16 %v2470
    %v3645 = vunpack.c.h.b16 %v2470
    %v3646 = vunpack.c.l.b16 %v2471
    %v3647 = vunpack.c.h.b16 %v2471
    %v3648 = vunpack.c.l.b16 %v2472
    %v3649 = vunpack.c.h.b16 %v2472
    %v3650 = vunpack.c.l.b16 %v2473
    %v3651 = vunpack.c.h.b16 %v2473
    %v3652 = vunpack.c.l.b16 %v2474
    %v3653 = vunpack.c.h.b16 %v2474
    %v3654 = vunpack.c.l.b16 %v2475
    %v3655 = vunpack.c.h.b16 %v2475
    %v3656 = vunpack.c.l.b16 %v2476
    %v3657 = vunpack.c.h.b16 %v2476
    %v3658 = vunpack.c.l.b16 %v2477
    %v3659 = vunpack.c.h.b16 %v2477
    %v3660 = vunpack.c.l.b16 %v2478
    %v3661 = vunpack.c.h.b16 %v2478
    %v3662 = vunpack.c.l.b16 %v2479
    %v3663 = vunpack.c.h.b16 %v2479
    %v3664 = vunpack.c.l.b16 %v2480
    %v3665 = vunpack.c.h.b16 %v2480
    %v3666 = vunpack.c.l.b16 %v2481
    %v3667 = vunpack.c.h.b16 %v2481
    %v3668 = vunpack.c.l.b16 %v2482
    %v3669 = vunpack.c.h.b16 %v2482
    %v3670 = vunpack.c.l.b16 %v2483
    %v3671 = vunpack.c.h.b16 %v2483
    %v3672 = vunpack.c.l.b16 %v2484
    %v3673 = vunpack.c.h.b16 %v2484
    %v3674 = vunpack.c.l.b16 %v2485
    %v3675 = vunpack.c.h.b16 %v2485
    %v3676 = vunpack.c.l.b16 %v2486
    %v3677 = vunpack.c.h.b16 %v2486
    %v3678 = vunpack.c.l.b16 %v2487
    %v3679 = vunpack.c.h.b16 %v2487
    %v3680 = vunpack.c.l.b16 %v2488
    %v3681 = vunpack.c.h.b16 %v2488
    %v3682 = vunpack.c.l.b16 %v2489
    %v3683 = vunpack.c.h.b16 %v2489
    %v3684 = vunpack.c.l.b16 %v2490
    %v3685 = vunpack.c.h.b16 %v2490
    %v3686 = vunpack.c.l.b16 %v2491
    %v3687 = vunpack.c.h.b16 %v2491
    %v3688 = vunpack.c.l.b16 %v2492
    %v3689 = vunpack.c.h.b16 %v2492
    %v3690 = vunpack.c.l.b16 %v2493
    %v3691 = vunpack.c.h.b16 %v2493
    %v3692 = vunpack.c.l.b16 %v2494
    %v3693 = vunpack.c.h.b16 %v2494
    %v3694 = vunpack.c.l.b16 %v2495
    %v3695 = vunpack.c.h.b16 %v2495
    %v3696 = vunpack.c.l.b16 %v2496
    %v3697 = vunpack.c.h.b16 %v2496
    %v3698 = vunpack.c.l.b16 %v2497
    %v3699 = vunpack.c.h.b16 %v2497
    %v3700 = vunpack.c.l.b16 %v2498
    %v3701 = vunpack.c.h.b16 %v2498
    %v3702 = vunpack.c.l.b16 %v2499
    %v3703 = vunpack.c.h.b16 %v2499
    %v3704 = vunpack.c.l.b16 %v2500
    %v3705 = vunpack.c.h.b16 %v2500
    %v3706 = vunpack.c.l.b16 %v2501
    %v3707 = vunpack.c.h.b16 %v2501
    %v3708 = vunpack.c.l.b16 %v2502
    %v3709 = vunpack.c.h.b16 %v2502
    %v3710 = vunpack.c.l.b16 %v2503
    %v3711 = vunpack.c.h.b16 %v2503
    %v3712 = vunpack.c.l.b16 %v2504
    %v3713 = vunpack.c.h.b16 %v2504
    %v3714 = vunpack.c.l.b16 %v2505
    %v3715 = vunpack.c.h.b16 %v2505
    %v3716 = vunpack.c.l.b16 %v2506
    %v3717 = vunpack.c.h.b16 %v2506
    %v3718 = vunpack.c.l.b16 %v2507
    %v3719 = vunpack.c.h.b16 %v2507
    %v3720 = vunpack.c.l.b16 %v2508
    %v3721 = vunpack.c.h.b16 %v2508
    %v3722 = vunpack.c.l.b16 %v2509
    %v3723 = vunpack.c.h.b16 %v2509
    %v3724 = vunpack.c.l.b16 %v2510
    %v3725 = vunpack.c.h.b16 %v2510
    %v3726 = vunpack.c.l.b16 %v2511
    %v3727 = vunpack.c.h.b16 %v2511
    %v3728 = vunpack.c.l.b16 %v2512
    %v3729 = vunpack.c.h.b16 %v2512
    %v3730 = vunpack.c.l.b16 %v2513
    %v3731 = vunpack.c.h.b16 %v2513
    %v3732 = vunpack.c.l.b16 %v2514
    %v3733 = vunpack.c.h.b16 %v2514
    %v3734 = vunpack.c.l.b16 %v2515
    %v3735 = vunpack.c.h.b16 %v2515
    %v3736 = vunpack.c.l.b16 %v2516
    %v3737 = vunpack.c.h.b16 %v2516
    %v3738 = vunpack.c.l.b16 %v2517
    %v3739 = vunpack.c.h.b16 %v2517
    %v3740 = vunpack.c.l.b16 %v2518
    %v3741 = vunpack.c.h.b16 %v2518
    %v3742 = vunpack.c.l.b16 %v2519
    %v3743 = vunpack.c.h.b16 %v2519
    %v3744 = vunpack.c.l.b16 %v2520
    %v3745 = vunpack.c.h.b16 %v2520
    %v3746 = vunpack.c.l.b16 %v2521
    %v3747 = vunpack.c.h.b16 %v2521
    %v3748 = vunpack.c.l.b16 %v2522
    %v3749 = vunpack.c.h.b16 %v2522
    %v3750 = vunpack.c.l.b16 %v2523
    %v3751 = vunpack.c.h.b16 %v2523
    %v3752 = vunpack.c.l.b16 %v2524
    %v3753 = vunpack.c.h.b16 %v2524
    %v3754 = vunpack.c.l.b16 %v2525
    %v3755 = vunpack.c.h.b16 %v2525
    %v3756 = vunpack.c.l.b16 %v2526
    %v3757 = vunpack.c.h.b16 %v2526
    %v3758 = vunpack.c.l.b16 %v2527
    %v3759 = vunpack.c.h.b16 %v2527
    %v3760 = vunpack.c.l.b16 %v2528
    %v3761 = vunpack.c.h.b16 %v2528
    %v3762 = vunpack.c.l.b16 %v2529
    %v3763 = vunpack.c.h.b16 %v2529
    %v3764 = vunpack.c.l.b16 %v2530
    %v3765 = vunpack.c.h.b16 %v2530
    %v3766 = vunpack.c.l.b16 %v2531
    %v3767 = vunpack.c.h.b16 %v2531
    %v3768 = vunpack.c.l.b16 %v2532
    %v3769 = vunpack.c.h.b16 %v2532
    %v3770 = vunpack.c.l.b16 %v2533
    %v3771 = vunpack.c.h.b16 %v2533
    %v3772 = vunpack.c.l.b16 %v2534
    %v3773 = vunpack.c.h.b16 %v2534
    %v3774 = vunpack.c.l.b16 %v2535
    %v3775 = vunpack.c.h.b16 %v2535
    %v3776 = vunpack.c.l.b16 %v2536
    %v3777 = vunpack.c.h.b16 %v2536
    %v3778 = vunpack.c.l.b16 %v2537
    %v3779 = vunpack.c.h.b16 %v2537
    %v3780 = vunpack.c.l.b16 %v2538
    %v3781 = vunpack.c.h.b16 %v2538
    %v3782 = vunpack.c.l.b16 %v2539
    %v3783 = vunpack.c.h.b16 %v2539
    %v3784 = vunpack.c.l.b16 %v2540
    %v3785 = vunpack.c.h.b16 %v2540
    %v3786 = vunpack.c.l.b16 %v2541
    %v3787 = vunpack.c.h.b16 %v2541
    %v3788 = vunpack.c.l.b16 %v2542
    %v3789 = vunpack.c.h.b16 %v2542
    %v3790 = vunpack.c.l.b16 %v2543
    %v3791 = vunpack.c.h.b16 %v2543
    %v3792 = vunpack.c.l.b16 %v2544
    %v3793 = vunpack.c.h.b16 %v2544
    %v3794 = vunpack.c.l.b16 %v2545
    %v3795 = vunpack.c.h.b16 %v2545
    %v3796 = vunpack.c.l.b16 %v2546
    %v3797 = vunpack.c.h.b16 %v2546
    %v3798 = vunpack.c.l.b16 %v2547
    %v3799 = vunpack.c.h.b16 %v2547
    %v3800 = vunpack.c.l.b16 %v2548
    %v3801 = vunpack.c.h.b16 %v2548
    %v3802 = vunpack.c.l.b16 %v2549
    %v3803 = vunpack.c.h.b16 %v2549
    %v3804 = vunpack.c.l.b16 %v2550
    %v3805 = vunpack.c.h.b16 %v2550
    %v3806 = vunpack.c.l.b16 %v2551
    %v3807 = vunpack.c.h.b16 %v2551
    %v3808 = vunpack.c.l.b16 %v2552
    %v3809 = vunpack.c.h.b16 %v2552
    %v3810 = vunpack.c.l.b16 %v2553
    %v3811 = vunpack.c.h.b16 %v2553
    %v3812 = vunpack.c.l.b16 %v2554
    %v3813 = vunpack.c.h.b16 %v2554
    %v3814 = vunpack.c.l.b16 %v2555
    %v3815 = vunpack.c.h.b16 %v2555
    %v3816 = vunpack.c.l.b16 %v2556
    %v3817 = vunpack.c.h.b16 %v2556
    %v3818 = vunpack.c.l.b16 %v2557
    %v3819 = vunpack.c.h.b16 %v2557
    %v3820 = vunpack.c.l.b16 %v2558
    %v3821 = vunpack.c.h.b16 %v2558
    %v3822 = vunpack.c.l.b16 %v2559
    %v3823 = vunpack.c.h.b16 %v2559
    %v3824 = vunpack.c.l.b16 %v2560
    %v3825 = vunpack.c.h.b16 %v2560
    %v3826 = vunpack.c.l.b16 %v2561
    %v3827 = vunpack.c.h.b16 %v2561
    %v3828 = vunpack.c.l.b16 %v2562
    %v3829 = vunpack.c.h.b16 %v2562
    %v3830 = vunpack.c.l.b16 %v2563
    %v3831 = vunpack.c.h.b16 %v2563
    %v3832 = vunpack.c.l.b16 %v2564
    %v3833 = vunpack.c.h.b16 %v2564
    %v3834 = vunpack.c.l.b16 %v2565
    %v3835 = vunpack.c.h.b16 %v2565
    %v3836 = vunpack.c.l.b16 %v2566
    %v3837 = vunpack.c.h.b16 %v2566
    %v3838 = vunpack.c.l.b16 %v2567
    %v3839 = vunpack.c.h.b16 %v2567
    %v3840 = vunpack.c.l.b16 %v2568
    %v3841 = vunpack.c.h.b16 %v2568
    %v3842 = vunpack.c.l.b16 %v2569
    %v3843 = vunpack.c.h.b16 %v2569
    %v3844 = vunpack.c.l.b16 %v2570
    %v3845 = vunpack.c.h.b16 %v2570
    %v3846 = vunpack.c.l.b16 %v2571
    %v3847 = vunpack.c.h.b16 %v2571
    %v3848 = vunpack.c.l.b16 %v2572
    %v3849 = vunpack.c.h.b16 %v2572
    %v3850 = vunpack.c.l.b16 %v2573
    %v3851 = vunpack.c.h.b16 %v2573
    %v3852 = vunpack.c.l.b16 %v2574
    %v3853 = vunpack.c.h.b16 %v2574
    %v3854 = vunpack.c.l.b16 %v2575
    %v3855 = vunpack.c.h.b16 %v2575
    %v3856 = vunpack.c.l.b16 %v2576
    %v3857 = vunpack.c.h.b16 %v2576
    %v3858 = vunpack.c.l.b16 %v2577
    %v3859 = vunpack.c.h.b16 %v2577
    %v3860 = vunpack.c.l.b16 %v2578
    %v3861 = vunpack.c.h.b16 %v2578
    %v3862 = vunpack.c.l.b16 %v2579
    %v3863 = vunpack.c.h.b16 %v2579
    %v3864 = vunpack.c.l.b16 %v2580
    %v3865 = vunpack.c.h.b16 %v2580
    %v3866 = vunpack.c.l.b16 %v2581
    %v3867 = vunpack.c.h.b16 %v2581
    %v3868 = vunpack.c.l.b16 %v2582
    %v3869 = vunpack.c.h.b16 %v2582
    %v3870 = vunpack.c.l.b16 %v2583
    %v3871 = vunpack.c.h.b16 %v2583
    %v3872 = vunpack.c.l.b16 %v2584
    %v3873 = vunpack.c.h.b16 %v2584
    %v3874 = vunpack.c.l.b16 %v2585
    %v3875 = vunpack.c.h.b16 %v2585
    %v3876 = vunpack.c.l.b16 %v2586
    %v3877 = vunpack.c.h.b16 %v2586
    %v3878 = vunpack.c.l.b16 %v2587
    %v3879 = vunpack.c.h.b16 %v2587
    %v3880 = vunpack.c.l.b16 %v2588
    %v3881 = vunpack.c.h.b16 %v2588
    %v3882 = vunpack.c.l.b16 %v2589
    %v3883 = vunpack.c.h.b16 %v2589
    %v3884 = vunpack.c.l.b16 %v2590
    %v3885 = vunpack.c.h.b16 %v2590
    %v3886 = vunpack.c.l.b16 %v2591
    %v3887 = vunpack.c.h.b16 %v2591
    %v3888 = vunpack.c.l.b16 %v2592
    %v3889 = vunpack.c.h.b16 %v2592
    %v3890 = vunpack.c.l.b16 %v2593
    %v3891 = vunpack.c.h.b16 %v2593
    %v3892 = vunpack.c.l.b16 %v2594
    %v3893 = vunpack.c.h.b16 %v2594
    %v3894 = vunpack.c.l.b16 %v2595
    %v3895 = vunpack.c.h.b16 %v2595
    %v3896 = vunpack.c.l.b16 %v2596
    %v3897 = vunpack.c.h.b16 %v2596
    %v3898 = vunpack.c.l.b16 %v2597
    %v3899 = vunpack.c.h.b16 %v2597
    %v3900 = vunpack.c.l.b16 %v2598
    %v3901 = vunpack.c.h.b16 %v2598
    %v3902 = vunpack.c.l.b16 %v2599
    %v3903 = vunpack.c.h.b16 %v2599
    %v3904 = vunpack.c.l.b16 %v2600
    %v3905 = vunpack.c.h.b16 %v2600
    %v3906 = vunpack.c.l.b16 %v2601
    %v3907 = vunpack.c.h.b16 %v2601
    %v3908 = vunpack.c.l.b16 %v2602
    %v3909 = vunpack.c.h.b16 %v2602
    %v3910 = vunpack.c.l.b16 %v2603
    %v3911 = vunpack.c.h.b16 %v2603
    %v3912 = vunpack.c.l.b16 %v2604
    %v3913 = vunpack.c.h.b16 %v2604
    %v3914 = vunpack.c.l.b16 %v2605
    %v3915 = vunpack.c.h.b16 %v2605
    %v3916 = vunpack.c.l.b16 %v2606
    %v3917 = vunpack.c.h.b16 %v2606
    %v3918 = vunpack.c.l.b16 %v2607
    %v3919 = vunpack.c.h.b16 %v2607
    %v3920 = vunpack.c.l.b16 %v2608
    %v3921 = vunpack.c.h.b16 %v2608
    %v3922 = vunpack.c.l.b16 %v2609
    %v3923 = vunpack.c.h.b16 %v2609
    %v3924 = vunpack.c.l.b16 %v2610
    %v3925 = vunpack.c.h.b16 %v2610
    %v3926 = vunpack.c.l.b16 %v2611
    %v3927 = vunpack.c.h.b16 %v2611
    %v3928 = vunpack.c.l.b16 %v2612
    %v3929 = vunpack.c.h.b16 %v2612
    %v3930 = vunpack.c.l.b16 %v2613
    %v3931 = vunpack.c.h.b16 %v2613
    %v3932 = vunpack.c.l.b16 %v2614
    %v3933 = vunpack.c.h.b16 %v2614
    %v3934 = vunpack.c.l.b16 %v2615
    %v3935 = vunpack.c.h.b16 %v2615
    %v3936 = vunpack.c.l.b16 %v2616
    %v3937 = vunpack.c.h.b16 %v2616
    %v3938 = vunpack.c.l.b16 %v2617
    %v3939 = vunpack.c.h.b16 %v2617
    %v3940 = vunpack.c.l.b16 %v2618
    %v3941 = vunpack.c.h.b16 %v2618
    %v3942 = vunpack.c.l.b16 %v2619
    %v3943 = vunpack.c.h.b16 %v2619
    %v3944 = vunpack.c.l.b16 %v2620
    %v3945 = vunpack.c.h.b16 %v2620
    %v3946 = vunpack.c.l.b16 %v2621
    %v3947 = vunpack.c.h.b16 %v2621
    %v3948 = vunpack.c.l.b16 %v2622
    %v3949 = vunpack.c.h.b16 %v2622
    %v3950 = vunpack.c.l.b16 %v2623
    %v3951 = vunpack.c.h.b16 %v2623
    %v3952 = vunpack.c.l.b16 %v2624
    %v3953 = vunpack.c.h.b16 %v2624
    %v3954 = vunpack.c.l.b16 %v2625
    %v3955 = vunpack.c.h.b16 %v2625
    %v3956 = vunpack.c.l.b16 %v2626
    %v3957 = vunpack.c.h.b16 %v2626
    %v3958 = vunpack.c.l.b16 %v2627
    %v3959 = vunpack.c.h.b16 %v2627
    %v3960 = vunpack.c.l.b16 %v2628
    %v3961 = vunpack.c.h.b16 %v2628
    %v3962 = vunpack.c.l.b16 %v2629
    %v3963 = vunpack.c.h.b16 %v2629
    %v3964 = vunpack.c.l.b16 %v2630
    %v3965 = vunpack.c.h.b16 %v2630
    %v3966 = vunpack.c.l.b16 %v2631
    %v3967 = vunpack.c.h.b16 %v2631
    %v3968 = vunpack.c.l.b16 %v2632
    %v3969 = vunpack.c.h.b16 %v2632
    %v3970 = vunpack.c.l.b16 %v2633
    %v3971 = vunpack.c.h.b16 %v2633
    %v3972 = vunpack.c.l.b16 %v2634
    %v3973 = vunpack.c.h.b16 %v2634
    %v3974 = vunpack.c.l.b16 %v2635
    %v3975 = vunpack.c.h.b16 %v2635
    %v3976 = vunpack.c.l.b16 %v2636
    %v3977 = vunpack.c.h.b16 %v2636
    %v3978 = vunpack.c.l.b16 %v2637
    %v3979 = vunpack.c.h.b16 %v2637
    %v3980 = vunpack.c.l.b16 %v2638
    %v3981 = vunpack.c.h.b16 %v2638
    %v3982 = vunpack.c.l.b16 %v2639
    %v3983 = vunpack.c.h.b16 %v2639
    %v3984 = vunpack.c.l.b16 %v2640
    %v3985 = vunpack.c.h.b16 %v2640
    %v3986 = vunpack.c.l.b16 %v2641
    %v3987 = vunpack.c.h.b16 %v2641
    %v3988 = vunpack.c.l.b16 %v2642
    %v3989 = vunpack.c.h.b16 %v2642
    %v3990 = vunpack.c.l.b16 %v2643
    %v3991 = vunpack.c.h.b16 %v2643
    %v3992 = vunpack.c.l.b16 %v2644
    %v3993 = vunpack.c.h.b16 %v2644
    %v3994 = vunpack.c.l.b16 %v2645
    %v3995 = vunpack.c.h.b16 %v2645
    %v3996 = vunpack.c.l.b16 %v2646
    %v3997 = vunpack.c.h.b16 %v2646
    %v3998 = vunpack.c.l.b16 %v2647
    %v3999 = vunpack.c.h.b16 %v2647
    %v4000 = vunpack.c.l.b16 %v2648
    %v4001 = vunpack.c.h.b16 %v2648
    %v4002 = vunpack.c.l.b16 %v2649
    %v4003 = vunpack.c.h.b16 %v2649
    %v4004 = vunpack.c.l.b16 %v2650
    %v4005 = vunpack.c.h.b16 %v2650
    %v4006 = vunpack.c.l.b16 %v2651
    %v4007 = vunpack.c.h.b16 %v2651
    %v4008 = vunpack.c.l.b16 %v2652
    %v4009 = vunpack.c.h.b16 %v2652
    %v4010 = vunpack.c.l.b16 %v2653
    %v4011 = vunpack.c.h.b16 %v2653
    %v4012 = vunpack.c.l.b16 %v2654
    %v4013 = vunpack.c.h.b16 %v2654
    %v4014 = vunpack.c.l.b16 %v2655
    %v4015 = vunpack.c.h.b16 %v2655
    %v4016 = vunpack.c.l.b16 %v2656
    %v4017 = vunpack.c.h.b16 %v2656
    %v4018 = vunpack.c.l.b16 %v2657
    %v4019 = vunpack.c.h.b16 %v2657
    %v4020 = vunpack.c.l.b16 %v2658
    %v4021 = vunpack.c.h.b16 %v2658
    %v4022 = vunpack.c.l.b16 %v2659
    %v4023 = vunpack.c.h.b16 %v2659
    %v4024 = vunpack.c.l.b16 %v2660
    %v4025 = vunpack.c.h.b16 %v2660
    %v4026 = vunpack.c.l.b16 %v2661
    %v4027 = vunpack.c.h.b16 %v2661
    %v4028 = vunpack.c.l.b16 %v2662
    %v4029 = vunpack.c.h.b16 %v2662
    %v4030 = vunpack.c.l.b16 %v2663
    %v4031 = vunpack.c.h.b16 %v2663
    %v4032 = vunpack.c.l.b16 %v2664
    %v4033 = vunpack.c.h.b16 %v2664
    %v4034 = vunpack.c.l.b16 %v2665
    %v4035 = vunpack.c.h.b16 %v2665
    %v4036 = vunpack.c.l.b16 %v2666
    %v4037 = vunpack.c.h.b16 %v2666
    %v4038 = vunpack.c.l.b16 %v2667
    %v4039 = vunpack.c.h.b16 %v2667
    %v4040 = vunpack.c.l.b16 %v2668
    %v4041 = vunpack.c.h.b16 %v2668
    %v4042 = vunpack.c.l.b16 %v2669
    %v4043 = vunpack.c.h.b16 %v2669
    %v4044 = vunpack.c.l.b16 %v2670
    %v4045 = vunpack.c.h.b16 %v2670
    %v4046 = vunpack.c.l.b16 %v2671
    %v4047 = vunpack.c.h.b16 %v2671
    %v4048 = vunpack.c.l.b16 %v2672
    %v4049 = vunpack.c.h.b16 %v2672
    %v4050 = vunpack.c.l.b16 %v2673
    %v4051 = vunpack.c.h.b16 %v2673
    %v4052 = vunpack.c.l.b16 %v2674
    %v4053 = vunpack.c.h.b16 %v2674
    %v4054 = vunpack.c.l.b16 %v2675
    %v4055 = vunpack.c.h.b16 %v2675
    %v4056 = vunpack.c.l.b16 %v2676
    %v4057 = vunpack.c.h.b16 %v2676
    %v4058 = vunpack.c.l.b16 %v2677
    %v4059 = vunpack.c.h.b16 %v2677
    %v4060 = vunpack.c.l.b16 %v2678
    %v4061 = vunpack.c.h.b16 %v2678
    %v4062 = vunpack.c.l.b16 %v2679
    %v4063 = vunpack.c.h.b16 %v2679
    %v4064 = vunpack.c.l.b16 %v2680
    %v4065 = vunpack.c.h.b16 %v2680
    %v4066 = vunpack.c.l.b16 %v2681
    %v4067 = vunpack.c.h.b16 %v2681
    %v4068 = vunpack.c.l.b16 %v2682
    %v4069 = vunpack.c.h.b16 %v2682
    %v4070 = vunpack.c.l.b16 %v2683
    %v4071 = vunpack.c.h.b16 %v2683
    %v4072 = vunpack.c.l.b16 %v2684
    %v4073 = vunpack.c.h.b16 %v2684
    %v4074 = vunpack.c.l.b16 %v2685
    %v4075 = vunpack.c.h.b16 %v2685
    %v4076 = vunpack.c.l.b16 %v2686
    %v4077 = vunpack.c.h.b16 %v2686
    %v4078 = vunpack.c.l.b16 %v2687
    %v4079 = vunpack.c.h.b16 %v2687
    %v4080 = vunpack.c.l.b16 %v2688
    %v4081 = vunpack.c.h.b16 %v2688
    %v4082 = vunpack.c.l.b16 %v2689
    %v4083 = vunpack.c.h.b16 %v2689
    %v4084 = vunpack.c.l.b16 %v2690
    %v4085 = vunpack.c.h.b16 %v2690
    %v4086 = vunpack.c.l.b16 %v2691
    %v4087 = vunpack.c.h.b16 %v2691
    %v4088 = vunpack.c.l.b16 %v2692
    %v4089 = vunpack.c.h.b16 %v2692
    %v4090 = vunpack.c.l.b16 %v2693
    %v4091 = vunpack.c.h.b16 %v2693
    %v4092 = vunpack.c.l.b16 %v2694
    %v4093 = vunpack.c.h.b16 %v2694
    %v4094 = vunpack.c.l.b16 %v2695
    %v4095 = vunpack.c.h.b16 %v2695
    %v4096 = vunpack.c.l.b16 %v2696
    %v4097 = vunpack.c.h.b16 %v2696
    %v4098 = vunpack.c.l.b16 %v2697
    %v4099 = vunpack.c.h.b16 %v2697
    %v4100 = vunpack.c.l.b16 %v2698
    %v4101 = vunpack.c.h.b16 %v2698
    %v4102 = vunpack.c.l.b16 %v2699
    %v4103 = vunpack.c.h.b16 %v2699
    %v4104 = vunpack.c.l.b16 %v2700
    %v4105 = vunpack.c.h.b16 %v2700
    %v4106 = vunpack.c.l.b16 %v2701
    %v4107 = vunpack.c.h.b16 %v2701
    %v4108 = vunpack.c.l.b16 %v2702
    %v4109 = vunpack.c.h.b16 %v2702
    %v4110 = vunpack.c.l.b16 %v2703
    %v4111 = vunpack.c.h.b16 %v2703
    %v4112 = vunpack.c.l.b16 %v2704
    %v4113 = vunpack.c.h.b16 %v2704
    %v4114 = vunpack.c.l.b16 %v2705
    %v4115 = vunpack.c.h.b16 %v2705
    %v4116 = vunpack.c.l.b16 %v2706
    %v4117 = vunpack.c.h.b16 %v2706
    %v4118 = vunpack.c.l.b16 %v2707
    %v4119 = vunpack.c.h.b16 %v2707
    %v4120 = vunpack.c.l.b16 %v2708
    %v4121 = vunpack.c.h.b16 %v2708
    %v4122 = vunpack.c.l.b16 %v2709
    %v4123 = vunpack.c.h.b16 %v2709
    %v4124 = vunpack.c.l.b16 %v2710
    %v4125 = vunpack.c.h.b16 %v2710
    %v4126 = vunpack.c.l.b16 %v2711
    %v4127 = vunpack.c.h.b16 %v2711
    %v4128 = vunpack.c.l.b16 %v2712
    %v4129 = vunpack.c.h.b16 %v2712
    %v4130 = vunpack.c.l.b16 %v2713
    %v4131 = vunpack.c.h.b16 %v2713
    %v4132 = vunpack.c.l.b16 %v2714
    %v4133 = vunpack.c.h.b16 %v2714
    %v4134 = vunpack.c.l.b16 %v2715
    %v4135 = vunpack.c.h.b16 %v2715
    %v4136 = vunpack.c.l.b16 %v2716
    %v4137 = vunpack.c.h.b16 %v2716
    %v4138 = vunpack.c.l.b16 %v2717
    %v4139 = vunpack.c.h.b16 %v2717
    %v4140 = vunpack.c.l.b16 %v2718
    %v4141 = vunpack.c.h.b16 %v2718
    %v4142 = vunpack.c.l.b16 %v2719
    %v4143 = vunpack.c.h.b16 %v2719
    %v4144 = vunpack.c.l.b16 %v2720
    %v4145 = vunpack.c.h.b16 %v2720
    %v4146 = vunpack.c.l.b16 %v2721
    %v4147 = vunpack.c.h.b16 %v2721
    %v4148 = vunpack.c.l.b16 %v2722
    %v4149 = vunpack.c.h.b16 %v2722
    %v4150 = vunpack.c.l.b16 %v2723
    %v4151 = vunpack.c.h.b16 %v2723
    %v4152 = vunpack.c.l.b16 %v2724
    %v4153 = vunpack.c.h.b16 %v2724
    %v4154 = vunpack.c.l.b16 %v2725
    %v4155 = vunpack.c.h.b16 %v2725
    %v4156 = vunpack.c.l.b16 %v2726
    %v4157 = vunpack.c.h.b16 %v2726
    %v4158 = vunpack.c.l.b16 %v2727
    %v4159 = vunpack.c.h.b16 %v2727
    %v4160 = vunpack.c.l.b16 %v2728
    %v4161 = vunpack.c.h.b16 %v2728
    %v4162 = vunpack.c.l.b16 %v2729
    %v4163 = vunpack.c.h.b16 %v2729
    %v4164 = vunpack.c.l.b16 %v2730
    %v4165 = vunpack.c.h.b16 %v2730
    %v4166 = vunpack.c.l.b16 %v2731
    %v4167 = vunpack.c.h.b16 %v2731
    %v4168 = vunpack.c.l.b16 %v2732
    %v4169 = vunpack.c.h.b16 %v2732
    %v4170 = vunpack.c.l.b16 %v2733
    %v4171 = vunpack.c.h.b16 %v2733
    %v4172 = vunpack.c.l.b16 %v2734
    %v4173 = vunpack.c.h.b16 %v2734
    %v4174 = vunpack.c.l.b16 %v2735
    %v4175 = vunpack.c.h.b16 %v2735
    %v4176 = vunpack.c.l.b16 %v2736
    %v4177 = vunpack.c.h.b16 %v2736
    %v4178 = vunpack.c.l.b16 %v2737
    %v4179 = vunpack.c.h.b16 %v2737
    %v4180 = vunpack.c.l.b16 %v2738
    %v4181 = vunpack.c.h.b16 %v2738
    %v4182 = vunpack.c.l.b16 %v2739
    %v4183 = vunpack.c.h.b16 %v2739
    %v4184 = vunpack.c.l.b16 %v2740
    %v4185 = vunpack.c.h.b16 %v2740
    %v4186 = vunpack.c.l.b16 %v2741
    %v4187 = vunpack.c.h.b16 %v2741
    %v4188 = vunpack.c.l.b16 %v2742
    %v4189 = vunpack.c.h.b16 %v2742
    %v4190 = vunpack.c.l.b16 %v2743
    %v4191 = vunpack.c.h.b16 %v2743
    %v4192 = vunpack.c.l.b16 %v2744
    %v4193 = vunpack.c.h.b16 %v2744
    %v4194 = vunpack.c.l.b16 %v2745
    %v4195 = vunpack.c.h.b16 %v2745
    %v4196 = vunpack.c.l.b16 %v2746
    %v4197 = vunpack.c.h.b16 %v2746
    %v4198 = vunpack.c.l.b16 %v2747
    %v4199 = vunpack.c.h.b16 %v2747
    %v4200 = vunpack.c.l.b16 %v2748
    %v4201 = vunpack.c.h.b16 %v2748
    %v4202 = vunpack.c.l.b16 %v2749
    %v4203 = vunpack.c.h.b16 %v2749
    %v4204 = vunpack.c.l.b16 %v2750
    %v4205 = vunpack.c.h.b16 %v2750
    %v4206 = vunpack.c.l.b16 %v2751
    %v4207 = vunpack.c.h.b16 %v2751
    %v4208 = vunpack.c.l.b16 %v2752
    %v4209 = vunpack.c.h.b16 %v2752
    %v4210 = vunpack.c.l.b16 %v2753
    %v4211 = vunpack.c.h.b16 %v2753
    %v4212 = vunpack.c.l.b16 %v2754
    %v4213 = vunpack.c.h.b16 %v2754
    %v4214 = vunpack.c.l.b16 %v2755
    %v4215 = vunpack.c.h.b16 %v2755
    %v4216 = vunpack.c.l.b16 %v2756
    %v4217 = vunpack.c.h.b16 %v2756
    %v4218 = vunpack.c.l.b16 %v2757
    %v4219 = vunpack.c.h.b16 %v2757
    %v4220 = vunpack.c.l.b16 %v2758
    %v4221 = vunpack.c.h.b16 %v2758
    %v4222 = vunpack.c.l.b16 %v2759
    %v4223 = vunpack.c.h.b16 %v2759
    %v4224 = vunpack.c.l.b16 %v2760
    %v4225 = vunpack.c.h.b16 %v2760
    %v4226 = vunpack.c.l.b16 %v2761
    %v4227 = vunpack.c.h.b16 %v2761
    %v4228 = vunpack.c.l.b16 %v2762
    %v4229 = vunpack.c.h.b16 %v2762
    %v4230 = vunpack.c.l.b16 %v2763
    %v4231 = vunpack.c.h.b16 %v2763
    %v4232 = vunpack.c.l.b16 %v2764
    %v4233 = vunpack.c.h.b16 %v2764
    %v4234 = vunpack.c.l.b16 %v2765
    %v4235 = vunpack.c.h.b16 %v2765
    %v4236 = vunpack.c.l.b16 %v2766
    %v4237 = vunpack.c.h.b16 %v2766
    %v4238 = vunpack.c.l.b16 %v2767
    %v4239 = vunpack.c.h.b16 %v2767
    %v4240 = vunpack.c.l.b16 %v2768
    %v4241 = vunpack.c.h.b16 %v2768
    %v4242 = vunpack.c.l.b16 %v2769
    %v4243 = vunpack.c.h.b16 %v2769
    %v4244 = vunpack.c.l.b16 %v2770
    %v4245 = vunpack.c.h.b16 %v2770
    %v4246 = vunpack.c.l.b16 %v2771
    %v4247 = vunpack.c.h.b16 %v2771
    %v4248 = vunpack.c.l.b16 %v2772
    %v4249 = vunpack.c.h.b16 %v2772
    %v4250 = vunpack.c.l.b16 %v2773
    %v4251 = vunpack.c.h.b16 %v2773
    %v4252 = vunpack.c.l.b16 %v2774
    %v4253 = vunpack.c.h.b16 %v2774
    %v4254 = vunpack.c.l.b16 %v2775
    %v4255 = vunpack.c.h.b16 %v2775
    %v4256 = vunpack.c.l.b16 %v2776
    %v4257 = vunpack.c.h.b16 %v2776
    %v4258 = vunpack.c.l.b16 %v2777
    %v4259 = vunpack.c.h.b16 %v2777
    %v4260 = vunpack.c.l.b16 %v2778
    %v4261 = vunpack.c.h.b16 %v2778
    %v4262 = vunpack.c.l.b16 %v2779
    %v4263 = vunpack.c.h.b16 %v2779
    %v4264 = vunpack.c.l.b16 %v2780
    %v4265 = vunpack.c.h.b16 %v2780
    %v4266 = vunpack.c.l.b16 %v2781
    %v4267 = vunpack.c.h.b16 %v2781
    %v4268 = vunpack.c.l.b16 %v2782
    %v4269 = vunpack.c.h.b16 %v2782
    %v4270 = vunpack.c.l.b16 %v2783
    %v4271 = vunpack.c.h.b16 %v2783
    %v4272 = vunpack.c.l.b16 %v2784
    %v4273 = vunpack.c.h.b16 %v2784
    %v4274 = vunpack.c.l.b16 %v2785
    %v4275 = vunpack.c.h.b16 %v2785
    %v4276 = vunpack.c.l.b16 %v2786
    %v4277 = vunpack.c.h.b16 %v2786
    %v4278 = vunpack.c.l.b16 %v2787
    %v4279 = vunpack.c.h.b16 %v2787
    %v4280 = vunpack.c.l.b16 %v2788
    %v4281 = vunpack.c.h.b16 %v2788
    %v4282 = vunpack.c.l.b16 %v2789
    %v4283 = vunpack.c.h.b16 %v2789
    %v4284 = vunpack.c.l.b16 %v2790
    %v4285 = vunpack.c.h.b16 %v2790
    %v4286 = vunpack.c.l.b16 %v2791
    %v4287 = vunpack.c.h.b16 %v2791
    %v4288 = vunpack.c.l.b16 %v2792
    %v4289 = vunpack.c.h.b16 %v2792
    %v4290 = vunpack.c.l.b16 %v2793
    %v4291 = vunpack.c.h.b16 %v2793
    %v4292 = vunpack.c.l.b16 %v2794
    %v4293 = vunpack.c.h.b16 %v2794
    %v4294 = vunpack.c.l.b16 %v2795
    %v4295 = vunpack.c.h.b16 %v2795
    %v4296 = vunpack.c.l.b16 %v2796
    %v4297 = vunpack.c.h.b16 %v2796
    %v4298 = vunpack.c.l.b16 %v2797
    %v4299 = vunpack.c.h.b16 %v2797
    %v4300 = vunpack.c.l.b16 %v2798
    %v4301 = vunpack.c.h.b16 %v2798
    %v4302 = vunpack.c.l.b16 %v2799
    %v4303 = vunpack.c.h.b16 %v2799
    %v4304 = vunpack.c.l.b16 %v2800
    %v4305 = vunpack.c.h.b16 %v2800
    %v4306 = vunpack.c.l.b16 %v2801
    %v4307 = vunpack.c.h.b16 %v2801
    %v4308 = vunpack.c.l.b16 %v2802
    %v4309 = vunpack.c.h.b16 %v2802
    %v4310 = vunpack.c.l.b16 %v2803
    %v4311 = vunpack.c.h.b16 %v2803
    %v4312 = vunpack.c.l.b16 %v2804
    %v4313 = vunpack.c.h.b16 %v2804
    %v4314 = vunpack.c.l.b16 %v2805
    %v4315 = vunpack.c.h.b16 %v2805
    %v4316 = vunpack.c.l.b16 %v2806
    %v4317 = vunpack.c.h.b16 %v2806
    %v4318 = vunpack.c.l.b16 %v2807
    %v4319 = vunpack.c.h.b16 %v2807
    %v4320 = vunpack.c.l.b16 %v2808
    %v4321 = vunpack.c.h.b16 %v2808
    %v4322 = vunpack.c.l.b16 %v2809
    %v4323 = vunpack.c.h.b16 %v2809
    %v4324 = vunpack.c.l.b16 %v2810
    %v4325 = vunpack.c.h.b16 %v2810
    %v4326 = vunpack.c.l.b16 %v2811
    %v4327 = vunpack.c.h.b16 %v2811
    %v4328 = vunpack.c.l.b16 %v2812
    %v4329 = vunpack.c.h.b16 %v2812
    %v4330 = vunpack.c.l.b16 %v2813
    %v4331 = vunpack.c.h.b16 %v2813
    %v4332 = vunpack.c.l.b16 %v2814
    %v4333 = vunpack.c.h.b16 %v2814
    %v4334 = vunpack.c.l.b16 %v2815
    %v4335 = vunpack.c.h.b16 %v2815
    %v4336 = vunpack.c.l.b16 %v2816
    %v4337 = vunpack.c.h.b16 %v2816
    %v4338 = vunpack.c.l.b16 %v2817
    %v4339 = vunpack.c.h.b16 %v2817
    %v4340 = vunpack.c.l.b16 %v2818
    %v4341 = vunpack.c.h.b16 %v2818
    %v4342 = vunpack.c.l.b16 %v2819
    %v4343 = vunpack.c.h.b16 %v2819
    %v4344 = vunpack.c.l.b16 %v2820
    %v4345 = vunpack.c.h.b16 %v2820
    %v4346 = vunpack.c.l.b16 %v2821
    %v4347 = vunpack.c.h.b16 %v2821
    %v4348 = vunpack.c.l.b16 %v2822
    %v4349 = vunpack.c.h.b16 %v2822
    %v4350 = vunpack.c.l.b16 %v2823
    %v4351 = vunpack.c.h.b16 %v2823
    %v4352 = vunpack.c.l.b16 %v2824
    %v4353 = vunpack.c.h.b16 %v2824
    %v4354 = vunpack.c.l.b16 %v2825
    %v4355 = vunpack.c.h.b16 %v2825
    %v4356 = vunpack.c.l.b16 %v2826
    %v4357 = vunpack.c.h.b16 %v2826
    %v4358 = vunpack.c.l.b16 %v2827
    %v4359 = vunpack.c.h.b16 %v2827
    %v4360 = vunpack.c.l.b16 %v2828
    %v4361 = vunpack.c.h.b16 %v2828
    %v4362 = vunpack.c.l.b16 %v2829
    %v4363 = vunpack.c.h.b16 %v2829
    %v4364 = vunpack.c.l.b16 %v2830
    %v4365 = vunpack.c.h.b16 %v2830
    %v4366 = vunpack.c.l.b16 %v2831
    %v4367 = vunpack.c.h.b16 %v2831
    %v4368 = vunpack.c.l.b16 %v2832
    %v4369 = vunpack.c.h.b16 %v2832
    %v4370 = vunpack.c.l.b16 %v2833
    %v4371 = vunpack.c.h.b16 %v2833
    %v4372 = vunpack.c.l.b16 %v2834
    %v4373 = vunpack.c.h.b16 %v2834
    %v4374 = vunpack.c.l.b16 %v2835
    %v4375 = vunpack.c.h.b16 %v2835
    %v4376 = vunpack.c.l.b16 %v2836
    %v4377 = vunpack.c.h.b16 %v2836
    %v4378 = vunpack.c.l.b16 %v2837
    %v4379 = vunpack.c.h.b16 %v2837
    %v4380 = vunpack.c.l.b16 %v2838
    %v4381 = vunpack.c.h.b16 %v2838
    %v4382 = vunpack.c.l.b16 %v2839
    %v4383 = vunpack.c.h.b16 %v2839
    %v4384 = vunpack.c.l.b16 %v2840
    %v4385 = vunpack.c.h.b16 %v2840
    %v4386 = vunpack.c.l.b16 %v2841
    %v4387 = vunpack.c.h.b16 %v2841
    %v4388 = vunpack.c.l.b16 %v2842
    %v4389 = vunpack.c.h.b16 %v2842
    %v4390 = vunpack.c.l.b16 %v2843
    %v4391 = vunpack.c.h.b16 %v2843
    %v4392 = vunpack.c.l.b16 %v2844
    %v4393 = vunpack.c.h.b16 %v2844
    %v4394 = vunpack.c.l.b16 %v2845
    %v4395 = vunpack.c.h.b16 %v2845
    %v4396 = vunpack.c.l.b16 %v2846
    %v4397 = vunpack.c.h.b16 %v2846
    %v4398 = vunpack.c.l.b16 %v2847
    %v4399 = vunpack.c.h.b16 %v2847
    %v4400 = vunpack.c.l.b16 %v2848
    %v4401 = vunpack.c.h.b16 %v2848
    %v4402 = vunpack.c.l.b16 %v2849
    %v4403 = vunpack.c.h.b16 %v2849
    %v4404 = vunpack.c.l.b16 %v2850
    %v4405 = vunpack.c.h.b16 %v2850
    %v4406 = vunpack.c.l.b16 %v2851
    %v4407 = vunpack.c.h.b16 %v2851
    %v4408 = vunpack.c.l.b16 %v2852
    %v4409 = vunpack.c.h.b16 %v2852
    %v4410 = vunpack.c.l.b16 %v2853
    %v4411 = vunpack.c.h.b16 %v2853
    %v4412 = vunpack.c.l.b16 %v2854
    %v4413 = vunpack.c.h.b16 %v2854
    %v4414 = vunpack.c.l.b16 %v2855
    %v4415 = vunpack.c.h.b16 %v2855
    %v4416 = vunpack.c.l.b16 %v2856
    %v4417 = vunpack.c.h.b16 %v2856
    %v4418 = vunpack.c.l.b16 %v2857
    %v4419 = vunpack.c.h.b16 %v2857
    %v4420 = vunpack.c.l.b16 %v2858
    %v4421 = vunpack.c.h.b16 %v2858
    %v4422 = vunpack.c.l.b16 %v2859
    %v4423 = vunpack.c.h.b16 %v2859
    %v4424 = vunpack.c.l.b16 %v2860
    %v4425 = vunpack.c.h.b16 %v2860
    %v4426 = vunpack.c.l.b16 %v2861
    %v4427 = vunpack.c.h.b16 %v2861
    %v4428 = vunpack.c.l.b16 %v2862
    %v4429 = vunpack.c.h.b16 %v2862
    %v4430 = vunpack.c.l.b16 %v2863
    %v4431 = vunpack.c.h.b16 %v2863
    %v4432 = vunpack.c.l.b16 %v2864
    %v4433 = vunpack.c.h.b16 %v2864
    %v4434 = vunpack.c.l.b16 %v2865
    %v4435 = vunpack.c.h.b16 %v2865
    %v4436 = vunpack.c.l.b16 %v2866
    %v4437 = vunpack.c.h.b16 %v2866
    %v4438 = vunpack.c.l.b16 %v2867
    %v4439 = vunpack.c.h.b16 %v2867
    %v4440 = vunpack.c.l.b16 %v2868
    %v4441 = vunpack.c.h.b16 %v2868
    %v4442 = vunpack.c.l.b16 %v2869
    %v4443 = vunpack.c.h.b16 %v2869
    %v4444 = vunpack.c.l.b16 %v2870
    %v4445 = vunpack.c.h.b16 %v2870
    %v4446 = vunpack.c.l.b16 %v2871
    %v4447 = vunpack.c.h.b16 %v2871
    %v4448 = vunpack.c.l.b16 %v2872
    %v4449 = vunpack.c.h.b16 %v2872
    %v4450 = vunpack.c.l.b16 %v2873
    %v4451 = vunpack.c.h.b16 %v2873
    %v4452 = vpack.c.b16 %v3436, %v3428
    %v4453 = vpack.c.b16 %v3437, %v3429
    %v4454 = vpack.c.b16 %v3438, %v3430
    %v4455 = vpack.c.b16 %v3439, %v3431
    %v4456 = vpack.c.b16 %v3440, %v3432
    %v4457 = vpack.c.b16 %v3441, %v3433
    %v4458 = vpack.c.b16 %v3442, %v3434
    %v4459 = vpack.c.b16 %v3443, %v3435
    %v4460 = vpack.c.b16 %v3452, %v3444
    %v4461 = vpack.c.b16 %v3453, %v3445
    %v4462 = vpack.c.b16 %v3454, %v3446
    %v4463 = vpack.c.b16 %v3455, %v3447
    %v4464 = vpack.c.b16 %v3456, %v3448
    %v4465 = vpack.c.b16 %v3457, %v3449
    %v4466 = vpack.c.b16 %v3458, %v3450
    %v4467 = vpack.c.b16 %v3459, %v3451
    %v4468 = vpack.c.b16 %v3468, %v3460
    %v4469 = vpack.c.b16 %v3469, %v3461
    %v4470 = vpack.c.b16 %v3470, %v3462
    %v4471 = vpack.c.b16 %v3471, %v3463
    %v4472 = vpack.c.b16 %v3472, %v3464
    %v4473 = vpack.c.b16 %v3473, %v3465
    %v4474 = vpack.c.b16 %v3474, %v3466
    %v4475 = vpack.c.b16 %v3475, %v3467
    %v4476 = vpack.c.b16 %v3484, %v3476
    %v4477 = vpack.c.b16 %v3485, %v3477
    %v4478 = vpack.c.b16 %v3486, %v3478
    %v4479 = vpack.c.b16 %v3487, %v3479
    %v4480 = vpack.c.b16 %v3488, %v3480
    %v4481 = vpack.c.b16 %v3489, %v3481
    %v4482 = vpack.c.b16 %v3490, %v3482
    %v4483 = vpack.c.b16 %v3491, %v3483
    %v4484 = vpack.c.b16 %v3500, %v3492
    %v4485 = vpack.c.b16 %v3501, %v3493
    %v4486 = vpack.c.b16 %v3502, %v3494
    %v4487 = vpack.c.b16 %v3503, %v3495
    %v4488 = vpack.c.b16 %v3504, %v3496
    %v4489 = vpack.c.b16 %v3505, %v3497
    %v4490 = vpack.c.b16 %v3506, %v3498
    %v4491 = vpack.c.b16 %v3507, %v3499
    %v4492 = vpack.c.b16 %v3516, %v3508
    %v4493 = vpack.c.b16 %v3517, %v3509
    %v4494 = vpack.c.b16 %v3518, %v3510
    %v4495 = vpack.c.b16 %v3519, %v3511
    %v4496 = vpack.c.b16 %v3520, %v3512
    %v4497 = vpack.c.b16 %v3521, %v3513
    %v4498 = vpack.c.b16 %v3522, %v3514
    %v4499 = vpack.c.b16 %v3523, %v3515
    %v4500 = vpack.c.b16 %v3532, %v3524
    %v4501 = vpack.c.b16 %v3533, %v3525
    %v4502 = vpack.c.b16 %v3534, %v3526
    %v4503 = vpack.c.b16 %v3535, %v3527
    %v4504 = vpack.c.b16 %v3536, %v3528
    %v4505 = vpack.c.b16 %v3537, %v3529
    %v4506 = vpack.c.b16 %v3538, %v3530
    %v4507 = vpack.c.b16 %v3539, %v3531
    %v4508 = vpack.c.b16 %v3548, %v3540
    %v4509 = vpack.c.b16 %v3549, %v3541
    %v4510 = vpack.c.b16 %v3550, %v3542
    %v4511 = vpack.c.b16 %v3551, %v3543
    %v4512 = vpack.c.b16 %v3552, %v3544
    %v4513 = vpack.c.b16 %v3553, %v3545
    %v4514 = vpack.c.b16 %v3554, %v3546
    %v4515 = vpack.c.b16 %v3555, %v3547
    %v4516 = vpack.c.b16 %v3564, %v3556
    %v4517 = vpack.c.b16 %v3565, %v3557
    %v4518 = vpack.c.b16 %v3566, %v3558
    %v4519 = vpack.c.b16 %v3567, %v3559
    %v4520 = vpack.c.b16 %v3568, %v3560
    %v4521 = vpack.c.b16 %v3569, %v3561
    %v4522 = vpack.c.b16 %v3570, %v3562
    %v4523 = vpack.c.b16 %v3571, %v3563
    %v4524 = vpack.c.b16 %v3580, %v3572
    %v4525 = vpack.c.b16 %v3581, %v3573
    %v4526 = vpack.c.b16 %v3582, %v3574
    %v4527 = vpack.c.b16 %v3583, %v3575
    %v4528 = vpack.c.b16 %v3584, %v3576
    %v4529 = vpack.c.b16 %v3585, %v3577
    %v4530 = vpack.c.b16 %v3586, %v3578
    %v4531 = vpack.c.b16 %v3587, %v3579
    %v4532 = vpack.c.b16 %v3596, %v3588
    %v4533 = vpack.c.b16 %v3597, %v3589
    %v4534 = vpack.c.b16 %v3598, %v3590
    %v4535 = vpack.c.b16 %v3599, %v3591
    %v4536 = vpack.c.b16 %v3600, %v3592
    %v4537 = vpack.c.b16 %v3601, %v3593
    %v4538 = vpack.c.b16 %v3602, %v3594
    %v4539 = vpack.c.b16 %v3603, %v3595
    %v4540 = vpack.c.b16 %v3612, %v3604
    %v4541 = vpack.c.b16 %v3613, %v3605
    %v4542 = vpack.c.b16 %v3614, %v3606
    %v4543 = vpack.c.b16 %v3615, %v3607
    %v4544 = vpack.c.b16 %v3616, %v3608
    %v4545 = vpack.c.b16 %v3617, %v3609
    %v4546 = vpack.c.b16 %v3618, %v3610
    %v4547 = vpack.c.b16 %v3619, %v3611
    %v4548 = vpack.c.b16 %v3628, %v3620
    %v4549 = vpack.c.b16 %v3629, %v3621
    %v4550 = vpack.c.b16 %v3630, %v3622
    %v4551 = vpack.c.b16 %v3631, %v3623
    %v4552 = vpack.c.b16 %v3632, %v3624
    %v4553 = vpack.c.b16 %v3633, %v3625
    %v4554 = vpack.c.b16 %v3634, %v3626
    %v4555 = vpack.c.b16 %v3635, %v3627
    %v4556 = vpack.c.b16 %v3644, %v3636
    %v4557 = vpack.c.b16 %v3645, %v3637
    %v4558 = vpack.c.b16 %v3646, %v3638
    %v4559 = vpack.c.b16 %v3647, %v3639
    %v4560 = vpack.c.b16 %v3648, %v3640
    %v4561 = vpack.c.b16 %v3649, %v3641
    %v4562 = vpack.c.b16 %v3650, %v3642
    %v4563 = vpack.c.b16 %v3651, %v3643
    %v4564 = vpack.c.b16 %v3660, %v3652
    %v4565 = vpack.c.b16 %v3661, %v3653
    %v4566 = vpack.c.b16 %v3662, %v3654
    %v4567 = vpack.c.b16 %v3663, %v3655
    %v4568 = vpack.c.b16 %v3664, %v3656
    %v4569 = vpack.c.b16 %v3665, %v3657
    %v4570 = vpack.c.b16 %v3666, %v3658
    %v4571 = vpack.c.b16 %v3667, %v3659
    %v4572 = vpack.c.b16 %v3676, %v3668
    %v4573 = vpack.c.b16 %v3677, %v3669
    %v4574 = vpack.c.b16 %v3678, %v3670
    %v4575 = vpack.c.b16 %v3679, %v3671
    %v4576 = vpack.c.b16 %v3680, %v3672
    %v4577 = vpack.c.b16 %v3681, %v3673
    %v4578 = vpack.c.b16 %v3682, %v3674
    %v4579 = vpack.c.b16 %v3683, %v3675
    %v4580 = vpack.c.b16 %v3692, %v3684
    %v4581 = vpack.c.b16 %v3693, %v3685
    %v4582 = vpack.c.b16 %v3694, %v3686
    %v4583 = vpack.c.b16 %v3695, %v3687
    %v4584 = vpack.c.b16 %v3696, %v3688
    %v4585 = vpack.c.b16 %v3697, %v3689
    %v4586 = vpack.c.b16 %v3698, %v3690
    %v4587 = vpack.c.b16 %v3699, %v3691
    %v4588 = vpack.c.b16 %v3708, %v3700
    %v4589 = vpack.c.b16 %v3709, %v3701
    %v4590 = vpack.c.b16 %v3710, %v3702
    %v4591 = vpack.c.b16 %v3711, %v3703
    %v4592 = vpack.c.b16 %v3712, %v3704
    %v4593 = vpack.c.b16 %v3713, %v3705
    %v4594 = vpack.c.b16 %v3714, %v3706
    %v4595 = vpack.c.b16 %v3715, %v3707
    %v4596 = vpack.c.b16 %v3724, %v3716
    %v4597 = vpack.c.b16 %v3725, %v3717
    %v4598 = vpack.c.b16 %v3726, %v3718
    %v4599 = vpack.c.b16 %v3727, %v3719
    %v4600 = vpack.c.b16 %v3728, %v3720
    %v4601 = vpack.c.b16 %v3729, %v3721
    %v4602 = vpack.c.b16 %v3730, %v3722
    %v4603 = vpack.c.b16 %v3731, %v3723
    %v4604 = vpack.c.b16 %v3740, %v3732
    %v4605 = vpack.c.b16 %v3741, %v3733
    %v4606 = vpack.c.b16 %v3742, %v3734
    %v4607 = vpack.c.b16 %v3743, %v3735
    %v4608 = vpack.c.b16 %v3744, %v3736
    %v4609 = vpack.c.b16 %v3745, %v3737
    %v4610 = vpack.c.b16 %v3746, %v3738
    %v4611 = vpack.c.b16 %v3747, %v3739
    %v4612 = vpack.c.b16 %v3756, %v3748
    %v4613 = vpack.c.b16 %v3757, %v3749
    %v4614 = vpack.c.b16 %v3758, %v3750
    %v4615 = vpack.c.b16 %v3759, %v3751
    %v4616 = vpack.c.b16 %v3760, %v3752
    %v4617 = vpack.c.b16 %v3761, %v3753
    %v4618 = vpack.c.b16 %v3762, %v3754
    %v4619 = vpack.c.b16 %v3763, %v3755
    %v4620 = vpack.c.b16 %v3772, %v3764
    %v4621 = vpack.c.b16 %v3773, %v3765
    %v4622 = vpack.c.b16 %v3774, %v3766
    %v4623 = vpack.c.b16 %v3775, %v3767
    %v4624 = vpack.c.b16 %v3776, %v3768
    %v4625 = vpack.c.b16 %v3777, %v3769
    %v4626 = vpack.c.b16 %v3778, %v3770
    %v4627 = vpack.c.b16 %v3779, %v3771
    %v4628 = vpack.c.b16 %v3788, %v3780
    %v4629 = vpack.c.b16 %v3789, %v3781
    %v4630 = vpack.c.b16 %v3790, %v3782
    %v4631 = vpack.c.b16 %v3791, %v3783
    %v4632 = vpack.c.b16 %v3792, %v3784
    %v4633 = vpack.c.b16 %v3793, %v3785
    %v4634 = vpack.c.b16 %v3794, %v3786
    %v4635 = vpack.c.b16 %v3795, %v3787
    %v4636 = vpack.c.b16 %v3804, %v3796
    %v4637 = vpack.c.b16 %v3805, %v3797
    %v4638 = vpack.c.b16 %v3806, %v3798
    %v4639 = vpack.c.b16 %v3807, %v3799
    %v4640 = vpack.c.b16 %v3808, %v3800
    %v4641 = vpack.c.b16 %v3809, %v3801
    %v4642 = vpack.c.b16 %v3810, %v3802
    %v4643 = vpack.c.b16 %v3811, %v3803
    %v4644 = vpack.c.b16 %v3820, %v3812
    %v4645 = vpack.c.b16 %v3821, %v3813
    %v4646 = vpack.c.b16 %v3822, %v3814
    %v4647 = vpack.c.b16 %v3823, %v3815
    %v4648 = vpack.c.b16 %v3824, %v3816
    %v4649 = vpack.c.b16 %v3825, %v3817
    %v4650 = vpack.c.b16 %v3826, %v3818
    %v4651 = vpack.c.b16 %v3827, %v3819
    %v4652 = vpack.c.b16 %v3836, %v3828
    %v4653 = vpack.c.b16 %v3837, %v3829
    %v4654 = vpack.c.b16 %v3838, %v3830
    %v4655 = vpack.c.b16 %v3839, %v3831
    %v4656 = vpack.c.b16 %v3840, %v3832
    %v4657 = vpack.c.b16 %v3841, %v3833
    %v4658 = vpack.c.b16 %v3842, %v3834
    %v4659 = vpack.c.b16 %v3843, %v3835
    %v4660 = vpack.c.b16 %v3852, %v3844
    %v4661 = vpack.c.b16 %v3853, %v3845
    %v4662 = vpack.c.b16 %v3854, %v3846
    %v4663 = vpack.c.b16 %v3855, %v3847
    %v4664 = vpack.c.b16 %v3856, %v3848
    %v4665 = vpack.c.b16 %v3857, %v3849
    %v4666 = vpack.c.b16 %v3858, %v3850
    %v4667 = vpack.c.b16 %v3859, %v3851
    %v4668 = vpack.c.b16 %v3868, %v3860
    %v4669 = vpack.c.b16 %v3869, %v3861
    %v4670 = vpack.c.b16 %v3870, %v3862
    %v4671 = vpack.c.b16 %v3871, %v3863
    %v4672 = vpack.c.b16 %v3872, %v3864
    %v4673 = vpack.c.b16 %v3873, %v3865
    %v4674 = vpack.c.b16 %v3874, %v3866
    %v4675 = vpack.c.b16 %v3875, %v3867
    %v4676 = vpack.c.b16 %v3884, %v3876
    %v4677 = vpack.c.b16 %v3885, %v3877
    %v4678 = vpack.c.b16 %v3886, %v3878
    %v4679 = vpack.c.b16 %v3887, %v3879
    %v4680 = vpack.c.b16 %v3888, %v3880
    %v4681 = vpack.c.b16 %v3889, %v3881
    %v4682 = vpack.c.b16 %v3890, %v3882
    %v4683 = vpack.c.b16 %v3891, %v3883
    %v4684 = vpack.c.b16 %v3900, %v3892
    %v4685 = vpack.c.b16 %v3901, %v3893
    %v4686 = vpack.c.b16 %v3902, %v3894
    %v4687 = vpack.c.b16 %v3903, %v3895
    %v4688 = vpack.c.b16 %v3904, %v3896
    %v4689 = vpack.c.b16 %v3905, %v3897
    %v4690 = vpack.c.b16 %v3906, %v3898
    %v4691 = vpack.c.b16 %v3907, %v3899
    %v4692 = vpack.c.b16 %v3916, %v3908
    %v4693 = vpack.c.b16 %v3917, %v3909
    %v4694 = vpack.c.b16 %v3918, %v3910
    %v4695 = vpack.c.b16 %v3919, %v3911
    %v4696 = vpack.c.b16 %v3920, %v3912
    %v4697 = vpack.c.b16 %v3921, %v3913
    %v4698 = vpack.c.b16 %v3922, %v3914
    %v4699 = vpack.c.b16 %v3923, %v3915
    %v4700 = vpack.c.b16 %v3932, %v3924
    %v4701 = vpack.c.b16 %v3933, %v3925
    %v4702 = vpack.c.b16 %v3934, %v3926
    %v4703 = vpack.c.b16 %v3935, %v3927
    %v4704 = vpack.c.b16 %v3936, %v3928
    %v4705 = vpack.c.b16 %v3937, %v3929
    %v4706 = vpack.c.b16 %v3938, %v3930
    %v4707 = vpack.c.b16 %v3939, %v3931
    %v4708 = vpack.c.b16 %v3948, %v3940
    %v4709 = vpack.c.b16 %v3949, %v3941
    %v4710 = vpack.c.b16 %v3950, %v3942
    %v4711 = vpack.c.b16 %v3951, %v3943
    %v4712 = vpack.c.b16 %v3952, %v3944
    %v4713 = vpack.c.b16 %v3953, %v3945
    %v4714 = vpack.c.b16 %v3954, %v3946
    %v4715 = vpack.c.b16 %v3955, %v3947
    %v4716 = vpack.c.b16 %v3964, %v3956
    %v4717 = vpack.c.b16 %v3965, %v3957
    %v4718 = vpack.c.b16 %v3966, %v3958
    %v4719 = vpack.c.b16 %v3967, %v3959
    %v4720 = vpack.c.b16 %v3968, %v3960
    %v4721 = vpack.c.b16 %v3969, %v3961
    %v4722 = vpack.c.b16 %v3970, %v3962
    %v4723 = vpack.c.b16 %v3971, %v3963
    %v4724 = vpack.c.b16 %v3980, %v3972
    %v4725 = vpack.c.b16 %v3981, %v3973
    %v4726 = vpack.c.b16 %v3982, %v3974
    %v4727 = vpack.c.b16 %v3983, %v3975
    %v4728 = vpack.c.b16 %v3984, %v3976
    %v4729 = vpack.c.b16 %v3985, %v3977
    %v4730 = vpack.c.b16 %v3986, %v3978
    %v4731 = vpack.c.b16 %v3987, %v3979
    %v4732 = vpack.c.b16 %v3996, %v3988
    %v4733 = vpack.c.b16 %v3997, %v3989
    %v4734 = vpack.c.b16 %v3998, %v3990
    %v4735 = vpack.c.b16 %v3999, %v3991
    %v4736 = vpack.c.b16 %v4000, %v3992
    %v4737 = vpack.c.b16 %v4001, %v3993
    %v4738 = vpack.c.b16 %v4002, %v3994
    %v4739 = vpack.c.b16 %v4003, %v3995
    %v4740 = vpack.c.b16 %v4012, %v4004
    %v4741 = vpack.c.b16 %v4013, %v4005
    %v4742 = vpack.c.b16 %v4014, %v4006
    %v4743 = vpack.c.b16 %v4015, %v4007
    %v4744 = vpack.c.b16 %v4016, %v4008
    %v4745 = vpack.c.b16 %v4017, %v4009
    %v4746 = vpack.c.b16 %v4018, %v4010
    %v4747 = vpack.c.b16 %v4019, %v4011
    %v4748 = vpack.c.b16 %v4028, %v4020
    %v4749 = vpack.c.b16 %v4029, %v4021
    %v4750 = vpack.c.b16 %v4030, %v4022
    %v4751 = vpack.c.b16 %v4031, %v4023
    %v4752 = vpack.c.b16 %v4032, %v4024
    %v4753 = vpack.c.b16 %v4033, %v4025
    %v4754 = vpack.c.b16 %v4034, %v4026
    %v4755 = vpack.c.b16 %v4035, %v4027
    %v4756 = vpack.c.b16 %v4044, %v4036
    %v4757 = vpack.c.b16 %v4045, %v4037
    %v4758 = vpack.c.b16 %v4046, %v4038
    %v4759 = vpack.c.b16 %v4047, %v4039
    %v4760 = vpack.c.b16 %v4048, %v4040
    %v4761 = vpack.c.b16 %v4049, %v4041
    %v4762 = vpack.c.b16 %v4050, %v4042
    %v4763 = vpack.c.b16 %v4051, %v4043
    %v4764 = vpack.c.b16 %v4060, %v4052
    %v4765 = vpack.c.b16 %v4061, %v4053
    %v4766 = vpack.c.b16 %v4062, %v4054
    %v4767 = vpack.c.b16 %v4063, %v4055
    %v4768 = vpack.c.b16 %v4064, %v4056
    %v4769 = vpack.c.b16 %v4065, %v4057
    %v4770 = vpack.c.b16 %v4066, %v4058
    %v4771 = vpack.c.b16 %v4067, %v4059
    %v4772 = vpack.c.b16 %v4076, %v4068
    %v4773 = vpack.c.b16 %v4077, %v4069
    %v4774 = vpack.c.b16 %v4078, %v4070
    %v4775 = vpack.c.b16 %v4079, %v4071
    %v4776 = vpack.c.b16 %v4080, %v4072
    %v4777 = vpack.c.b16 %v4081, %v4073
    %v4778 = vpack.c.b16 %v4082, %v4074
    %v4779 = vpack.c.b16 %v4083, %v4075
    %v4780 = vpack.c.b16 %v4092, %v4084
    %v4781 = vpack.c.b16 %v4093, %v4085
    %v4782 = vpack.c.b16 %v4094, %v4086
    %v4783 = vpack.c.b16 %v4095, %v4087
    %v4784 = vpack.c.b16 %v4096, %v4088
    %v4785 = vpack.c.b16 %v4097, %v4089
    %v4786 = vpack.c.b16 %v4098, %v4090
    %v4787 = vpack.c.b16 %v4099, %v4091
    %v4788 = vpack.c.b16 %v4108, %v4100
    %v4789 = vpack.c.b16 %v4109, %v4101
    %v4790 = vpack.c.b16 %v4110, %v4102
    %v4791 = vpack.c.b16 %v4111, %v4103
    %v4792 = vpack.c.b16 %v4112, %v4104
    %v4793 = vpack.c.b16 %v4113, %v4105
    %v4794 = vpack.c.b16 %v4114, %v4106
    %v4795 = vpack.c.b16 %v4115, %v4107
    %v4796 = vpack.c.b16 %v4124, %v4116
    %v4797 = vpack.c.b16 %v4125, %v4117
    %v4798 = vpack.c.b16 %v4126, %v4118
    %v4799 = vpack.c.b16 %v4127, %v4119
    %v4800 = vpack.c.b16 %v4128, %v4120
    %v4801 = vpack.c.b16 %v4129, %v4121
    %v4802 = vpack.c.b16 %v4130, %v4122
    %v4803 = vpack.c.b16 %v4131, %v4123
    %v4804 = vpack.c.b16 %v4140, %v4132
    %v4805 = vpack.c.b16 %v4141, %v4133
    %v4806 = vpack.c.b16 %v4142, %v4134
    %v4807 = vpack.c.b16 %v4143, %v4135
    %v4808 = vpack.c.b16 %v4144, %v4136
    %v4809 = vpack.c.b16 %v4145, %v4137
    %v4810 = vpack.c.b16 %v4146, %v4138
    %v4811 = vpack.c.b16 %v4147, %v4139
    %v4812 = vpack.c.b16 %v4156, %v4148
    %v4813 = vpack.c.b16 %v4157, %v4149
    %v4814 = vpack.c.b16 %v4158, %v4150
    %v4815 = vpack.c.b16 %v4159, %v4151
    %v4816 = vpack.c.b16 %v4160, %v4152
    %v4817 = vpack.c.b16 %v4161, %v4153
    %v4818 = vpack.c.b16 %v4162, %v4154
    %v4819 = vpack.c.b16 %v4163, %v4155
    %v4820 = vpack.c.b16 %v4172, %v4164
    %v4821 = vpack.c.b16 %v4173, %v4165
    %v4822 = vpack.c.b16 %v4174, %v4166
    %v4823 = vpack.c.b16 %v4175, %v4167
    %v4824 = vpack.c.b16 %v4176, %v4168
    %v4825 = vpack.c.b16 %v4177, %v4169
    %v4826 = vpack.c.b16 %v4178, %v4170
    %v4827 = vpack.c.b16 %v4179, %v4171
    %v4828 = vpack.c.b16 %v4188, %v4180
    %v4829 = vpack.c.b16 %v4189, %v4181
    %v4830 = vpack.c.b16 %v4190, %v4182
    %v4831 = vpack.c.b16 %v4191, %v4183
    %v4832 = vpack.c.b16 %v4192, %v4184
    %v4833 = vpack.c.b16 %v4193, %v4185
    %v4834 = vpack.c.b16 %v4194, %v4186
    %v4835 = vpack.c.b16 %v4195, %v4187
    %v4836 = vpack.c.b16 %v4204, %v4196
    %v4837 = vpack.c.b16 %v4205, %v4197
    %v4838 = vpack.c.b16 %v4206, %v4198
    %v4839 = vpack.c.b16 %v4207, %v4199
    %v4840 = vpack.c.b16 %v4208, %v4200
    %v4841 = vpack.c.b16 %v4209, %v4201
    %v4842 = vpack.c.b16 %v4210, %v4202
    %v4843 = vpack.c.b16 %v4211, %v4203
    %v4844 = vpack.c.b16 %v4220, %v4212
    %v4845 = vpack.c.b16 %v4221, %v4213
    %v4846 = vpack.c.b16 %v4222, %v4214
    %v4847 = vpack.c.b16 %v4223, %v4215
    %v4848 = vpack.c.b16 %v4224, %v4216
    %v4849 = vpack.c.b16 %v4225, %v4217
    %v4850 = vpack.c.b16 %v4226, %v4218
    %v4851 = vpack.c.b16 %v4227, %v4219
    %v4852 = vpack.c.b16 %v4236, %v4228
    %v4853 = vpack.c.b16 %v4237, %v4229
    %v4854 = vpack.c.b16 %v4238, %v4230
    %v4855 = vpack.c.b16 %v4239, %v4231
    %v4856 = vpack.c.b16 %v4240, %v4232
    %v4857 = vpack.c.b16 %v4241, %v4233
    %v4858 = vpack.c.b16 %v4242, %v4234
    %v4859 = vpack.c.b16 %v4243, %v4235
    %v4860 = vpack.c.b16 %v4252, %v4244
    %v4861 = vpack.c.b16 %v4253, %v4245
    %v4862 = vpack.c.b16 %v4254, %v4246
    %v4863 = vpack.c.b16 %v4255, %v4247
    %v4864 = vpack.c.b16 %v4256, %v4248
    %v4865 = vpack.c.b16 %v4257, %v4249
    %v4866 = vpack.c.b16 %v4258, %v4250
    %v4867 = vpack.c.b16 %v4259, %v4251
    %v4868 = vpack.c.b16 %v4268, %v4260
    %v4869 = vpack.c.b16 %v4269, %v4261
    %v4870 = vpack.c.b16 %v4270, %v4262
    %v4871 = vpack.c.b16 %v4271, %v4263
    %v4872 = vpack.c.b16 %v4272, %v4264
    %v4873 = vpack.c.b16 %v4273, %v4265
    %v4874 = vpack.c.b16 %v4274, %v4266
    %v4875 = vpack.c.b16 %v4275, %v4267
    %v4876 = vpack.c.b16 %v4284, %v4276
    %v4877 = vpack.c.b16 %v4285, %v4277
    %v4878 = vpack.c.b16 %v4286, %v4278
    %v4879 = vpack.c.b16 %v4287, %v4279
    %v4880 = vpack.c.b16 %v4288, %v4280
    %v4881 = vpack.c.b16 %v4289, %v4281
    %v4882 = vpack.c.b16 %v4290, %v4282
    %v4883 = vpack.c.b16 %v4291, %v4283
    %v4884 = vpack.c.b16 %v4300, %v4292
    %v4885 = vpack.c.b16 %v4301, %v4293
    %v4886 = vpack.c.b16 %v4302, %v4294
    %v4887 = vpack.c.b16 %v4303, %v4295
    %v4888 = vpack.c.b16 %v4304, %v4296
    %v4889 = vpack.c.b16 %v4305, %v4297
    %v4890 = vpack.c.b16 %v4306, %v4298
    %v4891 = vpack.c.b16 %v4307, %v4299
    %v4892 = vpack.c.b16 %v4316, %v4308
    %v4893 = vpack.c.b16 %v4317, %v4309
    %v4894 = vpack.c.b16 %v4318, %v4310
    %v4895 = vpack.c.b16 %v4319, %v4311
    %v4896 = vpack.c.b16 %v4320, %v4312
    %v4897 = vpack.c.b16 %v4321, %v4313
    %v4898 = vpack.c.b16 %v4322, %v4314
    %v4899 = vpack.c.b16 %v4323, %v4315
    %v4900 = vpack.c.b16 %v4332, %v4324
    %v4901 = vpack.c.b16 %v4333, %v4325
    %v4902 = vpack.c.b16 %v4334, %v4326
    %v4903 = vpack.c.b16 %v4335, %v4327
    %v4904 = vpack.c.b16 %v4336, %v4328
    %v4905 = vpack.c.b16 %v4337, %v4329
    %v4906 = vpack.c.b16 %v4338, %v4330
    %v4907 = vpack.c.b16 %v4339, %v4331
    %v4908 = vpack.c.b16 %v4348, %v4340
    %v4909 = vpack.c.b16 %v4349, %v4341
    %v4910 = vpack.c.b16 %v4350, %v4342
    %v4911 = vpack.c.b16 %v4351, %v4343
    %v4912 = vpack.c.b16 %v4352, %v4344
    %v4913 = vpack.c.b16 %v4353, %v4345
    %v4914 = vpack.c.b16 %v4354, %v4346
    %v4915 = vpack.c.b16 %v4355, %v4347
    %v4916 = vpack.c.b16 %v4364, %v4356
    %v4917 = vpack.c.b16 %v4365, %v4357
    %v4918 = vpack.c.b16 %v4366, %v4358
    %v4919 = vpack.c.b16 %v4367, %v4359
    %v4920 = vpack.c.b16 %v4368, %v4360
    %v4921 = vpack.c.b16 %v4369, %v4361
    %v4922 = vpack.c.b16 %v4370, %v4362
    %v4923 = vpack.c.b16 %v4371, %v4363
    %v4924 = vpack.c.b16 %v4380, %v4372
    %v4925 = vpack.c.b16 %v4381, %v4373
    %v4926 = vpack.c.b16 %v4382, %v4374
    %v4927 = vpack.c.b16 %v4383, %v4375
    %v4928 = vpack.c.b16 %v4384, %v4376
    %v4929 = vpack.c.b16 %v4385, %v4377
    %v4930 = vpack.c.b16 %v4386, %v4378
    %v4931 = vpack.c.b16 %v4387, %v4379
    %v4932 = vpack.c.b16 %v4396, %v4388
    %v4933 = vpack.c.b16 %v4397, %v4389
    %v4934 = vpack.c.b16 %v4398, %v4390
    %v4935 = vpack.c.b16 %v4399, %v4391
    %v4936 = vpack.c.b16 %v4400, %v4392
    %v4937 = vpack.c.b16 %v4401, %v4393
    %v4938 = vpack.c.b16 %v4402, %v4394
    %v4939 = vpack.c.b16 %v4403, %v4395
    %v4940 = vpack.c.b16 %v4412, %v4404
    %v4941 = vpack.c.b16 %v4413, %v4405
    %v4942 = vpack.c.b16 %v4414, %v4406
    %v4943 = vpack.c.b16 %v4415, %v4407
    %v4944 = vpack.c.b16 %v4416, %v4408
    %v4945 = vpack.c.b16 %v4417, %v4409
    %v4946 = vpack.c.b16 %v4418, %v4410
    %v4947 = vpack.c.b16 %v4419, %v4411
    %v4948 = vpack.c.b16 %v4428, %v4420
    %v4949 = vpack.c.b16 %v4429, %v4421
    %v4950 = vpack.c.b16 %v4430, %v4422
    %v4951 = vpack.c.b16 %v4431, %v4423
    %v4952 = vpack.c.b16 %v4432, %v4424
    %v4953 = vpack.c.b16 %v4433, %v4425
    %v4954 = vpack.c.b16 %v4434, %v4426
    %v4955 = vpack.c.b16 %v4435, %v4427
    %v4956 = vpack.c.b16 %v4444, %v4436
    %v4957 = vpack.c.b16 %v4445, %v4437
    %v4958 = vpack.c.b16 %v4446, %v4438
    %v4959 = vpack.c.b16 %v4447, %v4439
    %v4960 = vpack.c.b16 %v4448, %v4440
    %v4961 = vpack.c.b16 %v4449, %v4441
    %v4962 = vpack.c.b16 %v4450, %v4442
    %v4963 = vpack.c.b16 %v4451, %v4443
    %5476 = vmatprep.subr.bf16.mxu0 %v4509
    %5477 = vmatpush1.bf16.msra.mxu0 %v4508
    %5478 = vmatprep.subr.bf16.mxu0 %v4501
    %5479 = vmatpush1.bf16.msra.mxu0 %v4500
    %5480 = vmatprep.subr.bf16.mxu0 %v4493
    %5481 = vmatpush1.bf16.msra.mxu0 %v4492
    %5482 = vmatprep.subr.bf16.mxu0 %v4485
    %5483 = vmatpush1.bf16.msra.mxu0 %v4484
    %5484 = vmatprep.subr.bf16.mxu0 %v4477
    %5485 = vmatpush1.bf16.msra.mxu0 %v4476
    %5486 = vmatprep.subr.bf16.mxu0 %v4469
    %5487 = vmatpush1.bf16.msra.mxu0 %v4468
    %5488 = vmatprep.subr.bf16.mxu0 %v4461
    %5489 = vmatpush1.bf16.msra.mxu0 %v4460
    %5490 = vmatprep.subr.bf16.mxu0 %v4453
    %5491 = vmatpush1.bf16.msra.mxu0 %v4452
    %5492 = vmatprep.subr.bf16.mxu0 %v4573
    %5493 = vmatpush2.bf16.msra.mxu0 %v4572
    %5494 = vmatprep.subr.bf16.mxu0 %v4565
    %5495 = vmatpush2.bf16.msra.mxu0 %v4564
    %5496 = vmatprep.subr.bf16.mxu0 %v4557
    %5497 = vmatpush2.bf16.msra.mxu0 %v4556
    %5498 = vmatprep.subr.bf16.mxu0 %v4549
    %5499 = vmatpush2.bf16.msra.mxu0 %v4548
    %5500 = vmatprep.subr.bf16.mxu0 %v4541
    %5501 = vmatpush2.bf16.msra.mxu0 %v4540
    %5502 = vmatprep.subr.bf16.mxu0 %v4533
    %5503 = vmatpush2.bf16.msra.mxu0 %v4532
    %5504 = vmatprep.subr.bf16.mxu0 %v4525
    %5505 = vmatpush2.bf16.msra.mxu0 %v4524
    %5506 = vmatprep.subr.bf16.mxu0 %v4517
    %5507 = vmatpush2.bf16.msra.mxu0 %v4516
    %5508 = vmatprep.mubr.bf16.mxu0 %v2355
    %5509 = vmatmul.mubr.bf16.gmra.mxu0 %v2354
    %v5510 = vpop.f32.mrf.mxu0
    %v5511 = vadd.f32 %v2879, %v5510
    %v5512 = vpop.f32.mrf.mxu0
    %v5513 = vadd.f32 %v2883, %v5512
    %v5514 = vpop.f32.mrf.mxu0
    %v5515 = vpop.f32.mrf.mxu0
    %5516 = vdwg.mxu0
    %5517 = vmatprep.subr.bf16.mxu0 %v4637
    %5518 = vmatpush1.bf16.msra.mxu0 %v4636
    %5519 = vmatprep.subr.bf16.mxu0 %v4629
    %5520 = vmatpush1.bf16.msra.mxu0 %v4628
    %5521 = vmatprep.subr.bf16.mxu0 %v4621
    %5522 = vmatpush1.bf16.msra.mxu0 %v4620
    %5523 = vmatprep.subr.bf16.mxu0 %v4613
    %5524 = vmatpush1.bf16.msra.mxu0 %v4612
    %5525 = vmatprep.subr.bf16.mxu0 %v4605
    %5526 = vmatpush1.bf16.msra.mxu0 %v4604
    %5527 = vmatprep.subr.bf16.mxu0 %v4597
    %5528 = vmatpush1.bf16.msra.mxu0 %v4596
    %5529 = vmatprep.subr.bf16.mxu0 %v4589
    %5530 = vmatpush1.bf16.msra.mxu0 %v4588
    %5531 = vmatprep.subr.bf16.mxu0 %v4581
    %5532 = vmatpush1.bf16.msra.mxu0 %v4580
    %5533 = vmatprep.subr.bf16.mxu0 %v4701
    %5534 = vmatpush2.bf16.msra.mxu0 %v4700
    %5535 = vmatprep.subr.bf16.mxu0 %v4693
    %5536 = vmatpush2.bf16.msra.mxu0 %v4692
    %5537 = vmatprep.subr.bf16.mxu0 %v4685
    %5538 = vmatpush2.bf16.msra.mxu0 %v4684
    %5539 = vmatprep.subr.bf16.mxu0 %v4677
    %5540 = vmatpush2.bf16.msra.mxu0 %v4676
    %5541 = vmatprep.subr.bf16.mxu0 %v4669
    %5542 = vmatpush2.bf16.msra.mxu0 %v4668
    %5543 = vmatprep.subr.bf16.mxu0 %v4661
    %5544 = vmatpush2.bf16.msra.mxu0 %v4660
    %5545 = vmatprep.subr.bf16.mxu0 %v4653
    %5546 = vmatpush2.bf16.msra.mxu0 %v4652
    %5547 = vmatprep.subr.bf16.mxu0 %v4645
    %5548 = vmatpush2.bf16.msra.mxu0 %v4644
    %5549 = vmatprep.mubr.bf16.mxu0 %v2357
    %5550 = vmatmul.mubr.bf16.gmra.mxu0 %v2356
    %v5551 = vpop.f32.mrf.mxu0
    %v5552 = vadd.f32 %v5511, %v5551
    %v5553 = vpop.f32.mrf.mxu0
    %v5554 = vadd.f32 %v5513, %v5553
    %v5555 = vpop.f32.mrf.mxu0
    %v5556 = vpop.f32.mrf.mxu0
    %5557 = vdwg.mxu0
    %5558 = vmatprep.subr.bf16.mxu0 %v4765
    %5559 = vmatpush1.bf16.msra.mxu0 %v4764
    %5560 = vmatprep.subr.bf16.mxu0 %v4757
    %5561 = vmatpush1.bf16.msra.mxu0 %v4756
    %5562 = vmatprep.subr.bf16.mxu0 %v4749
    %5563 = vmatpush1.bf16.msra.mxu0 %v4748
    %5564 = vmatprep.subr.bf16.mxu0 %v4741
    %5565 = vmatpush1.bf16.msra.mxu0 %v4740
    %5566 = vmatprep.subr.bf16.mxu0 %v4733
    %5567 = vmatpush1.bf16.msra.mxu0 %v4732
    %5568 = vmatprep.subr.bf16.mxu0 %v4725
    %5569 = vmatpush1.bf16.msra.mxu0 %v4724
    %5570 = vmatprep.subr.bf16.mxu0 %v4717
    %5571 = vmatpush1.bf16.msra.mxu0 %v4716
    %5572 = vmatprep.subr.bf16.mxu0 %v4709
    %5573 = vmatpush1.bf16.msra.mxu0 %v4708
    %5574 = vmatprep.subr.bf16.mxu0 %v4829
    %5575 = vmatpush2.bf16.msra.mxu0 %v4828
    %5576 = vmatprep.subr.bf16.mxu0 %v4821
    %5577 = vmatpush2.bf16.msra.mxu0 %v4820
    %5578 = vmatprep.subr.bf16.mxu0 %v4813
    %5579 = vmatpush2.bf16.msra.mxu0 %v4812
    %5580 = vmatprep.subr.bf16.mxu0 %v4805
    %5581 = vmatpush2.bf16.msra.mxu0 %v4804
    %5582 = vmatprep.subr.bf16.mxu0 %v4797
    %5583 = vmatpush2.bf16.msra.mxu0 %v4796
    %5584 = vmatprep.subr.bf16.mxu0 %v4789
    %5585 = vmatpush2.bf16.msra.mxu0 %v4788
    %5586 = vmatprep.subr.bf16.mxu0 %v4781
    %5587 = vmatpush2.bf16.msra.mxu0 %v4780
    %5588 = vmatprep.subr.bf16.mxu0 %v4773
    %5589 = vmatpush2.bf16.msra.mxu0 %v4772
    %5590 = vmatprep.mubr.bf16.mxu0 %v2359
    %5591 = vmatmul.mubr.bf16.gmra.mxu0 %v2358
    %v5592 = vpop.f32.mrf.mxu0
    %v5593 = vadd.f32 %v5552, %v5592
    %v5594 = vpop.f32.mrf.mxu0
    %v5595 = vadd.f32 %v5554, %v5594
    %v5596 = vpop.f32.mrf.mxu0
    %v5597 = vpop.f32.mrf.mxu0
    %5598 = vdwg.mxu0
    %5599 = vmatprep.subr.bf16.mxu0 %v4893
    %5600 = vmatpush1.bf16.msra.mxu0 %v4892
    %5601 = vmatprep.subr.bf16.mxu0 %v4885
    %5602 = vmatpush1.bf16.msra.mxu0 %v4884
    %5603 = vmatprep.subr.bf16.mxu0 %v4877
    %5604 = vmatpush1.bf16.msra.mxu0 %v4876
    %5605 = vmatprep.subr.bf16.mxu0 %v4869
    %5606 = vmatpush1.bf16.msra.mxu0 %v4868
    %5607 = vmatprep.subr.bf16.mxu0 %v4861
    %5608 = vmatpush1.bf16.msra.mxu0 %v4860
    %5609 = vmatprep.subr.bf16.mxu0 %v4853
    %5610 = vmatpush1.bf16.msra.mxu0 %v4852
    %5611 = vmatprep.subr.bf16.mxu0 %v4845
    %5612 = vmatpush1.bf16.msra.mxu0 %v4844
    %5613 = vmatprep.subr.bf16.mxu0 %v4837
    %5614 = vmatpush1.bf16.msra.mxu0 %v4836
    %5615 = vmatprep.subr.bf16.mxu0 %v4957
    %5616 = vmatpush2.bf16.msra.mxu0 %v4956
    %5617 = vmatprep.subr.bf16.mxu0 %v4949
    %5618 = vmatpush2.bf16.msra.mxu0 %v4948
    %5619 = vmatprep.subr.bf16.mxu0 %v4941
    %5620 = vmatpush2.bf16.msra.mxu0 %v4940
    %5621 = vmatprep.subr.bf16.mxu0 %v4933
    %5622 = vmatpush2.bf16.msra.mxu0 %v4932
    %5623 = vmatprep.subr.bf16.mxu0 %v4925
    %5624 = vmatpush2.bf16.msra.mxu0 %v4924
    %5625 = vmatprep.subr.bf16.mxu0 %v4917
    %5626 = vmatpush2.bf16.msra.mxu0 %v4916
    %5627 = vmatprep.subr.bf16.mxu0 %v4909
    %5628 = vmatpush2.bf16.msra.mxu0 %v4908
    %5629 = vmatprep.subr.bf16.mxu0 %v4901
    %5630 = vmatpush2.bf16.msra.mxu0 %v4900
    %5631 = vmatprep.mubr.bf16.mxu0 %v2361
    %5632 = vmatmul.mubr.bf16.gmra.mxu0 %v2360
    %v5633 = vpop.f32.mrf.mxu0
    %v5634 = vadd.f32 %v5593, %v5633
    %v5635 = vpop.f32.mrf.mxu0
    %v5636 = vadd.f32 %v5595, %v5635
    %v5637 = vpop.f32.mrf.mxu0
    %v5638 = vpop.f32.mrf.mxu0
    %5639 = vdwg.mxu0
    %5640 = vmatprep.subr.bf16.mxu0 %v4511
    %5641 = vmatpush1.bf16.msra.mxu0 %v4510
    %5642 = vmatprep.subr.bf16.mxu0 %v4503
    %5643 = vmatpush1.bf16.msra.mxu0 %v4502
    %5644 = vmatprep.subr.bf16.mxu0 %v4495
    %5645 = vmatpush1.bf16.msra.mxu0 %v4494
    %5646 = vmatprep.subr.bf16.mxu0 %v4487
    %5647 = vmatpush1.bf16.msra.mxu0 %v4486
    %5648 = vmatprep.subr.bf16.mxu0 %v4479
    %5649 = vmatpush1.bf16.msra.mxu0 %v4478
    %5650 = vmatprep.subr.bf16.mxu0 %v4471
    %5651 = vmatpush1.bf16.msra.mxu0 %v4470
    %5652 = vmatprep.subr.bf16.mxu0 %v4463
    %5653 = vmatpush1.bf16.msra.mxu0 %v4462
    %5654 = vmatprep.subr.bf16.mxu0 %v4455
    %5655 = vmatpush1.bf16.msra.mxu0 %v4454
    %5656 = vmatprep.subr.bf16.mxu0 %v4575
    %5657 = vmatpush2.bf16.msra.mxu0 %v4574
    %5658 = vmatprep.subr.bf16.mxu0 %v4567
    %5659 = vmatpush2.bf16.msra.mxu0 %v4566
    %5660 = vmatprep.subr.bf16.mxu0 %v4559
    %5661 = vmatpush2.bf16.msra.mxu0 %v4558
    %5662 = vmatprep.subr.bf16.mxu0 %v4551
    %5663 = vmatpush2.bf16.msra.mxu0 %v4550
    %5664 = vmatprep.subr.bf16.mxu0 %v4543
    %5665 = vmatpush2.bf16.msra.mxu0 %v4542
    %5666 = vmatprep.subr.bf16.mxu0 %v4535
    %5667 = vmatpush2.bf16.msra.mxu0 %v4534
    %5668 = vmatprep.subr.bf16.mxu0 %v4527
    %5669 = vmatpush2.bf16.msra.mxu0 %v4526
    %5670 = vmatprep.subr.bf16.mxu0 %v4519
    %5671 = vmatpush2.bf16.msra.mxu0 %v4518
    %5672 = vmatprep.mubr.bf16.mxu0 %v2355
    %5673 = vmatmul.mubr.bf16.gmra.mxu0 %v2354
    %v5674 = vpop.f32.mrf.mxu0
    %v5675 = vadd.f32 %v2887, %v5674
    %v5676 = vpop.f32.mrf.mxu0
    %v5677 = vadd.f32 %v2891, %v5676
    %v5678 = vpop.f32.mrf.mxu0
    %v5679 = vpop.f32.mrf.mxu0
    %5680 = vdwg.mxu0
    %5681 = vmatprep.subr.bf16.mxu0 %v4639
    %5682 = vmatpush1.bf16.msra.mxu0 %v4638
    %5683 = vmatprep.subr.bf16.mxu0 %v4631
    %5684 = vmatpush1.bf16.msra.mxu0 %v4630
    %5685 = vmatprep.subr.bf16.mxu0 %v4623
    %5686 = vmatpush1.bf16.msra.mxu0 %v4622
    %5687 = vmatprep.subr.bf16.mxu0 %v4615
    %5688 = vmatpush1.bf16.msra.mxu0 %v4614
    %5689 = vmatprep.subr.bf16.mxu0 %v4607
    %5690 = vmatpush1.bf16.msra.mxu0 %v4606
    %5691 = vmatprep.subr.bf16.mxu0 %v4599
    %5692 = vmatpush1.bf16.msra.mxu0 %v4598
    %5693 = vmatprep.subr.bf16.mxu0 %v4591
    %5694 = vmatpush1.bf16.msra.mxu0 %v4590
    %5695 = vmatprep.subr.bf16.mxu0 %v4583
    %5696 = vmatpush1.bf16.msra.mxu0 %v4582
    %5697 = vmatprep.subr.bf16.mxu0 %v4703
    %5698 = vmatpush2.bf16.msra.mxu0 %v4702
    %5699 = vmatprep.subr.bf16.mxu0 %v4695
    %5700 = vmatpush2.bf16.msra.mxu0 %v4694
    %5701 = vmatprep.subr.bf16.mxu0 %v4687
    %5702 = vmatpush2.bf16.msra.mxu0 %v4686
    %5703 = vmatprep.subr.bf16.mxu0 %v4679
    %5704 = vmatpush2.bf16.msra.mxu0 %v4678
    %5705 = vmatprep.subr.bf16.mxu0 %v4671
    %5706 = vmatpush2.bf16.msra.mxu0 %v4670
    %5707 = vmatprep.subr.bf16.mxu0 %v4663
    %5708 = vmatpush2.bf16.msra.mxu0 %v4662
    %5709 = vmatprep.subr.bf16.mxu0 %v4655
    %5710 = vmatpush2.bf16.msra.mxu0 %v4654
    %5711 = vmatprep.subr.bf16.mxu0 %v4647
    %5712 = vmatpush2.bf16.msra.mxu0 %v4646
    %5713 = vmatprep.mubr.bf16.mxu0 %v2357
    %5714 = vmatmul.mubr.bf16.gmra.mxu0 %v2356
    %v5715 = vpop.f32.mrf.mxu0
    %v5716 = vadd.f32 %v5675, %v5715
    %v5717 = vpop.f32.mrf.mxu0
    %v5718 = vadd.f32 %v5677, %v5717
    %v5719 = vpop.f32.mrf.mxu0
    %v5720 = vpop.f32.mrf.mxu0
    %5721 = vdwg.mxu0
    %5722 = vmatprep.subr.bf16.mxu0 %v4767
    %5723 = vmatpush1.bf16.msra.mxu0 %v4766
    %5724 = vmatprep.subr.bf16.mxu0 %v4759
    %5725 = vmatpush1.bf16.msra.mxu0 %v4758
    %5726 = vmatprep.subr.bf16.mxu0 %v4751
    %5727 = vmatpush1.bf16.msra.mxu0 %v4750
    %5728 = vmatprep.subr.bf16.mxu0 %v4743
    %5729 = vmatpush1.bf16.msra.mxu0 %v4742
    %5730 = vmatprep.subr.bf16.mxu0 %v4735
    %5731 = vmatpush1.bf16.msra.mxu0 %v4734
    %5732 = vmatprep.subr.bf16.mxu0 %v4727
    %5733 = vmatpush1.bf16.msra.mxu0 %v4726
    %5734 = vmatprep.subr.bf16.mxu0 %v4719
    %5735 = vmatpush1.bf16.msra.mxu0 %v4718
    %5736 = vmatprep.subr.bf16.mxu0 %v4711
    %5737 = vmatpush1.bf16.msra.mxu0 %v4710
    %5738 = vmatprep.subr.bf16.mxu0 %v4831
    %5739 = vmatpush2.bf16.msra.mxu0 %v4830
    %5740 = vmatprep.subr.bf16.mxu0 %v4823
    %5741 = vmatpush2.bf16.msra.mxu0 %v4822
    %5742 = vmatprep.subr.bf16.mxu0 %v4815
    %5743 = vmatpush2.bf16.msra.mxu0 %v4814
    %5744 = vmatprep.subr.bf16.mxu0 %v4807
    %5745 = vmatpush2.bf16.msra.mxu0 %v4806
    %5746 = vmatprep.subr.bf16.mxu0 %v4799
    %5747 = vmatpush2.bf16.msra.mxu0 %v4798
    %5748 = vmatprep.subr.bf16.mxu0 %v4791
    %5749 = vmatpush2.bf16.msra.mxu0 %v4790
    %5750 = vmatprep.subr.bf16.mxu0 %v4783
    %5751 = vmatpush2.bf16.msra.mxu0 %v4782
    %5752 = vmatprep.subr.bf16.mxu0 %v4775
    %5753 = vmatpush2.bf16.msra.mxu0 %v4774
    %5754 = vmatprep.mubr.bf16.mxu0 %v2359
    %5755 = vmatmul.mubr.bf16.gmra.mxu0 %v2358
    %v5756 = vpop.f32.mrf.mxu0
    %v5757 = vadd.f32 %v5716, %v5756
    %v5758 = vpop.f32.mrf.mxu0
    %v5759 = vadd.f32 %v5718, %v5758
    %v5760 = vpop.f32.mrf.mxu0
    %v5761 = vpop.f32.mrf.mxu0
    %5762 = vdwg.mxu0
    %5763 = vmatprep.subr.bf16.mxu0 %v4895
    %5764 = vmatpush1.bf16.msra.mxu0 %v4894
    %5765 = vmatprep.subr.bf16.mxu0 %v4887
    %5766 = vmatpush1.bf16.msra.mxu0 %v4886
    %5767 = vmatprep.subr.bf16.mxu0 %v4879
    %5768 = vmatpush1.bf16.msra.mxu0 %v4878
    %5769 = vmatprep.subr.bf16.mxu0 %v4871
    %5770 = vmatpush1.bf16.msra.mxu0 %v4870
    %5771 = vmatprep.subr.bf16.mxu0 %v4863
    %5772 = vmatpush1.bf16.msra.mxu0 %v4862
    %5773 = vmatprep.subr.bf16.mxu0 %v4855
    %5774 = vmatpush1.bf16.msra.mxu0 %v4854
    %5775 = vmatprep.subr.bf16.mxu0 %v4847
    %5776 = vmatpush1.bf16.msra.mxu0 %v4846
    %5777 = vmatprep.subr.bf16.mxu0 %v4839
    %5778 = vmatpush1.bf16.msra.mxu0 %v4838
    %5779 = vmatprep.subr.bf16.mxu0 %v4959
    %5780 = vmatpush2.bf16.msra.mxu0 %v4958
    %5781 = vmatprep.subr.bf16.mxu0 %v4951
    %5782 = vmatpush2.bf16.msra.mxu0 %v4950
    %5783 = vmatprep.subr.bf16.mxu0 %v4943
    %5784 = vmatpush2.bf16.msra.mxu0 %v4942
    %5785 = vmatprep.subr.bf16.mxu0 %v4935
    %5786 = vmatpush2.bf16.msra.mxu0 %v4934
    %5787 = vmatprep.subr.bf16.mxu0 %v4927
    %5788 = vmatpush2.bf16.msra.mxu0 %v4926
    %5789 = vmatprep.subr.bf16.mxu0 %v4919
    %5790 = vmatpush2.bf16.msra.mxu0 %v4918
    %5791 = vmatprep.subr.bf16.mxu0 %v4911
    %5792 = vmatpush2.bf16.msra.mxu0 %v4910
    %5793 = vmatprep.subr.bf16.mxu0 %v4903
    %5794 = vmatpush2.bf16.msra.mxu0 %v4902
    %5795 = vmatprep.mubr.bf16.mxu0 %v2361
    %5796 = vmatmul.mubr.bf16.gmra.mxu0 %v2360
    %v5797 = vpop.f32.mrf.mxu0
    %v5798 = vadd.f32 %v5757, %v5797
    %v5799 = vpop.f32.mrf.mxu0
    %v5800 = vadd.f32 %v5759, %v5799
    %v5801 = vpop.f32.mrf.mxu0
    %v5802 = vpop.f32.mrf.mxu0
    %5803 = vdwg.mxu0
    %5804 = vmatprep.subr.bf16.mxu0 %v4513
    %5805 = vmatpush1.bf16.msra.mxu0 %v4512
    %5806 = vmatprep.subr.bf16.mxu0 %v4505
    %5807 = vmatpush1.bf16.msra.mxu0 %v4504
    %5808 = vmatprep.subr.bf16.mxu0 %v4497
    %5809 = vmatpush1.bf16.msra.mxu0 %v4496
    %5810 = vmatprep.subr.bf16.mxu0 %v4489
    %5811 = vmatpush1.bf16.msra.mxu0 %v4488
    %5812 = vmatprep.subr.bf16.mxu0 %v4481
    %5813 = vmatpush1.bf16.msra.mxu0 %v4480
    %5814 = vmatprep.subr.bf16.mxu0 %v4473
    %5815 = vmatpush1.bf16.msra.mxu0 %v4472
    %5816 = vmatprep.subr.bf16.mxu0 %v4465
    %5817 = vmatpush1.bf16.msra.mxu0 %v4464
    %5818 = vmatprep.subr.bf16.mxu0 %v4457
    %5819 = vmatpush1.bf16.msra.mxu0 %v4456
    %5820 = vmatprep.subr.bf16.mxu0 %v4577
    %5821 = vmatpush2.bf16.msra.mxu0 %v4576
    %5822 = vmatprep.subr.bf16.mxu0 %v4569
    %5823 = vmatpush2.bf16.msra.mxu0 %v4568
    %5824 = vmatprep.subr.bf16.mxu0 %v4561
    %5825 = vmatpush2.bf16.msra.mxu0 %v4560
    %5826 = vmatprep.subr.bf16.mxu0 %v4553
    %5827 = vmatpush2.bf16.msra.mxu0 %v4552
    %5828 = vmatprep.subr.bf16.mxu0 %v4545
    %5829 = vmatpush2.bf16.msra.mxu0 %v4544
    %5830 = vmatprep.subr.bf16.mxu0 %v4537
    %5831 = vmatpush2.bf16.msra.mxu0 %v4536
    %5832 = vmatprep.subr.bf16.mxu0 %v4529
    %5833 = vmatpush2.bf16.msra.mxu0 %v4528
    %5834 = vmatprep.subr.bf16.mxu0 %v4521
    %5835 = vmatpush2.bf16.msra.mxu0 %v4520
    %5836 = vmatprep.mubr.bf16.mxu0 %v2355
    %5837 = vmatmul.mubr.bf16.gmra.mxu0 %v2354
    %v5838 = vpop.f32.mrf.mxu0
    %v5839 = vadd.f32 %v2895, %v5838
    %v5840 = vpop.f32.mrf.mxu0
    %v5841 = vadd.f32 %v2899, %v5840
    %v5842 = vpop.f32.mrf.mxu0
    %v5843 = vpop.f32.mrf.mxu0
    %5844 = vdwg.mxu0
    %5845 = vmatprep.subr.bf16.mxu0 %v4641
    %5846 = vmatpush1.bf16.msra.mxu0 %v4640
    %5847 = vmatprep.subr.bf16.mxu0 %v4633
    %5848 = vmatpush1.bf16.msra.mxu0 %v4632
    %5849 = vmatprep.subr.bf16.mxu0 %v4625
    %5850 = vmatpush1.bf16.msra.mxu0 %v4624
    %5851 = vmatprep.subr.bf16.mxu0 %v4617
    %5852 = vmatpush1.bf16.msra.mxu0 %v4616
    %5853 = vmatprep.subr.bf16.mxu0 %v4609
    %5854 = vmatpush1.bf16.msra.mxu0 %v4608
    %5855 = vmatprep.subr.bf16.mxu0 %v4601
    %5856 = vmatpush1.bf16.msra.mxu0 %v4600
    %5857 = vmatprep.subr.bf16.mxu0 %v4593
    %5858 = vmatpush1.bf16.msra.mxu0 %v4592
    %5859 = vmatprep.subr.bf16.mxu0 %v4585
    %5860 = vmatpush1.bf16.msra.mxu0 %v4584
    %5861 = vmatprep.subr.bf16.mxu0 %v4705
    %5862 = vmatpush2.bf16.msra.mxu0 %v4704
    %5863 = vmatprep.subr.bf16.mxu0 %v4697
    %5864 = vmatpush2.bf16.msra.mxu0 %v4696
    %5865 = vmatprep.subr.bf16.mxu0 %v4689
    %5866 = vmatpush2.bf16.msra.mxu0 %v4688
    %5867 = vmatprep.subr.bf16.mxu0 %v4681
    %5868 = vmatpush2.bf16.msra.mxu0 %v4680
    %5869 = vmatprep.subr.bf16.mxu0 %v4673
    %5870 = vmatpush2.bf16.msra.mxu0 %v4672
    %5871 = vmatprep.subr.bf16.mxu0 %v4665
    %5872 = vmatpush2.bf16.msra.mxu0 %v4664
    %5873 = vmatprep.subr.bf16.mxu0 %v4657
    %5874 = vmatpush2.bf16.msra.mxu0 %v4656
    %5875 = vmatprep.subr.bf16.mxu0 %v4649
    %5876 = vmatpush2.bf16.msra.mxu0 %v4648
    %5877 = vmatprep.mubr.bf16.mxu0 %v2357
    %5878 = vmatmul.mubr.bf16.gmra.mxu0 %v2356
    %v5879 = vpop.f32.mrf.mxu0
    %v5880 = vadd.f32 %v5839, %v5879
    %v5881 = vpop.f32.mrf.mxu0
    %v5882 = vadd.f32 %v5841, %v5881
    %v5883 = vpop.f32.mrf.mxu0
    %v5884 = vpop.f32.mrf.mxu0
    %5885 = vdwg.mxu0
    %5886 = vmatprep.subr.bf16.mxu0 %v4769
    %5887 = vmatpush1.bf16.msra.mxu0 %v4768
    %5888 = vmatprep.subr.bf16.mxu0 %v4761
    %5889 = vmatpush1.bf16.msra.mxu0 %v4760
    %5890 = vmatprep.subr.bf16.mxu0 %v4753
    %5891 = vmatpush1.bf16.msra.mxu0 %v4752
    %5892 = vmatprep.subr.bf16.mxu0 %v4745
    %5893 = vmatpush1.bf16.msra.mxu0 %v4744
    %5894 = vmatprep.subr.bf16.mxu0 %v4737
    %5895 = vmatpush1.bf16.msra.mxu0 %v4736
    %5896 = vmatprep.subr.bf16.mxu0 %v4729
    %5897 = vmatpush1.bf16.msra.mxu0 %v4728
    %5898 = vmatprep.subr.bf16.mxu0 %v4721
    %5899 = vmatpush1.bf16.msra.mxu0 %v4720
    %5900 = vmatprep.subr.bf16.mxu0 %v4713
    %5901 = vmatpush1.bf16.msra.mxu0 %v4712
    %5902 = vmatprep.subr.bf16.mxu0 %v4833
    %5903 = vmatpush2.bf16.msra.mxu0 %v4832
    %5904 = vmatprep.subr.bf16.mxu0 %v4825
    %5905 = vmatpush2.bf16.msra.mxu0 %v4824
    %5906 = vmatprep.subr.bf16.mxu0 %v4817
    %5907 = vmatpush2.bf16.msra.mxu0 %v4816
    %5908 = vmatprep.subr.bf16.mxu0 %v4809
    %5909 = vmatpush2.bf16.msra.mxu0 %v4808
    %5910 = vmatprep.subr.bf16.mxu0 %v4801
    %5911 = vmatpush2.bf16.msra.mxu0 %v4800
    %5912 = vmatprep.subr.bf16.mxu0 %v4793
    %5913 = vmatpush2.bf16.msra.mxu0 %v4792
    %5914 = vmatprep.subr.bf16.mxu0 %v4785
    %5915 = vmatpush2.bf16.msra.mxu0 %v4784
    %5916 = vmatprep.subr.bf16.mxu0 %v4777
    %5917 = vmatpush2.bf16.msra.mxu0 %v4776
    %5918 = vmatprep.mubr.bf16.mxu0 %v2359
    %5919 = vmatmul.mubr.bf16.gmra.mxu0 %v2358
    %v5920 = vpop.f32.mrf.mxu0
    %v5921 = vadd.f32 %v5880, %v5920
    %v5922 = vpop.f32.mrf.mxu0
    %v5923 = vadd.f32 %v5882, %v5922
    %v5924 = vpop.f32.mrf.mxu0
    %v5925 = vpop.f32.mrf.mxu0
    %5926 = vdwg.mxu0
    %5927 = vmatprep.subr.bf16.mxu0 %v4897
    %5928 = vmatpush1.bf16.msra.mxu0 %v4896
    %5929 = vmatprep.subr.bf16.mxu0 %v4889
    %5930 = vmatpush1.bf16.msra.mxu0 %v4888
    %5931 = vmatprep.subr.bf16.mxu0 %v4881
    %5932 = vmatpush1.bf16.msra.mxu0 %v4880
    %5933 = vmatprep.subr.bf16.mxu0 %v4873
    %5934 = vmatpush1.bf16.msra.mxu0 %v4872
    %5935 = vmatprep.subr.bf16.mxu0 %v4865
    %5936 = vmatpush1.bf16.msra.mxu0 %v4864
    %5937 = vmatprep.subr.bf16.mxu0 %v4857
    %5938 = vmatpush1.bf16.msra.mxu0 %v4856
    %5939 = vmatprep.subr.bf16.mxu0 %v4849
    %5940 = vmatpush1.bf16.msra.mxu0 %v4848
    %5941 = vmatprep.subr.bf16.mxu0 %v4841
    %5942 = vmatpush1.bf16.msra.mxu0 %v4840
    %5943 = vmatprep.subr.bf16.mxu0 %v4961
    %5944 = vmatpush2.bf16.msra.mxu0 %v4960
    %5945 = vmatprep.subr.bf16.mxu0 %v4953
    %5946 = vmatpush2.bf16.msra.mxu0 %v4952
    %5947 = vmatprep.subr.bf16.mxu0 %v4945
    %5948 = vmatpush2.bf16.msra.mxu0 %v4944
    %5949 = vmatprep.subr.bf16.mxu0 %v4937
    %5950 = vmatpush2.bf16.msra.mxu0 %v4936
    %5951 = vmatprep.subr.bf16.mxu0 %v4929
    %5952 = vmatpush2.bf16.msra.mxu0 %v4928
    %5953 = vmatprep.subr.bf16.mxu0 %v4921
    %5954 = vmatpush2.bf16.msra.mxu0 %v4920
    %5955 = vmatprep.subr.bf16.mxu0 %v4913
    %5956 = vmatpush2.bf16.msra.mxu0 %v4912
    %5957 = vmatprep.subr.bf16.mxu0 %v4905
    %5958 = vmatpush2.bf16.msra.mxu0 %v4904
    %5959 = vmatprep.mubr.bf16.mxu0 %v2361
    %5960 = vmatmul.mubr.bf16.gmra.mxu0 %v2360
    %v5961 = vpop.f32.mrf.mxu0
    %v5962 = vadd.f32 %v5921, %v5961
    %v5963 = vpop.f32.mrf.mxu0
    %v5964 = vadd.f32 %v5923, %v5963
    %v5965 = vpop.f32.mrf.mxu0
    %v5966 = vpop.f32.mrf.mxu0
    %5967 = vdwg.mxu0
    %5968 = vmatprep.subr.bf16.mxu0 %v4515
    %5969 = vmatpush1.bf16.msra.mxu0 %v4514
    %5970 = vmatprep.subr.bf16.mxu0 %v4507
    %5971 = vmatpush1.bf16.msra.mxu0 %v4506
    %5972 = vmatprep.subr.bf16.mxu0 %v4499
    %5973 = vmatpush1.bf16.msra.mxu0 %v4498
    %5974 = vmatprep.subr.bf16.mxu0 %v4491
    %5975 = vmatpush1.bf16.msra.mxu0 %v4490
    %5976 = vmatprep.subr.bf16.mxu0 %v4483
    %5977 = vmatpush1.bf16.msra.mxu0 %v4482
    %5978 = vmatprep.subr.bf16.mxu0 %v4475
    %5979 = vmatpush1.bf16.msra.mxu0 %v4474
    %5980 = vmatprep.subr.bf16.mxu0 %v4467
    %5981 = vmatpush1.bf16.msra.mxu0 %v4466
    %5982 = vmatprep.subr.bf16.mxu0 %v4459
    %5983 = vmatpush1.bf16.msra.mxu0 %v4458
    %5984 = vmatprep.subr.bf16.mxu0 %v4579
    %5985 = vmatpush2.bf16.msra.mxu0 %v4578
    %5986 = vmatprep.subr.bf16.mxu0 %v4571
    %5987 = vmatpush2.bf16.msra.mxu0 %v4570
    %5988 = vmatprep.subr.bf16.mxu0 %v4563
    %5989 = vmatpush2.bf16.msra.mxu0 %v4562
    %5990 = vmatprep.subr.bf16.mxu0 %v4555
    %5991 = vmatpush2.bf16.msra.mxu0 %v4554
    %5992 = vmatprep.subr.bf16.mxu0 %v4547
    %5993 = vmatpush2.bf16.msra.mxu0 %v4546
    %5994 = vmatprep.subr.bf16.mxu0 %v4539
    %5995 = vmatpush2.bf16.msra.mxu0 %v4538
    %5996 = vmatprep.subr.bf16.mxu0 %v4531
    %5997 = vmatpush2.bf16.msra.mxu0 %v4530
    %5998 = vmatprep.subr.bf16.mxu0 %v4523
    %5999 = vmatpush2.bf16.msra.mxu0 %v4522
    %6000 = vmatprep.mubr.bf16.mxu0 %v2355
    %6001 = vmatmul.mubr.bf16.gmra.mxu0 %v2354
    %v6002 = vpop.f32.mrf.mxu0
    %v6003 = vadd.f32 %v2903, %v6002
    %v6004 = vpop.f32.mrf.mxu0
    %v6005 = vadd.f32 %v2907, %v6004
    %v6006 = vpop.f32.mrf.mxu0
    %v6007 = vpop.f32.mrf.mxu0
    %6008 = vdwg.mxu0
    %6009 = vmatprep.subr.bf16.mxu0 %v4643
    %6010 = vmatpush1.bf16.msra.mxu0 %v4642
    %6011 = vmatprep.subr.bf16.mxu0 %v4635
    %6012 = vmatpush1.bf16.msra.mxu0 %v4634
    %6013 = vmatprep.subr.bf16.mxu0 %v4627
    %6014 = vmatpush1.bf16.msra.mxu0 %v4626
    %6015 = vmatprep.subr.bf16.mxu0 %v4619
    %6016 = vmatpush1.bf16.msra.mxu0 %v4618
    %6017 = vmatprep.subr.bf16.mxu0 %v4611
    %6018 = vmatpush1.bf16.msra.mxu0 %v4610
    %6019 = vmatprep.subr.bf16.mxu0 %v4603
    %6020 = vmatpush1.bf16.msra.mxu0 %v4602
    %6021 = vmatprep.subr.bf16.mxu0 %v4595
    %6022 = vmatpush1.bf16.msra.mxu0 %v4594
    %6023 = vmatprep.subr.bf16.mxu0 %v4587
    %6024 = vmatpush1.bf16.msra.mxu0 %v4586
    %6025 = vmatprep.subr.bf16.mxu0 %v4707
    %6026 = vmatpush2.bf16.msra.mxu0 %v4706
    %6027 = vmatprep.subr.bf16.mxu0 %v4699
    %6028 = vmatpush2.bf16.msra.mxu0 %v4698
    %6029 = vmatprep.subr.bf16.mxu0 %v4691
    %6030 = vmatpush2.bf16.msra.mxu0 %v4690
    %6031 = vmatprep.subr.bf16.mxu0 %v4683
    %6032 = vmatpush2.bf16.msra.mxu0 %v4682
    %6033 = vmatprep.subr.bf16.mxu0 %v4675
    %6034 = vmatpush2.bf16.msra.mxu0 %v4674
    %6035 = vmatprep.subr.bf16.mxu0 %v4667
    %6036 = vmatpush2.bf16.msra.mxu0 %v4666
    %6037 = vmatprep.subr.bf16.mxu0 %v4659
    %6038 = vmatpush2.bf16.msra.mxu0 %v4658
    %6039 = vmatprep.subr.bf16.mxu0 %v4651
    %6040 = vmatpush2.bf16.msra.mxu0 %v4650
    %6041 = vmatprep.mubr.bf16.mxu0 %v2357
    %6042 = vmatmul.mubr.bf16.gmra.mxu0 %v2356
    %v6043 = vpop.f32.mrf.mxu0
    %v6044 = vadd.f32 %v6003, %v6043
    %v6045 = vpop.f32.mrf.mxu0
    %v6046 = vadd.f32 %v6005, %v6045
    %v6047 = vpop.f32.mrf.mxu0
    %v6048 = vpop.f32.mrf.mxu0
    %6049 = vdwg.mxu0
    %6050 = vmatprep.subr.bf16.mxu0 %v4771
    %6051 = vmatpush1.bf16.msra.mxu0 %v4770
    %6052 = vmatprep.subr.bf16.mxu0 %v4763
    %6053 = vmatpush1.bf16.msra.mxu0 %v4762
    %6054 = vmatprep.subr.bf16.mxu0 %v4755
    %6055 = vmatpush1.bf16.msra.mxu0 %v4754
    %6056 = vmatprep.subr.bf16.mxu0 %v4747
    %6057 = vmatpush1.bf16.msra.mxu0 %v4746
    %6058 = vmatprep.subr.bf16.mxu0 %v4739
    %6059 = vmatpush1.bf16.msra.mxu0 %v4738
    %6060 = vmatprep.subr.bf16.mxu0 %v4731
    %6061 = vmatpush1.bf16.msra.mxu0 %v4730
    %6062 = vmatprep.subr.bf16.mxu0 %v4723
    %6063 = vmatpush1.bf16.msra.mxu0 %v4722
    %6064 = vmatprep.subr.bf16.mxu0 %v4715
    %6065 = vmatpush1.bf16.msra.mxu0 %v4714
    %6066 = vmatprep.subr.bf16.mxu0 %v4835
    %6067 = vmatpush2.bf16.msra.mxu0 %v4834
    %6068 = vmatprep.subr.bf16.mxu0 %v4827
    %6069 = vmatpush2.bf16.msra.mxu0 %v4826
    %6070 = vmatprep.subr.bf16.mxu0 %v4819
    %6071 = vmatpush2.bf16.msra.mxu0 %v4818
    %6072 = vmatprep.subr.bf16.mxu0 %v4811
    %6073 = vmatpush2.bf16.msra.mxu0 %v4810
    %6074 = vmatprep.subr.bf16.mxu0 %v4803
    %6075 = vmatpush2.bf16.msra.mxu0 %v4802
    %6076 = vmatprep.subr.bf16.mxu0 %v4795
    %6077 = vmatpush2.bf16.msra.mxu0 %v4794
    %6078 = vmatprep.subr.bf16.mxu0 %v4787
    %6079 = vmatpush2.bf16.msra.mxu0 %v4786
    %6080 = vmatprep.subr.bf16.mxu0 %v4779
    %6081 = vmatpush2.bf16.msra.mxu0 %v4778
    %6082 = vmatprep.mubr.bf16.mxu0 %v2359
    %6083 = vmatmul.mubr.bf16.gmra.mxu0 %v2358
    %v6084 = vpop.f32.mrf.mxu0
    %v6085 = vadd.f32 %v6044, %v6084
    %v6086 = vpop.f32.mrf.mxu0
    %v6087 = vadd.f32 %v6046, %v6086
    %v6088 = vpop.f32.mrf.mxu0
    %v6089 = vpop.f32.mrf.mxu0
    %6090 = vdwg.mxu0
    %6091 = vmatprep.subr.bf16.mxu0 %v4899
    %6092 = vmatpush1.bf16.msra.mxu0 %v4898
    %6093 = vmatprep.subr.bf16.mxu0 %v4891
    %6094 = vmatpush1.bf16.msra.mxu0 %v4890
    %6095 = vmatprep.subr.bf16.mxu0 %v4883
    %6096 = vmatpush1.bf16.msra.mxu0 %v4882
    %6097 = vmatprep.subr.bf16.mxu0 %v4875
    %6098 = vmatpush1.bf16.msra.mxu0 %v4874
    %6099 = vmatprep.subr.bf16.mxu0 %v4867
    %6100 = vmatpush1.bf16.msra.mxu0 %v4866
    %6101 = vmatprep.subr.bf16.mxu0 %v4859
    %6102 = vmatpush1.bf16.msra.mxu0 %v4858
    %6103 = vmatprep.subr.bf16.mxu0 %v4851
    %6104 = vmatpush1.bf16.msra.mxu0 %v4850
    %6105 = vmatprep.subr.bf16.mxu0 %v4843
    %6106 = vmatpush1.bf16.msra.mxu0 %v4842
    %6107 = vmatprep.subr.bf16.mxu0 %v4963
    %6108 = vmatpush2.bf16.msra.mxu0 %v4962
    %6109 = vmatprep.subr.bf16.mxu0 %v4955
    %6110 = vmatpush2.bf16.msra.mxu0 %v4954
    %6111 = vmatprep.subr.bf16.mxu0 %v4947
    %6112 = vmatpush2.bf16.msra.mxu0 %v4946
    %6113 = vmatprep.subr.bf16.mxu0 %v4939
    %6114 = vmatpush2.bf16.msra.mxu0 %v4938
    %6115 = vmatprep.subr.bf16.mxu0 %v4931
    %6116 = vmatpush2.bf16.msra.mxu0 %v4930
    %6117 = vmatprep.subr.bf16.mxu0 %v4923
    %6118 = vmatpush2.bf16.msra.mxu0 %v4922
    %6119 = vmatprep.subr.bf16.mxu0 %v4915
    %6120 = vmatpush2.bf16.msra.mxu0 %v4914
    %6121 = vmatprep.subr.bf16.mxu0 %v4907
    %6122 = vmatpush2.bf16.msra.mxu0 %v4906
    %6123 = vmatprep.mubr.bf16.mxu0 %v2361
    %6124 = vmatmul.mubr.bf16.gmra.mxu0 %v2360
    %v6125 = vpop.f32.mrf.mxu0
    %v6126 = vadd.f32 %v6085, %v6125
    %v6127 = vpop.f32.mrf.mxu0
    %v6128 = vadd.f32 %v6087, %v6127
    %v6129 = vpop.f32.mrf.mxu0
    %v6130 = vpop.f32.mrf.mxu0
    %6131 = vdwg.mxu0
    %v6132 = vmax.f32 %v5634, 0.0
    %v6133 = vmax.f32 %v5636, 0.0
    %v6134 = vmax.f32 %v5798, 0.0
    %v6135 = vmax.f32 %v5800, 0.0
    %v6136 = vmax.f32 %v5962, 0.0
    %v6137 = vmax.f32 %v5964, 0.0
    %v6138 = vmax.f32 %v6126, 0.0
    %v6139 = vmax.f32 %v6128, 0.0
    %v6140 = vpack.c.bf16 %v6132, %v6132
    %v6141 = vpack.c.bf16 %v6133, %v6133
    %v6142 = vpack.c.bf16 %v6134, %v6134
    %v6143 = vpack.c.bf16 %v6135, %v6135
    %v6144 = vpack.c.bf16 %v6136, %v6136
    %v6145 = vpack.c.bf16 %v6137, %v6137
    %v6146 = vpack.c.bf16 %v6138, %v6138
    %v6147 = vpack.c.bf16 %v6139, %v6139
    %v6148 = vld [vmem:[#allocation14] sm:$0xf]
    %v6149 = vld [vmem:[#allocation14 + $0x4] sm:$0xf]
    %v6150 = vld [vmem:[#allocation14 + $0x8] sm:$0xf]
    %v6151 = vld [vmem:[#allocation14 + $0xc] sm:$0xf]
    %v6152 = vld [vmem:[#allocation14 + $0x10] sm:$0xf]
    %v6153 = vld [vmem:[#allocation14 + $0x14] sm:$0xf]
    %v6154 = vld [vmem:[#allocation14 + $0x18] sm:$0xf]
    %v6155 = vld [vmem:[#allocation14 + $0x1c] sm:$0xf]
    %v6156 = vld [vmem:[#allocation14 + $0x20] sm:$0xf]
    %v6157 = vld [vmem:[#allocation14 + $0x24] sm:$0xf]
    %v6158 = vld [vmem:[#allocation14 + $0x28] sm:$0xf]
    %v6159 = vld [vmem:[#allocation14 + $0x2c] sm:$0xf]
    %v6160 = vld [vmem:[#allocation14 + $0x30] sm:$0xf]
    %v6161 = vld [vmem:[#allocation14 + $0x34] sm:$0xf]
    %v6162 = vld [vmem:[#allocation14 + $0x38] sm:$0xf]
    %v6163 = vld [vmem:[#allocation14 + $0x3c] sm:$0xf]
    %v6164 = vld [vmem:[#allocation14 + $0x40] sm:$0xf]
    %v6165 = vld [vmem:[#allocation14 + $0x44] sm:$0xf]
    %v6166 = vld [vmem:[#allocation14 + $0x48] sm:$0xf]
    %v6167 = vld [vmem:[#allocation14 + $0x4c] sm:$0xf]
    %v6168 = vld [vmem:[#allocation14 + $0x50] sm:$0xf]
    %v6169 = vld [vmem:[#allocation14 + $0x54] sm:$0xf]
    %v6170 = vld [vmem:[#allocation14 + $0x58] sm:$0xf]
    %v6171 = vld [vmem:[#allocation14 + $0x5c] sm:$0xf]
    %v6172 = vld [vmem:[#allocation14 + $0x60] sm:$0xf]
    %v6173 = vld [vmem:[#allocation14 + $0x64] sm:$0xf]
    %v6174 = vld [vmem:[#allocation14 + $0x68] sm:$0xf]
    %v6175 = vld [vmem:[#allocation14 + $0x6c] sm:$0xf]
    %v6176 = vld [vmem:[#allocation14 + $0x70] sm:$0xf]
    %v6177 = vld [vmem:[#allocation14 + $0x74] sm:$0xf]
    %v6178 = vld [vmem:[#allocation14 + $0x78] sm:$0xf]
    %v6179 = vld [vmem:[#allocation14 + $0x7c] sm:$0xf]
    %v6180 = vld [vmem:[#allocation14 + $0x80] sm:$0xf]
    %v6181 = vld [vmem:[#allocation14 + $0x84] sm:$0xf]
    %v6182 = vld [vmem:[#allocation14 + $0x88] sm:$0xf]
    %v6183 = vld [vmem:[#allocation14 + $0x8c] sm:$0xf]
    %v6184 = vld [vmem:[#allocation14 + $0x90] sm:$0xf]
    %v6185 = vld [vmem:[#allocation14 + $0x94] sm:$0xf]
    %v6186 = vld [vmem:[#allocation14 + $0x98] sm:$0xf]
    %v6187 = vld [vmem:[#allocation14 + $0x9c] sm:$0xf]
    %v6188 = vld [vmem:[#allocation14 + $0xa0] sm:$0xf]
    %v6189 = vld [vmem:[#allocation14 + $0xa4] sm:$0xf]
    %v6190 = vld [vmem:[#allocation14 + $0xa8] sm:$0xf]
    %v6191 = vld [vmem:[#allocation14 + $0xac] sm:$0xf]
    %v6192 = vld [vmem:[#allocation14 + $0xb0] sm:$0xf]
    %v6193 = vld [vmem:[#allocation14 + $0xb4] sm:$0xf]
    %v6194 = vld [vmem:[#allocation14 + $0xb8] sm:$0xf]
    %v6195 = vld [vmem:[#allocation14 + $0xbc] sm:$0xf]
    %v6196 = vld [vmem:[#allocation14 + $0xc0] sm:$0xf]
    %v6197 = vld [vmem:[#allocation14 + $0xc4] sm:$0xf]
    %v6198 = vld [vmem:[#allocation14 + $0xc8] sm:$0xf]
    %v6199 = vld [vmem:[#allocation14 + $0xcc] sm:$0xf]
    %v6200 = vld [vmem:[#allocation14 + $0xd0] sm:$0xf]
    %v6201 = vld [vmem:[#allocation14 + $0xd4] sm:$0xf]
    %v6202 = vld [vmem:[#allocation14 + $0xd8] sm:$0xf]
    %v6203 = vld [vmem:[#allocation14 + $0xdc] sm:$0xf]
    %v6204 = vld [vmem:[#allocation14 + $0xe0] sm:$0xf]
    %v6205 = vld [vmem:[#allocation14 + $0xe4] sm:$0xf]
    %v6206 = vld [vmem:[#allocation14 + $0xe8] sm:$0xf]
    %v6207 = vld [vmem:[#allocation14 + $0xec] sm:$0xf]
    %v6208 = vld [vmem:[#allocation14 + $0xf0] sm:$0xf]
    %v6209 = vld [vmem:[#allocation14 + $0xf4] sm:$0xf]
    %v6210 = vld [vmem:[#allocation14 + $0xf8] sm:$0xf]
    %v6211 = vld [vmem:[#allocation14 + $0xfc] sm:$0xf]
    %v6212 = vld [vmem:[#allocation14 + $0x100] sm:$0xf]
    %v6213 = vld [vmem:[#allocation14 + $0x104] sm:$0xf]
    %v6214 = vld [vmem:[#allocation14 + $0x108] sm:$0xf]
    %v6215 = vld [vmem:[#allocation14 + $0x10c] sm:$0xf]
    %v6216 = vld [vmem:[#allocation14 + $0x110] sm:$0xf]
    %v6217 = vld [vmem:[#allocation14 + $0x114] sm:$0xf]
    %v6218 = vld [vmem:[#allocation14 + $0x118] sm:$0xf]
    %v6219 = vld [vmem:[#allocation14 + $0x11c] sm:$0xf]
    %v6220 = vld [vmem:[#allocation14 + $0x120] sm:$0xf]
    %v6221 = vld [vmem:[#allocation14 + $0x124] sm:$0xf]
    %v6222 = vld [vmem:[#allocation14 + $0x128] sm:$0xf]
    %v6223 = vld [vmem:[#allocation14 + $0x12c] sm:$0xf]
    %v6224 = vld [vmem:[#allocation14 + $0x130] sm:$0xf]
    %v6225 = vld [vmem:[#allocation14 + $0x134] sm:$0xf]
    %v6226 = vld [vmem:[#allocation14 + $0x138] sm:$0xf]
    %v6227 = vld [vmem:[#allocation14 + $0x13c] sm:$0xf]
    %v6228 = vld [vmem:[#allocation14 + $0x140] sm:$0xf]
    %v6229 = vld [vmem:[#allocation14 + $0x144] sm:$0xf]
    %v6230 = vld [vmem:[#allocation14 + $0x148] sm:$0xf]
    %v6231 = vld [vmem:[#allocation14 + $0x14c] sm:$0xf]
    %v6232 = vld [vmem:[#allocation14 + $0x150] sm:$0xf]
    %v6233 = vld [vmem:[#allocation14 + $0x154] sm:$0xf]
    %v6234 = vld [vmem:[#allocation14 + $0x158] sm:$0xf]
    %v6235 = vld [vmem:[#allocation14 + $0x15c] sm:$0xf]
    %v6236 = vld [vmem:[#allocation14 + $0x160] sm:$0xf]
    %v6237 = vld [vmem:[#allocation14 + $0x164] sm:$0xf]
    %v6238 = vld [vmem:[#allocation14 + $0x168] sm:$0xf]
    %v6239 = vld [vmem:[#allocation14 + $0x16c] sm:$0xf]
    %v6240 = vld [vmem:[#allocation14 + $0x170] sm:$0xf]
    %v6241 = vld [vmem:[#allocation14 + $0x174] sm:$0xf]
    %v6242 = vld [vmem:[#allocation14 + $0x178] sm:$0xf]
    %v6243 = vld [vmem:[#allocation14 + $0x17c] sm:$0xf]
    %v6244 = vld [vmem:[#allocation14 + $0x180] sm:$0xf]
    %v6245 = vld [vmem:[#allocation14 + $0x184] sm:$0xf]
    %v6246 = vld [vmem:[#allocation14 + $0x188] sm:$0xf]
    %v6247 = vld [vmem:[#allocation14 + $0x18c] sm:$0xf]
    %v6248 = vld [vmem:[#allocation14 + $0x190] sm:$0xf]
    %v6249 = vld [vmem:[#allocation14 + $0x194] sm:$0xf]
    %v6250 = vld [vmem:[#allocation14 + $0x198] sm:$0xf]
    %v6251 = vld [vmem:[#allocation14 + $0x19c] sm:$0xf]
    %v6252 = vld [vmem:[#allocation14 + $0x1a0] sm:$0xf]
    %v6253 = vld [vmem:[#allocation14 + $0x1a4] sm:$0xf]
    %v6254 = vld [vmem:[#allocation14 + $0x1a8] sm:$0xf]
    %v6255 = vld [vmem:[#allocation14 + $0x1ac] sm:$0xf]
    %v6256 = vld [vmem:[#allocation14 + $0x1b0] sm:$0xf]
    %v6257 = vld [vmem:[#allocation14 + $0x1b4] sm:$0xf]
    %v6258 = vld [vmem:[#allocation14 + $0x1b8] sm:$0xf]
    %v6259 = vld [vmem:[#allocation14 + $0x1bc] sm:$0xf]
    %v6260 = vld [vmem:[#allocation14 + $0x1c0] sm:$0xf]
    %v6261 = vld [vmem:[#allocation14 + $0x1c4] sm:$0xf]
    %v6262 = vld [vmem:[#allocation14 + $0x1c8] sm:$0xf]
    %v6263 = vld [vmem:[#allocation14 + $0x1cc] sm:$0xf]
    %v6264 = vld [vmem:[#allocation14 + $0x1d0] sm:$0xf]
    %v6265 = vld [vmem:[#allocation14 + $0x1d4] sm:$0xf]
    %v6266 = vld [vmem:[#allocation14 + $0x1d8] sm:$0xf]
    %v6267 = vld [vmem:[#allocation14 + $0x1dc] sm:$0xf]
    %v6268 = vld [vmem:[#allocation14 + $0x1e0] sm:$0xf]
    %v6269 = vld [vmem:[#allocation14 + $0x1e4] sm:$0xf]
    %v6270 = vld [vmem:[#allocation14 + $0x1e8] sm:$0xf]
    %v6271 = vld [vmem:[#allocation14 + $0x1ec] sm:$0xf]
    %v6272 = vld [vmem:[#allocation14 + $0x1f0] sm:$0xf]
    %v6273 = vld [vmem:[#allocation14 + $0x1f4] sm:$0xf]
    %v6274 = vld [vmem:[#allocation14 + $0x1f8] sm:$0xf]
    %v6275 = vld [vmem:[#allocation14 + $0x1fc] sm:$0xf]
    %v6276 = vld [vmem:[#allocation16] sm:$0x1]
    %v6278 = vlaneseq
    %v6279 = vshrl.u32 %v6278, 7
    %v6280 = vsub.s32 0, %v6279
    %v6281 = vrot.slane %v6276, %v6280
    %v6411 = vunpack.c.l.b16 %v6148
    %v6412 = vunpack.c.l.b16 %v6149
    %v6413 = vunpack.c.l.b16 %v6150
    %v6414 = vunpack.c.l.b16 %v6151
    %v6415 = vunpack.c.l.b16 %v6152
    %v6416 = vunpack.c.l.b16 %v6153
    %v6417 = vunpack.c.l.b16 %v6154
    %v6418 = vunpack.c.l.b16 %v6155
    %v6419 = vunpack.c.l.b16 %v6156
    %v6420 = vunpack.c.l.b16 %v6157
    %v6421 = vunpack.c.l.b16 %v6158
    %v6422 = vunpack.c.l.b16 %v6159
    %v6423 = vunpack.c.l.b16 %v6160
    %v6424 = vunpack.c.l.b16 %v6161
    %v6425 = vunpack.c.l.b16 %v6162
    %v6426 = vunpack.c.l.b16 %v6163
    %v6427 = vunpack.c.l.b16 %v6164
    %v6428 = vunpack.c.l.b16 %v6165
    %v6429 = vunpack.c.l.b16 %v6166
    %v6430 = vunpack.c.l.b16 %v6167
    %v6431 = vunpack.c.l.b16 %v6168
    %v6432 = vunpack.c.l.b16 %v6169
    %v6433 = vunpack.c.l.b16 %v6170
    %v6434 = vunpack.c.l.b16 %v6171
    %v6435 = vunpack.c.l.b16 %v6172
    %v6436 = vunpack.c.l.b16 %v6173
    %v6437 = vunpack.c.l.b16 %v6174
    %v6438 = vunpack.c.l.b16 %v6175
    %v6439 = vunpack.c.l.b16 %v6176
    %v6440 = vunpack.c.l.b16 %v6177
    %v6441 = vunpack.c.l.b16 %v6178
    %v6442 = vunpack.c.l.b16 %v6179
    %v6443 = vunpack.c.l.b16 %v6180
    %v6444 = vunpack.c.l.b16 %v6181
    %v6445 = vunpack.c.l.b16 %v6182
    %v6446 = vunpack.c.l.b16 %v6183
    %v6447 = vunpack.c.l.b16 %v6184
    %v6448 = vunpack.c.l.b16 %v6185
    %v6449 = vunpack.c.l.b16 %v6186
    %v6450 = vunpack.c.l.b16 %v6187
    %v6451 = vunpack.c.l.b16 %v6188
    %v6452 = vunpack.c.l.b16 %v6189
    %v6453 = vunpack.c.l.b16 %v6190
    %v6454 = vunpack.c.l.b16 %v6191
    %v6455 = vunpack.c.l.b16 %v6192
    %v6456 = vunpack.c.l.b16 %v6193
    %v6457 = vunpack.c.l.b16 %v6194
    %v6458 = vunpack.c.l.b16 %v6195
    %v6459 = vunpack.c.l.b16 %v6196
    %v6460 = vunpack.c.l.b16 %v6197
    %v6461 = vunpack.c.l.b16 %v6198
    %v6462 = vunpack.c.l.b16 %v6199
    %v6463 = vunpack.c.l.b16 %v6200
    %v6464 = vunpack.c.l.b16 %v6201
    %v6465 = vunpack.c.l.b16 %v6202
    %v6466 = vunpack.c.l.b16 %v6203
    %v6467 = vunpack.c.l.b16 %v6204
    %v6468 = vunpack.c.l.b16 %v6205
    %v6469 = vunpack.c.l.b16 %v6206
    %v6470 = vunpack.c.l.b16 %v6207
    %v6471 = vunpack.c.l.b16 %v6208
    %v6472 = vunpack.c.l.b16 %v6209
    %v6473 = vunpack.c.l.b16 %v6210
    %v6474 = vunpack.c.l.b16 %v6211
    %v6475 = vunpack.c.l.b16 %v6212
    %v6476 = vunpack.c.l.b16 %v6213
    %v6477 = vunpack.c.l.b16 %v6214
    %v6478 = vunpack.c.l.b16 %v6215
    %v6479 = vunpack.c.l.b16 %v6216
    %v6480 = vunpack.c.l.b16 %v6217
    %v6481 = vunpack.c.l.b16 %v6218
    %v6482 = vunpack.c.l.b16 %v6219
    %v6483 = vunpack.c.l.b16 %v6220
    %v6484 = vunpack.c.l.b16 %v6221
    %v6485 = vunpack.c.l.b16 %v6222
    %v6486 = vunpack.c.l.b16 %v6223
    %v6487 = vunpack.c.l.b16 %v6224
    %v6488 = vunpack.c.l.b16 %v6225
    %v6489 = vunpack.c.l.b16 %v6226
    %v6490 = vunpack.c.l.b16 %v6227
    %v6491 = vunpack.c.l.b16 %v6228
    %v6492 = vunpack.c.l.b16 %v6229
    %v6493 = vunpack.c.l.b16 %v6230
    %v6494 = vunpack.c.l.b16 %v6231
    %v6495 = vunpack.c.l.b16 %v6232
    %v6496 = vunpack.c.l.b16 %v6233
    %v6497 = vunpack.c.l.b16 %v6234
    %v6498 = vunpack.c.l.b16 %v6235
    %v6499 = vunpack.c.l.b16 %v6236
    %v6500 = vunpack.c.l.b16 %v6237
    %v6501 = vunpack.c.l.b16 %v6238
    %v6502 = vunpack.c.l.b16 %v6239
    %v6503 = vunpack.c.l.b16 %v6240
    %v6504 = vunpack.c.l.b16 %v6241
    %v6505 = vunpack.c.l.b16 %v6242
    %v6506 = vunpack.c.l.b16 %v6243
    %v6507 = vunpack.c.l.b16 %v6244
    %v6508 = vunpack.c.l.b16 %v6245
    %v6509 = vunpack.c.l.b16 %v6246
    %v6510 = vunpack.c.l.b16 %v6247
    %v6511 = vunpack.c.l.b16 %v6248
    %v6512 = vunpack.c.l.b16 %v6249
    %v6513 = vunpack.c.l.b16 %v6250
    %v6514 = vunpack.c.l.b16 %v6251
    %v6515 = vunpack.c.l.b16 %v6252
    %v6516 = vunpack.c.l.b16 %v6253
    %v6517 = vunpack.c.l.b16 %v6254
    %v6518 = vunpack.c.l.b16 %v6255
    %v6519 = vunpack.c.l.b16 %v6256
    %v6520 = vunpack.c.l.b16 %v6257
    %v6521 = vunpack.c.l.b16 %v6258
    %v6522 = vunpack.c.l.b16 %v6259
    %v6523 = vunpack.c.l.b16 %v6260
    %v6524 = vunpack.c.l.b16 %v6261
    %v6525 = vunpack.c.l.b16 %v6262
    %v6526 = vunpack.c.l.b16 %v6263
    %v6527 = vunpack.c.l.b16 %v6264
    %v6528 = vunpack.c.l.b16 %v6265
    %v6529 = vunpack.c.l.b16 %v6266
    %v6530 = vunpack.c.l.b16 %v6267
    %v6531 = vunpack.c.l.b16 %v6268
    %v6532 = vunpack.c.l.b16 %v6269
    %v6533 = vunpack.c.l.b16 %v6270
    %v6534 = vunpack.c.l.b16 %v6271
    %v6535 = vunpack.c.l.b16 %v6272
    %v6536 = vunpack.c.l.b16 %v6273
    %v6537 = vunpack.c.l.b16 %v6274
    %v6538 = vunpack.c.l.b16 %v6275
    %v6539 = vpack.c.b16 %v6412, %v6411
    %v6540 = vpack.c.b16 %v6414, %v6413
    %v6541 = vpack.c.b16 %v6416, %v6415
    %v6542 = vpack.c.b16 %v6418, %v6417
    %v6543 = vpack.c.b16 %v6420, %v6419
    %v6544 = vpack.c.b16 %v6422, %v6421
    %v6545 = vpack.c.b16 %v6424, %v6423
    %v6546 = vpack.c.b16 %v6426, %v6425
    %v6547 = vpack.c.b16 %v6428, %v6427
    %v6548 = vpack.c.b16 %v6430, %v6429
    %v6549 = vpack.c.b16 %v6432, %v6431
    %v6550 = vpack.c.b16 %v6434, %v6433
    %v6551 = vpack.c.b16 %v6436, %v6435
    %v6552 = vpack.c.b16 %v6438, %v6437
    %v6553 = vpack.c.b16 %v6440, %v6439
    %v6554 = vpack.c.b16 %v6442, %v6441
    %v6555 = vpack.c.b16 %v6444, %v6443
    %v6556 = vpack.c.b16 %v6446, %v6445
    %v6557 = vpack.c.b16 %v6448, %v6447
    %v6558 = vpack.c.b16 %v6450, %v6449
    %v6559 = vpack.c.b16 %v6452, %v6451
    %v6560 = vpack.c.b16 %v6454, %v6453
    %v6561 = vpack.c.b16 %v6456, %v6455
    %v6562 = vpack.c.b16 %v6458, %v6457
    %v6563 = vpack.c.b16 %v6460, %v6459
    %v6564 = vpack.c.b16 %v6462, %v6461
    %v6565 = vpack.c.b16 %v6464, %v6463
    %v6566 = vpack.c.b16 %v6466, %v6465
    %v6567 = vpack.c.b16 %v6468, %v6467
    %v6568 = vpack.c.b16 %v6470, %v6469
    %v6569 = vpack.c.b16 %v6472, %v6471
    %v6570 = vpack.c.b16 %v6474, %v6473
    %v6571 = vpack.c.b16 %v6476, %v6475
    %v6572 = vpack.c.b16 %v6478, %v6477
    %v6573 = vpack.c.b16 %v6480, %v6479
    %v6574 = vpack.c.b16 %v6482, %v6481
    %v6575 = vpack.c.b16 %v6484, %v6483
    %v6576 = vpack.c.b16 %v6486, %v6485
    %v6577 = vpack.c.b16 %v6488, %v6487
    %v6578 = vpack.c.b16 %v6490, %v6489
    %v6579 = vpack.c.b16 %v6492, %v6491
    %v6580 = vpack.c.b16 %v6494, %v6493
    %v6581 = vpack.c.b16 %v6496, %v6495
    %v6582 = vpack.c.b16 %v6498, %v6497
    %v6583 = vpack.c.b16 %v6500, %v6499
    %v6584 = vpack.c.b16 %v6502, %v6501
    %v6585 = vpack.c.b16 %v6504, %v6503
    %v6586 = vpack.c.b16 %v6506, %v6505
    %v6587 = vpack.c.b16 %v6508, %v6507
    %v6588 = vpack.c.b16 %v6510, %v6509
    %v6589 = vpack.c.b16 %v6512, %v6511
    %v6590 = vpack.c.b16 %v6514, %v6513
    %v6591 = vpack.c.b16 %v6516, %v6515
    %v6592 = vpack.c.b16 %v6518, %v6517
    %v6593 = vpack.c.b16 %v6520, %v6519
    %v6594 = vpack.c.b16 %v6522, %v6521
    %v6595 = vpack.c.b16 %v6524, %v6523
    %v6596 = vpack.c.b16 %v6526, %v6525
    %v6597 = vpack.c.b16 %v6528, %v6527
    %v6598 = vpack.c.b16 %v6530, %v6529
    %v6599 = vpack.c.b16 %v6532, %v6531
    %v6600 = vpack.c.b16 %v6534, %v6533
    %v6601 = vpack.c.b16 %v6536, %v6535
    %v6602 = vpack.c.b16 %v6538, %v6537
    %6667 = vmatprep.subr.bf16.mxu0 0
    %6668 = vmatpush1.bf16.msra.mxu0 %v6546
    %6669 = vmatprep.subr.bf16.mxu0 0
    %6670 = vmatpush1.bf16.msra.mxu0 %v6545
    %6671 = vmatprep.subr.bf16.mxu0 0
    %6672 = vmatpush1.bf16.msra.mxu0 %v6544
    %6673 = vmatprep.subr.bf16.mxu0 0
    %6674 = vmatpush1.bf16.msra.mxu0 %v6543
    %6675 = vmatprep.subr.bf16.mxu0 0
    %6676 = vmatpush1.bf16.msra.mxu0 %v6542
    %6677 = vmatprep.subr.bf16.mxu0 0
    %6678 = vmatpush1.bf16.msra.mxu0 %v6541
    %6679 = vmatprep.subr.bf16.mxu0 0
    %6680 = vmatpush1.bf16.msra.mxu0 %v6540
    %6681 = vmatprep.subr.bf16.mxu0 0
    %6682 = vmatpush1.bf16.msra.mxu0 %v6539
    %6683 = vmatprep.subr.bf16.mxu0 0
    %6684 = vmatpush2.bf16.msra.mxu0 %v6554
    %6685 = vmatprep.subr.bf16.mxu0 0
    %6686 = vmatpush2.bf16.msra.mxu0 %v6553
    %6687 = vmatprep.subr.bf16.mxu0 0
    %6688 = vmatpush2.bf16.msra.mxu0 %v6552
    %6689 = vmatprep.subr.bf16.mxu0 0
    %6690 = vmatpush2.bf16.msra.mxu0 %v6551
    %6691 = vmatprep.subr.bf16.mxu0 0
    %6692 = vmatpush2.bf16.msra.mxu0 %v6550
    %6693 = vmatprep.subr.bf16.mxu0 0
    %6694 = vmatpush2.bf16.msra.mxu0 %v6549
    %6695 = vmatprep.subr.bf16.mxu0 0
    %6696 = vmatpush2.bf16.msra.mxu0 %v6548
    %6697 = vmatprep.subr.bf16.mxu0 0
    %6698 = vmatpush2.bf16.msra.mxu0 %v6547
    %6699 = vmatprep.mubr.bf16.mxu0 %v6141
    %6700 = vmatmul.mubr.bf16.gmra.mxu0 %v6140
    %v6701 = vpop.f32.mrf.mxu0
    %v6702 = vadd.f32 %v6281, %v6701
    %v6703 = vpop.f32.mrf.mxu0
    %v6704 = vpop.f32.mrf.mxu0
    %v6705 = vpop.f32.mrf.mxu0
    %6706 = vdwg.mxu0
    %6707 = vmatprep.subr.bf16.mxu0 0
    %6708 = vmatpush1.bf16.msra.mxu0 %v6562
    %6709 = vmatprep.subr.bf16.mxu0 0
    %6710 = vmatpush1.bf16.msra.mxu0 %v6561
    %6711 = vmatprep.subr.bf16.mxu0 0
    %6712 = vmatpush1.bf16.msra.mxu0 %v6560
    %6713 = vmatprep.subr.bf16.mxu0 0
    %6714 = vmatpush1.bf16.msra.mxu0 %v6559
    %6715 = vmatprep.subr.bf16.mxu0 0
    %6716 = vmatpush1.bf16.msra.mxu0 %v6558
    %6717 = vmatprep.subr.bf16.mxu0 0
    %6718 = vmatpush1.bf16.msra.mxu0 %v6557
    %6719 = vmatprep.subr.bf16.mxu0 0
    %6720 = vmatpush1.bf16.msra.mxu0 %v6556
    %6721 = vmatprep.subr.bf16.mxu0 0
    %6722 = vmatpush1.bf16.msra.mxu0 %v6555
    %6723 = vmatprep.subr.bf16.mxu0 0
    %6724 = vmatpush2.bf16.msra.mxu0 %v6570
    %6725 = vmatprep.subr.bf16.mxu0 0
    %6726 = vmatpush2.bf16.msra.mxu0 %v6569
    %6727 = vmatprep.subr.bf16.mxu0 0
    %6728 = vmatpush2.bf16.msra.mxu0 %v6568
    %6729 = vmatprep.subr.bf16.mxu0 0
    %6730 = vmatpush2.bf16.msra.mxu0 %v6567
    %6731 = vmatprep.subr.bf16.mxu0 0
    %6732 = vmatpush2.bf16.msra.mxu0 %v6566
    %6733 = vmatprep.subr.bf16.mxu0 0
    %6734 = vmatpush2.bf16.msra.mxu0 %v6565
    %6735 = vmatprep.subr.bf16.mxu0 0
    %6736 = vmatpush2.bf16.msra.mxu0 %v6564
    %6737 = vmatprep.subr.bf16.mxu0 0
    %6738 = vmatpush2.bf16.msra.mxu0 %v6563
    %6739 = vmatprep.mubr.bf16.mxu0 %v6143
    %6740 = vmatmul.mubr.bf16.gmra.mxu0 %v6142
    %v6741 = vpop.f32.mrf.mxu0
    %v6742 = vadd.f32 %v6702, %v6741
    %v6743 = vpop.f32.mrf.mxu0
    %v6744 = vpop.f32.mrf.mxu0
    %v6745 = vpop.f32.mrf.mxu0
    %6746 = vdwg.mxu0
    %6747 = vmatprep.subr.bf16.mxu0 0
    %6748 = vmatpush1.bf16.msra.mxu0 %v6578
    %6749 = vmatprep.subr.bf16.mxu0 0
    %6750 = vmatpush1.bf16.msra.mxu0 %v6577
    %6751 = vmatprep.subr.bf16.mxu0 0
    %6752 = vmatpush1.bf16.msra.mxu0 %v6576
    %6753 = vmatprep.subr.bf16.mxu0 0
    %6754 = vmatpush1.bf16.msra.mxu0 %v6575
    %6755 = vmatprep.subr.bf16.mxu0 0
    %6756 = vmatpush1.bf16.msra.mxu0 %v6574
    %6757 = vmatprep.subr.bf16.mxu0 0
    %6758 = vmatpush1.bf16.msra.mxu0 %v6573
    %6759 = vmatprep.subr.bf16.mxu0 0
    %6760 = vmatpush1.bf16.msra.mxu0 %v6572
    %6761 = vmatprep.subr.bf16.mxu0 0
    %6762 = vmatpush1.bf16.msra.mxu0 %v6571
    %6763 = vmatprep.subr.bf16.mxu0 0
    %6764 = vmatpush2.bf16.msra.mxu0 %v6586
    %6765 = vmatprep.subr.bf16.mxu0 0
    %6766 = vmatpush2.bf16.msra.mxu0 %v6585
    %6767 = vmatprep.subr.bf16.mxu0 0
    %6768 = vmatpush2.bf16.msra.mxu0 %v6584
    %6769 = vmatprep.subr.bf16.mxu0 0
    %6770 = vmatpush2.bf16.msra.mxu0 %v6583
    %6771 = vmatprep.subr.bf16.mxu0 0
    %6772 = vmatpush2.bf16.msra.mxu0 %v6582
    %6773 = vmatprep.subr.bf16.mxu0 0
    %6774 = vmatpush2.bf16.msra.mxu0 %v6581
    %6775 = vmatprep.subr.bf16.mxu0 0
    %6776 = vmatpush2.bf16.msra.mxu0 %v6580
    %6777 = vmatprep.subr.bf16.mxu0 0
    %6778 = vmatpush2.bf16.msra.mxu0 %v6579
    %6779 = vmatprep.mubr.bf16.mxu0 %v6145
    %6780 = vmatmul.mubr.bf16.gmra.mxu0 %v6144
    %v6781 = vpop.f32.mrf.mxu0
    %v6782 = vadd.f32 %v6742, %v6781
    %v6783 = vpop.f32.mrf.mxu0
    %v6784 = vpop.f32.mrf.mxu0
    %v6785 = vpop.f32.mrf.mxu0
    %6786 = vdwg.mxu0
    %6787 = vmatprep.subr.bf16.mxu0 0
    %6788 = vmatpush1.bf16.msra.mxu0 %v6594
    %6789 = vmatprep.subr.bf16.mxu0 0
    %6790 = vmatpush1.bf16.msra.mxu0 %v6593
    %6791 = vmatprep.subr.bf16.mxu0 0
    %6792 = vmatpush1.bf16.msra.mxu0 %v6592
    %6793 = vmatprep.subr.bf16.mxu0 0
    %6794 = vmatpush1.bf16.msra.mxu0 %v6591
    %6795 = vmatprep.subr.bf16.mxu0 0
    %6796 = vmatpush1.bf16.msra.mxu0 %v6590
    %6797 = vmatprep.subr.bf16.mxu0 0
    %6798 = vmatpush1.bf16.msra.mxu0 %v6589
    %6799 = vmatprep.subr.bf16.mxu0 0
    %6800 = vmatpush1.bf16.msra.mxu0 %v6588
    %6801 = vmatprep.subr.bf16.mxu0 0
    %6802 = vmatpush1.bf16.msra.mxu0 %v6587
    %6803 = vmatprep.subr.bf16.mxu0 0
    %6804 = vmatpush2.bf16.msra.mxu0 %v6602
    %6805 = vmatprep.subr.bf16.mxu0 0
    %6806 = vmatpush2.bf16.msra.mxu0 %v6601
    %6807 = vmatprep.subr.bf16.mxu0 0
    %6808 = vmatpush2.bf16.msra.mxu0 %v6600
    %6809 = vmatprep.subr.bf16.mxu0 0
    %6810 = vmatpush2.bf16.msra.mxu0 %v6599
    %6811 = vmatprep.subr.bf16.mxu0 0
    %6812 = vmatpush2.bf16.msra.mxu0 %v6598
    %6813 = vmatprep.subr.bf16.mxu0 0
    %6814 = vmatpush2.bf16.msra.mxu0 %v6597
    %6815 = vmatprep.subr.bf16.mxu0 0
    %6816 = vmatpush2.bf16.msra.mxu0 %v6596
    %6817 = vmatprep.subr.bf16.mxu0 0
    %6818 = vmatpush2.bf16.msra.mxu0 %v6595
    %6819 = vmatprep.mubr.bf16.mxu0 %v6147
    %6820 = vmatmul.mubr.bf16.gmra.mxu0 %v6146
    %v6821 = vpop.f32.mrf.mxu0
    %v6822 = vadd.f32 %v6782, %v6821
    %v6823 = vpop.f32.mrf.mxu0
    %v6824 = vpop.f32.mrf.mxu0
    %v6825 = vpop.f32.mrf.mxu0
    %6826 = vdwg.mxu0
    %6827 = vst [vmem:[#allocation17] sm:$0xff] %v6822
    // Predicated region
    $region74: #{tpu_custom_call.1} parent=1 // pred_check
      _
    $region75: #{tpu_custom_call.1} parent=1 // pred_check_branch
      %6829 = sbr.rel (0) target = $region77
    $region76: #{tpu_custom_call.1} parent=1 // pred_region
      %s6831 = ssub.s32 128, 128
      %6832 = vsyncadd [#allocation4], %s6831
      %s6834 = sshll.u32 [#allocation17], 4
      %s6835 = int_to_ptr.vmem [resolvable:$true] %s6834
      %6837 = dma.vmem_to_hbm [thread:$0]  %s6835, 128, %s9, [#allocation4]
    $region77: #{tpu_custom_call.1} parent=1 // pred_fallthru
      _
    // Predicated region
    $region78: #{tpu_custom_call.1} parent=1 // pred_check
      _
    $region79: #{tpu_custom_call.1} parent=1 // pred_check_branch
      %6839 = sbr.rel (0) target = $region81
    $region80: #{tpu_custom_call.1} parent=1 // pred_region
      %6840 = dma.done [#allocation4], 128
    $region81: #{tpu_custom_call.1} parent=1 // pred_fallthru
      _
    %6841 = vsyncpa [#allocation3], 1
    %6842 = vsyncpa [#allocation6], 1
    %6843 = vsyncpa [#allocation9], 1
    %6844 = vsyncpa [#allocation12], 1
    %6845 = vsyncpa [#allocation15], 1
    %6846 = vsyncpa [#allocation4], 1

</llo_original>
